<compile_context>
chip_gen: v7x
topology: tpu7x:2x2x1
jax: 0.10.0
libtpu: 0.0.40
codegen_flags: <defaults>
</compile_context>

<pallas_src>
import jax
import jax.numpy as jnp
from jax import lax
from jax.experimental import pallas as pl
from jax.experimental.pallas import tpu as pltpu


def _round_up(x, m):
    return ((x + m - 1) // m) * m


def _lm_kernel(flag_ref,   # SMEM (T,) int32: 1 => greedy feedback, 0 => forced token
               gi_ref,     # VMEM (T, B, 3*Hp) f32: pre-gathered emb@W_ih^T + b_ih rows
               fused_ref,  # VMEM (Vp, 3*Hp) f32: emb @ W_ih^T + b_ih, gate-padded
               whh_ref,    # VMEM (Hp, 3*Hp) f32: W_hh^T, gate-padded
               bhh_ref,    # VMEM (1, 3*Hp) f32
               embt_ref,   # VMEM (Hp, Vp) f32: tied decoder weight, PRE-TRANSPOSED
               bdec_ref,   # VMEM (1, Vp) f32 (padded vocab entries = -1e30)
               out_ref,    # VMEM (T, B, Vp) f32: per-step logits
               g_sc):      # VMEM scratch (B, 3*Hp) f32: per-step input projection
    T, B, Vp = out_ref.shape
    Hp = embt_ref.shape[0]
    G = 3 * Hp

    # Hoisted loop invariants (JAX does not CSE broadcast_in_dim).
    bhh = jnp.broadcast_to(bhh_ref[...], (B, G))
    bdec = jnp.broadcast_to(bdec_ref[...], (B, Vp))
    iota_v = lax.broadcasted_iota(jnp.int32, (B, Vp), 1)

    def step(t, carry):
        h, prev = carry                                       # (B, Hp), (B, Vp)
        greedy = flag_ref[t]                                  # scalar control (SMEM)

        @pl.when(greedy == 1)
        def _():
            # Greedy token = argmax of previous-step logits (first max index);
            # padded vocab lanes are pinned to -1e30 so they never win.
            mx = jnp.max(prev, axis=-1, keepdims=True)
            tok = jnp.min(jnp.where(prev == mx, iota_v, Vp),
                          axis=-1, keepdims=True)             # (B, 1)
            one_hot = (iota_v == tok).astype(jnp.float32)     # (B, Vp)
            g_sc[...] = jnp.dot(one_hot, fused_ref[...],
                                preferred_element_type=jnp.float32)

        @pl.when(greedy == 0)
        def _():
            # Teacher-forced / init step: input projection was pre-gathered.
            g_sc[...] = gi_ref[t]

        gi = g_sc[...]                                        # (B, G) incl. b_ih
        gh = jnp.dot(h, whh_ref[...],
                     preferred_element_type=jnp.float32) + bhh

        # GRU cell (PyTorch gate order r, z, n); slices are 128-lane aligned.
        r = jax.nn.sigmoid(gi[:, :Hp] + gh[:, :Hp])
        z = jax.nn.sigmoid(gi[:, Hp:2 * Hp] + gh[:, Hp:2 * Hp])
        n = jnp.tanh(gi[:, 2 * Hp:] + r * gh[:, 2 * Hp:])
        h_new = (1.0 - z) * n + z * h                         # (B, Hp)

        # Weight-tied decoder with pre-transposed weight: plain MXU matmul.
        logits = jnp.dot(h_new, embt_ref[...],
                         preferred_element_type=jnp.float32) + bdec

        out_ref[t] = logits                                   # lane-dense (B, Vp) store
        return h_new, logits

    h0 = jnp.zeros((B, Hp), jnp.float32)                      # cell_zero_state
    l0 = jnp.zeros((B, Vp), jnp.float32)
    lax.fori_loop(0, T, step, (h0, l0), unroll=True)


def neural_lm_forward(tokens, tf_mask, params, *, init_token):
    """tokens: (B, T) int32; tf_mask: (T,) int {0,1}. Returns (1, T, B, V) f32."""
    B, T = tokens.shape
    emb = params["emb"]          # (V, E)   nn.Embedding weight (== decoder weight)
    w_ih = params["w_ih"]        # (3H, E)  GRU weight_ih_l0
    w_hh = params["w_hh"]        # (3H, H)  GRU weight_hh_l0
    b_ih = params["b_ih"]        # (3H,)
    b_hh = params["b_hh"]        # (3H,)
    b_dec = params["b_dec"]      # (V,)
    V, E = emb.shape
    H = w_hh.shape[1]
    assert E == H, "weight tying requires embedding_size == hidden_size"

    Vp = _round_up(V, 128)
    Hp = _round_up(H, 128)

    def pad_gates_last(x):
        # x: (..., 3H) -> (..., 3*Hp); each gate segment starts on a 128-lane
        # boundary, padded lanes are exact zeros.
        segs = []
        for g in range(3):
            seg = x[..., g * H:(g + 1) * H]
            pad = [(0, 0)] * (x.ndim - 1) + [(0, Hp - H)]
            segs.append(jnp.pad(seg, pad))
        return jnp.concatenate(segs, axis=-1)

    # Fused embedding + input projection table (plain XLA, done once).
    fused = emb.astype(jnp.float32) @ w_ih.T.astype(jnp.float32) + b_ih[None, :]
    fused_g = pad_gates_last(fused)                           # (V, 3Hp)
    fused_p = jnp.pad(fused_g, ((0, Vp - V), (0, 0)))         # (Vp, 3Hp)

    whh_p = jnp.pad(pad_gates_last(w_hh.T), ((0, Hp - H), (0, 0)))   # (Hp, 3Hp)
    bhh_p = pad_gates_last(b_hh[None, :])                     # (1, 3Hp)

    # Tied decoder weight pre-transposed (no per-step transpose in the kernel).
    embT_p = jnp.pad(emb.T, ((0, Hp - E), (0, Vp - V)))       # (Hp, Vp)
    bdec_p = jnp.concatenate(
        [b_dec.astype(jnp.float32),
         jnp.full((Vp - V,), -1e30, jnp.float32)])[None, :]   # (1, Vp)

    # Per-step control plan: step 0 -> init_token (forced); teacher-forced
    # steps -> inputs[:, t]; otherwise greedy argmax feedback inside the kernel.
    tf = tf_mask.astype(jnp.int32)
    step_idx = jnp.arange(T, dtype=jnp.int32)
    forced_step = jnp.logical_or(step_idx == 0, tf == 1)      # (T,) bool
    greedy_flag = jnp.where(forced_step, 0, 1).astype(jnp.int32)

    forced_tok = jnp.where(step_idx[:, None] == 0,
                           jnp.int32(init_token),
                           tokens.T.astype(jnp.int32))        # (T, B)
    gather_tok = jnp.where(forced_step[:, None], forced_tok, 0)
    # Pre-gathered input projection rows for forced steps (row 0 dummy on
    # greedy steps; never read by the kernel there).
    gi_tbl = fused_g[gather_tok]                              # (T, B, 3Hp)

    out = pl.pallas_call(
        _lm_kernel,
        out_shape=jax.ShapeDtypeStruct((T, B, Vp), jnp.float32),
        in_specs=[
            pl.BlockSpec(memory_space=pltpu.MemorySpace.SMEM),   # greedy flag (T,)
            pl.BlockSpec(memory_space=pltpu.MemorySpace.VMEM),   # gi_tbl
            pl.BlockSpec(memory_space=pltpu.MemorySpace.VMEM),   # fused_p
            pl.BlockSpec(memory_space=pltpu.MemorySpace.VMEM),   # whh_p
            pl.BlockSpec(memory_space=pltpu.MemorySpace.VMEM),   # bhh_p
            pl.BlockSpec(memory_space=pltpu.MemorySpace.VMEM),   # embT_p
            pl.BlockSpec(memory_space=pltpu.MemorySpace.VMEM),   # bdec_p
        ],
        out_specs=pl.BlockSpec(memory_space=pltpu.MemorySpace.VMEM),
        scratch_shapes=[pltpu.VMEM((B, 3 * Hp), jnp.float32)],
        compiler_params=pltpu.CompilerParams(
            vmem_limit_bytes=32 * 1024 * 1024),
    )(greedy_flag, gi_tbl, fused_p, whh_p, bhh_p, embT_p, bdec_p)

    # torch.stack of per-step (1, B, V) tensors along dim=1 -> (1, T, B, V)
    return out[:, :, :V][None]


def reference_forward(tokens, tf_mask, params, *, init_token):
    """Pure-JAX reference of the same semantics (eval-mode dropout)."""
    B, T = tokens.shape
    V, E = params["emb"].shape
    H = params["w_hh"].shape[1]
    emb = params["emb"]
    w_ih_t = params["w_ih"].T
    w_hh_t = params["w_hh"].T
    h = jnp.zeros((B, H), jnp.float32)
    prev = jnp.zeros((B, V), jnp.float32)
    outs = []
    for t in range(T):
        if t == 0:
            tok = jnp.full((B,), init_token, jnp.int32)
        else:
            tok = jnp.where(tf_mask[t] == 1,
                            tokens[:, t],
                            jnp.argmax(prev, axis=-1).astype(jnp.int32))
        x = emb[tok]
        gi = x @ w_ih_t + params["b_ih"]
        gh = h @ w_hh_t + params["b_hh"]
        r = jax.nn.sigmoid(gi[:, :H] + gh[:, :H])
        z = jax.nn.sigmoid(gi[:, H:2 * H] + gh[:, H:2 * H])
        n = jnp.tanh(gi[:, 2 * H:] + r * gh[:, 2 * H:])
        h = (1.0 - z) * n + z * h
        prev = h @ emb.T + params["b_dec"]
        outs.append(prev)
    return jnp.stack(outs, axis=0)[None]   # (1, T, B, V)


if __name__ == "__main__":
    # Small shapes consistent with the module (weight tying => EMB == HID).
    VOCAB = 64
    EMB = 32
    HID = 32
    BATCH = 8
    MAX_LEN = 8
    INIT_TOKEN = 1
    TEACHER_FORCING = 0.7

    key = jax.random.PRNGKey(0)
    ks = jax.random.split(key, 8)
    bound = 1.0 / (HID ** 0.5)

    params = {
        "emb": jax.random.normal(ks[0], (VOCAB, EMB), jnp.float32),
        "w_ih": jax.random.uniform(ks[1], (3 * HID, EMB), jnp.float32, -bound, bound),
        "w_hh": jax.random.uniform(ks[2], (3 * HID, HID), jnp.float32, -bound, bound),
        "b_ih": jax.random.uniform(ks[3], (3 * HID,), jnp.float32, -bound, bound),
        "b_hh": jax.random.uniform(ks[4], (3 * HID,), jnp.float32, -bound, bound),
        "b_dec": jax.random.uniform(ks[5], (VOCAB,), jnp.float32, -bound, bound),
    }

    tokens = jax.random.randint(ks[6], (BATCH, MAX_LEN), 0, VOCAB, jnp.int32)
    # Deterministic replacement for the per-step np.random teacher-forcing flip.
    tf_mask = (jax.random.uniform(ks[7], (MAX_LEN,)) < TEACHER_FORCING).astype(jnp.int32)

    out = neural_lm_forward(tokens, tf_mask, params, init_token=INIT_TOKEN)
    out = jax.block_until_ready(out)

    ref = reference_forward(tokens, tf_mask, params, init_token=INIT_TOKEN)
    assert out.shape == (1, MAX_LEN, BATCH, VOCAB), out.shape
    assert jnp.allclose(out, ref, rtol=1e-3, atol=1e-3), \
        float(jnp.max(jnp.abs(out - ref)))

    print("KERNEL_OK")
</pallas_src>

<mosaic_0001>
module attributes {stable_mosaic.version = 11 : i64} {
  func.func @_lm_kernel(%arg0: memref<8xi32, #tpu.memory_space<smem>>, %arg1: memref<8x8x384xf32, #tpu.memory_space<vmem>>, %arg2: memref<128x384xf32, #tpu.memory_space<vmem>>, %arg3: memref<128x384xf32, #tpu.memory_space<vmem>>, %arg4: memref<1x384xf32, #tpu.memory_space<vmem>>, %arg5: memref<128x128xf32, #tpu.memory_space<vmem>>, %arg6: memref<1x128xf32, #tpu.memory_space<vmem>>, %arg7: memref<8x8x128xf32, #tpu.memory_space<vmem>>, %arg8: memref<8x384xf32, #tpu.memory_space<vmem>>) attributes {dimension_semantics = [], scalar_prefetch = 0 : i64, scratch_operands = 1 : i64, tpu.core_type = #tpu.core_type<tc>} {
    %c0 = arith.constant 0 : index
    %c0_0 = arith.constant 0 : index
    %0 = vector.load %arg4[%c0, %c0_0] : memref<1x384xf32, #tpu.memory_space<vmem>>, vector<1x384xf32>
    %1 = vector.shape_cast %0 : vector<1x384xf32> to vector<1x384xf32>
    %2 = vector.broadcast %1 : vector<1x384xf32> to vector<8x384xf32>
    %c0_1 = arith.constant 0 : index
    %c0_2 = arith.constant 0 : index
    %3 = vector.load %arg6[%c0_1, %c0_2] : memref<1x128xf32, #tpu.memory_space<vmem>>, vector<1x128xf32>
    %4 = vector.shape_cast %3 : vector<1x128xf32> to vector<1x128xf32>
    %5 = vector.broadcast %4 : vector<1x128xf32> to vector<8x128xf32>
    %6 = tpu.iota {dimensions = array<i32: 1>} : vector<8x128xi32>
    %cst = arith.constant 0.000000e+00 : f32
    %7 = vector.broadcast %cst : f32 to vector<8x128xf32>
    %cst_3 = arith.constant 0.000000e+00 : f32
    %8 = vector.broadcast %cst_3 : f32 to vector<8x128xf32>
    %c0_i32 = arith.constant 0 : i32
    %9 = arith.index_cast %c0_i32 : i32 to index
    %10 = memref.load %arg0[%9] : memref<8xi32, #tpu.memory_space<smem>>
    %c1_i32 = arith.constant 1 : i32
    %11 = arith.cmpi eq, %10, %c1_i32 : i32
    %12 = arith.extui %11 : i1 to i32
    %c0_i32_4 = arith.constant 0 : i32
    %13 = arith.cmpi ne, %12, %c0_i32_4 : i32
    scf.if %13 {
      %cst_140 = arith.constant dense<0xFF800000> : vector<8xf32>
      %369 = vector.multi_reduction <maximumf>, %8, %cst_140 [1] : vector<8x128xf32> to vector<8xf32>
      %370 = vector.shape_cast %369 : vector<8xf32> to vector<8x1xf32>
      %371 = vector.broadcast %370 : vector<8x1xf32> to vector<8x128xf32>
      %372 = arith.cmpf oeq, %8, %371 : vector<8x128xf32>
      %c128_i32 = arith.constant 128 : i32
      %373 = vector.broadcast %c128_i32 : i32 to vector<8x128xi32>
      %374 = arith.select %372, %6, %373 : vector<8x128xi1>, vector<8x128xi32>
      %cst_141 = arith.constant dense<2147483647> : vector<8xi32>
      %375 = vector.multi_reduction <minsi>, %374, %cst_141 [1] : vector<8x128xi32> to vector<8xi32>
      %376 = vector.shape_cast %375 : vector<8xi32> to vector<8x1xi32>
      %377 = vector.broadcast %376 : vector<8x1xi32> to vector<8x128xi32>
      %378 = arith.cmpi eq, %6, %377 : vector<8x128xi32>
      %379 = arith.extui %378 : vector<8x128xi1> to vector<8x128xi32>
      %380 = arith.sitofp %379 : vector<8x128xi32> to vector<8x128xf32>
      %c0_142 = arith.constant 0 : index
      %c0_143 = arith.constant 0 : index
      %381 = vector.load %arg2[%c0_142, %c0_143] : memref<128x384xf32, #tpu.memory_space<vmem>>, vector<128x384xf32>
      %cst_144 = arith.constant dense<0.000000e+00> : vector<8x384xf32>
      %382 = tpu.matmul %380, %381, %cst_144 {dimension_numbers = #tpu.dot_dimension_numbers<[1], [0], [0], [1], [0, 0, 1, 1], [], []>} : vector<8x128xf32>, vector<128x384xf32>, vector<8x384xf32> -> vector<8x384xf32>
      %c0_145 = arith.constant 0 : index
      %c0_146 = arith.constant 0 : index
      %383 = vector.load %arg8[%c0_145, %c0_146] : memref<8x384xf32, #tpu.memory_space<vmem>>, vector<8x384xf32>
      tpu.vector_store %arg8[%c0_145, %c0_146], %382 {strides = array<i32>} : memref<8x384xf32, #tpu.memory_space<vmem>>, vector<8x384xf32>,
    } else {
    }
    %c0_i32_5 = arith.constant 0 : i32
    %14 = arith.cmpi eq, %10, %c0_i32_5 : i32
    %15 = arith.extui %14 : i1 to i32
    %c0_i32_6 = arith.constant 0 : i32
    %16 = arith.cmpi ne, %15, %c0_i32_6 : i32
    scf.if %16 {
      %369 = arith.index_cast %c0_i32 : i32 to index
      %c0_140 = arith.constant 0 : index
      %c0_141 = arith.constant 0 : index
      %370 = vector.load %arg1[%369, %c0_140, %c0_141] : memref<8x8x384xf32, #tpu.memory_space<vmem>>, vector<1x8x384xf32>
      %371 = vector.shape_cast %370 : vector<1x8x384xf32> to vector<8x384xf32>
      %c0_142 = arith.constant 0 : index
      %c0_143 = arith.constant 0 : index
      %372 = vector.load %arg8[%c0_142, %c0_143] : memref<8x384xf32, #tpu.memory_space<vmem>>, vector<8x384xf32>
      tpu.vector_store %arg8[%c0_142, %c0_143], %371 {strides = array<i32>} : memref<8x384xf32, #tpu.memory_space<vmem>>, vector<8x384xf32>,
    } else {
    }
    %c0_7 = arith.constant 0 : index
    %c0_8 = arith.constant 0 : index
    %17 = vector.load %arg8[%c0_7, %c0_8] : memref<8x384xf32, #tpu.memory_space<vmem>>, vector<8x384xf32>
    %c0_9 = arith.constant 0 : index
    %c0_10 = arith.constant 0 : index
    %18 = vector.load %arg3[%c0_9, %c0_10] : memref<128x384xf32, #tpu.memory_space<vmem>>, vector<128x384xf32>
    %cst_11 = arith.constant dense<0.000000e+00> : vector<8x384xf32>
    %19 = tpu.matmul %7, %18, %cst_11 {dimension_numbers = #tpu.dot_dimension_numbers<[1], [0], [0], [1], [0, 0, 1, 1], [], []>} : vector<8x128xf32>, vector<128x384xf32>, vector<8x384xf32> -> vector<8x384xf32>
    %20 = arith.addf %19, %2 : vector<8x384xf32>
    %21 = vector.extract_strided_slice %17 {offsets = [0, 0], sizes = [8, 128], strides = [1, 1]} : vector<8x384xf32> to vector<8x128xf32>
    %22 = vector.extract_strided_slice %20 {offsets = [0, 0], sizes = [8, 128], strides = [1, 1]} : vector<8x384xf32> to vector<8x128xf32>
    %23 = arith.addf %21, %22 : vector<8x128xf32>
    %24 = arith.negf %23 : vector<8x128xf32>
    %25 = math.exp %24 : vector<8x128xf32>
    %cst_12 = arith.constant 1.000000e+00 : f32
    %26 = vector.broadcast %cst_12 : f32 to vector<8x128xf32>
    %27 = arith.addf %26, %25 : vector<8x128xf32>
    %28 = arith.divf %26, %27 : vector<8x128xf32>
    %29 = vector.extract_strided_slice %17 {offsets = [0, 128], sizes = [8, 128], strides = [1, 1]} : vector<8x384xf32> to vector<8x128xf32>
    %30 = vector.extract_strided_slice %20 {offsets = [0, 128], sizes = [8, 128], strides = [1, 1]} : vector<8x384xf32> to vector<8x128xf32>
    %31 = arith.addf %29, %30 : vector<8x128xf32>
    %32 = arith.negf %31 : vector<8x128xf32>
    %33 = math.exp %32 : vector<8x128xf32>
    %cst_13 = arith.constant 1.000000e+00 : f32
    %34 = vector.broadcast %cst_13 : f32 to vector<8x128xf32>
    %35 = arith.addf %34, %33 : vector<8x128xf32>
    %36 = arith.divf %34, %35 : vector<8x128xf32>
    %37 = vector.extract_strided_slice %17 {offsets = [0, 256], sizes = [8, 128], strides = [1, 1]} : vector<8x384xf32> to vector<8x128xf32>
    %38 = vector.extract_strided_slice %20 {offsets = [0, 256], sizes = [8, 128], strides = [1, 1]} : vector<8x384xf32> to vector<8x128xf32>
    %39 = arith.mulf %28, %38 : vector<8x128xf32>
    %40 = arith.addf %37, %39 : vector<8x128xf32>
    %41 = math.tanh %40 : vector<8x128xf32>
    %cst_14 = arith.constant 1.000000e+00 : f32
    %42 = vector.broadcast %cst_14 : f32 to vector<8x128xf32>
    %43 = arith.subf %42, %36 : vector<8x128xf32>
    %44 = arith.mulf %43, %41 : vector<8x128xf32>
    %45 = arith.mulf %36, %7 : vector<8x128xf32>
    %46 = arith.addf %44, %45 : vector<8x128xf32>
    %c0_15 = arith.constant 0 : index
    %c0_16 = arith.constant 0 : index
    %47 = vector.load %arg5[%c0_15, %c0_16] : memref<128x128xf32, #tpu.memory_space<vmem>>, vector<128x128xf32>
    %cst_17 = arith.constant dense<0.000000e+00> : vector<8x128xf32>
    %48 = tpu.matmul %46, %47, %cst_17 {dimension_numbers = #tpu.dot_dimension_numbers<[1], [0], [0], [1], [0, 0, 1, 1], [], []>} : vector<8x128xf32>, vector<128x128xf32>, vector<8x128xf32> -> vector<8x128xf32>
    %49 = arith.addf %48, %5 : vector<8x128xf32>
    %50 = arith.index_cast %c0_i32 : i32 to index
    %c0_18 = arith.constant 0 : index
    %c0_19 = arith.constant 0 : index
    %51 = vector.load %arg7[%50, %c0_18, %c0_19] : memref<8x8x128xf32, #tpu.memory_space<vmem>>, vector<1x8x128xf32>
    %52 = vector.shape_cast %51 : vector<1x8x128xf32> to vector<8x128xf32>
    %53 = vector.shape_cast %49 : vector<8x128xf32> to vector<1x8x128xf32>
    tpu.vector_store %arg7[%50, %c0_18, %c0_19], %53 {strides = array<i32>} : memref<8x8x128xf32, #tpu.memory_space<vmem>>, vector<1x8x128xf32>,
    %c1_i32_20 = arith.constant 1 : i32
    %54 = arith.index_cast %c1_i32_20 : i32 to index
    %55 = memref.load %arg0[%54] : memref<8xi32, #tpu.memory_space<smem>>
    %c1_i32_21 = arith.constant 1 : i32
    %56 = arith.cmpi eq, %55, %c1_i32_21 : i32
    %57 = arith.extui %56 : i1 to i32
    %c0_i32_22 = arith.constant 0 : i32
    %58 = arith.cmpi ne, %57, %c0_i32_22 : i32
    scf.if %58 {
      %cst_140 = arith.constant dense<0xFF800000> : vector<8xf32>
      %369 = vector.multi_reduction <maximumf>, %49, %cst_140 [1] : vector<8x128xf32> to vector<8xf32>
      %370 = vector.shape_cast %369 : vector<8xf32> to vector<8x1xf32>
      %371 = vector.broadcast %370 : vector<8x1xf32> to vector<8x128xf32>
      %372 = arith.cmpf oeq, %49, %371 : vector<8x128xf32>
      %c128_i32 = arith.constant 128 : i32
      %373 = vector.broadcast %c128_i32 : i32 to vector<8x128xi32>
      %374 = arith.select %372, %6, %373 : vector<8x128xi1>, vector<8x128xi32>
      %cst_141 = arith.constant dense<2147483647> : vector<8xi32>
      %375 = vector.multi_reduction <minsi>, %374, %cst_141 [1] : vector<8x128xi32> to vector<8xi32>
      %376 = vector.shape_cast %375 : vector<8xi32> to vector<8x1xi32>
      %377 = vector.broadcast %376 : vector<8x1xi32> to vector<8x128xi32>
      %378 = arith.cmpi eq, %6, %377 : vector<8x128xi32>
      %379 = arith.extui %378 : vector<8x128xi1> to vector<8x128xi32>
      %380 = arith.sitofp %379 : vector<8x128xi32> to vector<8x128xf32>
      %c0_142 = arith.constant 0 : index
      %c0_143 = arith.constant 0 : index
      %381 = vector.load %arg2[%c0_142, %c0_143] : memref<128x384xf32, #tpu.memory_space<vmem>>, vector<128x384xf32>
      %cst_144 = arith.constant dense<0.000000e+00> : vector<8x384xf32>
      %382 = tpu.matmul %380, %381, %cst_144 {dimension_numbers = #tpu.dot_dimension_numbers<[1], [0], [0], [1], [0, 0, 1, 1], [], []>} : vector<8x128xf32>, vector<128x384xf32>, vector<8x384xf32> -> vector<8x384xf32>
      %c0_145 = arith.constant 0 : index
      %c0_146 = arith.constant 0 : index
      %383 = vector.load %arg8[%c0_145, %c0_146] : memref<8x384xf32, #tpu.memory_space<vmem>>, vector<8x384xf32>
      tpu.vector_store %arg8[%c0_145, %c0_146], %382 {strides = array<i32>} : memref<8x384xf32, #tpu.memory_space<vmem>>, vector<8x384xf32>,
    } else {
    }
    %c0_i32_23 = arith.constant 0 : i32
    %59 = arith.cmpi eq, %55, %c0_i32_23 : i32
    %60 = arith.extui %59 : i1 to i32
    %c0_i32_24 = arith.constant 0 : i32
    %61 = arith.cmpi ne, %60, %c0_i32_24 : i32
    scf.if %61 {
      %369 = arith.index_cast %c1_i32_20 : i32 to index
      %c0_140 = arith.constant 0 : index
      %c0_141 = arith.constant 0 : index
      %370 = vector.load %arg1[%369, %c0_140, %c0_141] : memref<8x8x384xf32, #tpu.memory_space<vmem>>, vector<1x8x384xf32>
      %371 = vector.shape_cast %370 : vector<1x8x384xf32> to vector<8x384xf32>
      %c0_142 = arith.constant 0 : index
      %c0_143 = arith.constant 0 : index
      %372 = vector.load %arg8[%c0_142, %c0_143] : memref<8x384xf32, #tpu.memory_space<vmem>>, vector<8x384xf32>
      tpu.vector_store %arg8[%c0_142, %c0_143], %371 {strides = array<i32>} : memref<8x384xf32, #tpu.memory_space<vmem>>, vector<8x384xf32>,
    } else {
    }
    %c0_25 = arith.constant 0 : index
    %c0_26 = arith.constant 0 : index
    %62 = vector.load %arg8[%c0_25, %c0_26] : memref<8x384xf32, #tpu.memory_space<vmem>>, vector<8x384xf32>
    %c0_27 = arith.constant 0 : index
    %c0_28 = arith.constant 0 : index
    %63 = vector.load %arg3[%c0_27, %c0_28] : memref<128x384xf32, #tpu.memory_space<vmem>>, vector<128x384xf32>
    %cst_29 = arith.constant dense<0.000000e+00> : vector<8x384xf32>
    %64 = tpu.matmul %46, %63, %cst_29 {dimension_numbers = #tpu.dot_dimension_numbers<[1], [0], [0], [1], [0, 0, 1, 1], [], []>} : vector<8x128xf32>, vector<128x384xf32>, vector<8x384xf32> -> vector<8x384xf32>
    %65 = arith.addf %64, %2 : vector<8x384xf32>
    %66 = vector.extract_strided_slice %62 {offsets = [0, 0], sizes = [8, 128], strides = [1, 1]} : vector<8x384xf32> to vector<8x128xf32>
    %67 = vector.extract_strided_slice %65 {offsets = [0, 0], sizes = [8, 128], strides = [1, 1]} : vector<8x384xf32> to vector<8x128xf32>
    %68 = arith.addf %66, %67 : vector<8x128xf32>
    %69 = arith.negf %68 : vector<8x128xf32>
    %70 = math.exp %69 : vector<8x128xf32>
    %cst_30 = arith.constant 1.000000e+00 : f32
    %71 = vector.broadcast %cst_30 : f32 to vector<8x128xf32>
    %72 = arith.addf %71, %70 : vector<8x128xf32>
    %73 = arith.divf %71, %72 : vector<8x128xf32>
    %74 = vector.extract_strided_slice %62 {offsets = [0, 128], sizes = [8, 128], strides = [1, 1]} : vector<8x384xf32> to vector<8x128xf32>
    %75 = vector.extract_strided_slice %65 {offsets = [0, 128], sizes = [8, 128], strides = [1, 1]} : vector<8x384xf32> to vector<8x128xf32>
    %76 = arith.addf %74, %75 : vector<8x128xf32>
    %77 = arith.negf %76 : vector<8x128xf32>
    %78 = math.exp %77 : vector<8x128xf32>
    %cst_31 = arith.constant 1.000000e+00 : f32
    %79 = vector.broadcast %cst_31 : f32 to vector<8x128xf32>
    %80 = arith.addf %79, %78 : vector<8x128xf32>
    %81 = arith.divf %79, %80 : vector<8x128xf32>
    %82 = vector.extract_strided_slice %62 {offsets = [0, 256], sizes = [8, 128], strides = [1, 1]} : vector<8x384xf32> to vector<8x128xf32>
    %83 = vector.extract_strided_slice %65 {offsets = [0, 256], sizes = [8, 128], strides = [1, 1]} : vector<8x384xf32> to vector<8x128xf32>
    %84 = arith.mulf %73, %83 : vector<8x128xf32>
    %85 = arith.addf %82, %84 : vector<8x128xf32>
    %86 = math.tanh %85 : vector<8x128xf32>
    %cst_32 = arith.constant 1.000000e+00 : f32
    %87 = vector.broadcast %cst_32 : f32 to vector<8x128xf32>
    %88 = arith.subf %87, %81 : vector<8x128xf32>
    %89 = arith.mulf %88, %86 : vector<8x128xf32>
    %90 = arith.mulf %81, %46 : vector<8x128xf32>
    %91 = arith.addf %89, %90 : vector<8x128xf32>
    %c0_33 = arith.constant 0 : index
    %c0_34 = arith.constant 0 : index
    %92 = vector.load %arg5[%c0_33, %c0_34] : memref<128x128xf32, #tpu.memory_space<vmem>>, vector<128x128xf32>
    %cst_35 = arith.constant dense<0.000000e+00> : vector<8x128xf32>
    %93 = tpu.matmul %91, %92, %cst_35 {dimension_numbers = #tpu.dot_dimension_numbers<[1], [0], [0], [1], [0, 0, 1, 1], [], []>} : vector<8x128xf32>, vector<128x128xf32>, vector<8x128xf32> -> vector<8x128xf32>
    %94 = arith.addf %93, %5 : vector<8x128xf32>
    %95 = arith.index_cast %c1_i32_20 : i32 to index
    %c0_36 = arith.constant 0 : index
    %c0_37 = arith.constant 0 : index
    %96 = vector.load %arg7[%95, %c0_36, %c0_37] : memref<8x8x128xf32, #tpu.memory_space<vmem>>, vector<1x8x128xf32>
    %97 = vector.shape_cast %96 : vector<1x8x128xf32> to vector<8x128xf32>
    %98 = vector.shape_cast %94 : vector<8x128xf32> to vector<1x8x128xf32>
    tpu.vector_store %arg7[%95, %c0_36, %c0_37], %98 {strides = array<i32>} : memref<8x8x128xf32, #tpu.memory_space<vmem>>, vector<1x8x128xf32>,
    %c2_i32 = arith.constant 2 : i32
    %99 = arith.index_cast %c2_i32 : i32 to index
    %100 = memref.load %arg0[%99] : memref<8xi32, #tpu.memory_space<smem>>
    %c1_i32_38 = arith.constant 1 : i32
    %101 = arith.cmpi eq, %100, %c1_i32_38 : i32
    %102 = arith.extui %101 : i1 to i32
    %c0_i32_39 = arith.constant 0 : i32
    %103 = arith.cmpi ne, %102, %c0_i32_39 : i32
    scf.if %103 {
      %cst_140 = arith.constant dense<0xFF800000> : vector<8xf32>
      %369 = vector.multi_reduction <maximumf>, %94, %cst_140 [1] : vector<8x128xf32> to vector<8xf32>
      %370 = vector.shape_cast %369 : vector<8xf32> to vector<8x1xf32>
      %371 = vector.broadcast %370 : vector<8x1xf32> to vector<8x128xf32>
      %372 = arith.cmpf oeq, %94, %371 : vector<8x128xf32>
      %c128_i32 = arith.constant 128 : i32
      %373 = vector.broadcast %c128_i32 : i32 to vector<8x128xi32>
      %374 = arith.select %372, %6, %373 : vector<8x128xi1>, vector<8x128xi32>
      %cst_141 = arith.constant dense<2147483647> : vector<8xi32>
      %375 = vector.multi_reduction <minsi>, %374, %cst_141 [1] : vector<8x128xi32> to vector<8xi32>
      %376 = vector.shape_cast %375 : vector<8xi32> to vector<8x1xi32>
      %377 = vector.broadcast %376 : vector<8x1xi32> to vector<8x128xi32>
      %378 = arith.cmpi eq, %6, %377 : vector<8x128xi32>
      %379 = arith.extui %378 : vector<8x128xi1> to vector<8x128xi32>
      %380 = arith.sitofp %379 : vector<8x128xi32> to vector<8x128xf32>
      %c0_142 = arith.constant 0 : index
      %c0_143 = arith.constant 0 : index
      %381 = vector.load %arg2[%c0_142, %c0_143] : memref<128x384xf32, #tpu.memory_space<vmem>>, vector<128x384xf32>
      %cst_144 = arith.constant dense<0.000000e+00> : vector<8x384xf32>
      %382 = tpu.matmul %380, %381, %cst_144 {dimension_numbers = #tpu.dot_dimension_numbers<[1], [0], [0], [1], [0, 0, 1, 1], [], []>} : vector<8x128xf32>, vector<128x384xf32>, vector<8x384xf32> -> vector<8x384xf32>
      %c0_145 = arith.constant 0 : index
      %c0_146 = arith.constant 0 : index
      %383 = vector.load %arg8[%c0_145, %c0_146] : memref<8x384xf32, #tpu.memory_space<vmem>>, vector<8x384xf32>
      tpu.vector_store %arg8[%c0_145, %c0_146], %382 {strides = array<i32>} : memref<8x384xf32, #tpu.memory_space<vmem>>, vector<8x384xf32>,
    } else {
    }
    %c0_i32_40 = arith.constant 0 : i32
    %104 = arith.cmpi eq, %100, %c0_i32_40 : i32
    %105 = arith.extui %104 : i1 to i32
    %c0_i32_41 = arith.constant 0 : i32
    %106 = arith.cmpi ne, %105, %c0_i32_41 : i32
    scf.if %106 {
      %369 = arith.index_cast %c2_i32 : i32 to index
      %c0_140 = arith.constant 0 : index
      %c0_141 = arith.constant 0 : index
      %370 = vector.load %arg1[%369, %c0_140, %c0_141] : memref<8x8x384xf32, #tpu.memory_space<vmem>>, vector<1x8x384xf32>
      %371 = vector.shape_cast %370 : vector<1x8x384xf32> to vector<8x384xf32>
      %c0_142 = arith.constant 0 : index
      %c0_143 = arith.constant 0 : index
      %372 = vector.load %arg8[%c0_142, %c0_143] : memref<8x384xf32, #tpu.memory_space<vmem>>, vector<8x384xf32>
      tpu.vector_store %arg8[%c0_142, %c0_143], %371 {strides = array<i32>} : memref<8x384xf32, #tpu.memory_space<vmem>>, vector<8x384xf32>,
    } else {
    }
    %c0_42 = arith.constant 0 : index
    %c0_43 = arith.constant 0 : index
    %107 = vector.load %arg8[%c0_42, %c0_43] : memref<8x384xf32, #tpu.memory_space<vmem>>, vector<8x384xf32>
    %c0_44 = arith.constant 0 : index
    %c0_45 = arith.constant 0 : index
    %108 = vector.load %arg3[%c0_44, %c0_45] : memref<128x384xf32, #tpu.memory_space<vmem>>, vector<128x384xf32>
    %cst_46 = arith.constant dense<0.000000e+00> : vector<8x384xf32>
    %109 = tpu.matmul %91, %108, %cst_46 {dimension_numbers = #tpu.dot_dimension_numbers<[1], [0], [0], [1], [0, 0, 1, 1], [], []>} : vector<8x128xf32>, vector<128x384xf32>, vector<8x384xf32> -> vector<8x384xf32>
    %110 = arith.addf %109, %2 : vector<8x384xf32>
    %111 = vector.extract_strided_slice %107 {offsets = [0, 0], sizes = [8, 128], strides = [1, 1]} : vector<8x384xf32> to vector<8x128xf32>
    %112 = vector.extract_strided_slice %110 {offsets = [0, 0], sizes = [8, 128], strides = [1, 1]} : vector<8x384xf32> to vector<8x128xf32>
    %113 = arith.addf %111, %112 : vector<8x128xf32>
    %114 = arith.negf %113 : vector<8x128xf32>
    %115 = math.exp %114 : vector<8x128xf32>
    %cst_47 = arith.constant 1.000000e+00 : f32
    %116 = vector.broadcast %cst_47 : f32 to vector<8x128xf32>
    %117 = arith.addf %116, %115 : vector<8x128xf32>
    %118 = arith.divf %116, %117 : vector<8x128xf32>
    %119 = vector.extract_strided_slice %107 {offsets = [0, 128], sizes = [8, 128], strides = [1, 1]} : vector<8x384xf32> to vector<8x128xf32>
    %120 = vector.extract_strided_slice %110 {offsets = [0, 128], sizes = [8, 128], strides = [1, 1]} : vector<8x384xf32> to vector<8x128xf32>
    %121 = arith.addf %119, %120 : vector<8x128xf32>
    %122 = arith.negf %121 : vector<8x128xf32>
    %123 = math.exp %122 : vector<8x128xf32>
    %cst_48 = arith.constant 1.000000e+00 : f32
    %124 = vector.broadcast %cst_48 : f32 to vector<8x128xf32>
    %125 = arith.addf %124, %123 : vector<8x128xf32>
    %126 = arith.divf %124, %125 : vector<8x128xf32>
    %127 = vector.extract_strided_slice %107 {offsets = [0, 256], sizes = [8, 128], strides = [1, 1]} : vector<8x384xf32> to vector<8x128xf32>
    %128 = vector.extract_strided_slice %110 {offsets = [0, 256], sizes = [8, 128], strides = [1, 1]} : vector<8x384xf32> to vector<8x128xf32>
    %129 = arith.mulf %118, %128 : vector<8x128xf32>
    %130 = arith.addf %127, %129 : vector<8x128xf32>
    %131 = math.tanh %130 : vector<8x128xf32>
    %cst_49 = arith.constant 1.000000e+00 : f32
    %132 = vector.broadcast %cst_49 : f32 to vector<8x128xf32>
    %133 = arith.subf %132, %126 : vector<8x128xf32>
    %134 = arith.mulf %133, %131 : vector<8x128xf32>
    %135 = arith.mulf %126, %91 : vector<8x128xf32>
    %136 = arith.addf %134, %135 : vector<8x128xf32>
    %c0_50 = arith.constant 0 : index
    %c0_51 = arith.constant 0 : index
    %137 = vector.load %arg5[%c0_50, %c0_51] : memref<128x128xf32, #tpu.memory_space<vmem>>, vector<128x128xf32>
    %cst_52 = arith.constant dense<0.000000e+00> : vector<8x128xf32>
    %138 = tpu.matmul %136, %137, %cst_52 {dimension_numbers = #tpu.dot_dimension_numbers<[1], [0], [0], [1], [0, 0, 1, 1], [], []>} : vector<8x128xf32>, vector<128x128xf32>, vector<8x128xf32> -> vector<8x128xf32>
    %139 = arith.addf %138, %5 : vector<8x128xf32>
    %140 = arith.index_cast %c2_i32 : i32 to index
    %c0_53 = arith.constant 0 : index
    %c0_54 = arith.constant 0 : index
    %141 = vector.load %arg7[%140, %c0_53, %c0_54] : memref<8x8x128xf32, #tpu.memory_space<vmem>>, vector<1x8x128xf32>
    %142 = vector.shape_cast %141 : vector<1x8x128xf32> to vector<8x128xf32>
    %143 = vector.shape_cast %139 : vector<8x128xf32> to vector<1x8x128xf32>
    tpu.vector_store %arg7[%140, %c0_53, %c0_54], %143 {strides = array<i32>} : memref<8x8x128xf32, #tpu.memory_space<vmem>>, vector<1x8x128xf32>,
    %c3_i32 = arith.constant 3 : i32
    %144 = arith.index_cast %c3_i32 : i32 to index
    %145 = memref.load %arg0[%144] : memref<8xi32, #tpu.memory_space<smem>>
    %c1_i32_55 = arith.constant 1 : i32
    %146 = arith.cmpi eq, %145, %c1_i32_55 : i32
    %147 = arith.extui %146 : i1 to i32
    %c0_i32_56 = arith.constant 0 : i32
    %148 = arith.cmpi ne, %147, %c0_i32_56 : i32
    scf.if %148 {
      %cst_140 = arith.constant dense<0xFF800000> : vector<8xf32>
      %369 = vector.multi_reduction <maximumf>, %139, %cst_140 [1] : vector<8x128xf32> to vector<8xf32>
      %370 = vector.shape_cast %369 : vector<8xf32> to vector<8x1xf32>
      %371 = vector.broadcast %370 : vector<8x1xf32> to vector<8x128xf32>
      %372 = arith.cmpf oeq, %139, %371 : vector<8x128xf32>
      %c128_i32 = arith.constant 128 : i32
      %373 = vector.broadcast %c128_i32 : i32 to vector<8x128xi32>
      %374 = arith.select %372, %6, %373 : vector<8x128xi1>, vector<8x128xi32>
      %cst_141 = arith.constant dense<2147483647> : vector<8xi32>
      %375 = vector.multi_reduction <minsi>, %374, %cst_141 [1] : vector<8x128xi32> to vector<8xi32>
      %376 = vector.shape_cast %375 : vector<8xi32> to vector<8x1xi32>
      %377 = vector.broadcast %376 : vector<8x1xi32> to vector<8x128xi32>
      %378 = arith.cmpi eq, %6, %377 : vector<8x128xi32>
      %379 = arith.extui %378 : vector<8x128xi1> to vector<8x128xi32>
      %380 = arith.sitofp %379 : vector<8x128xi32> to vector<8x128xf32>
      %c0_142 = arith.constant 0 : index
      %c0_143 = arith.constant 0 : index
      %381 = vector.load %arg2[%c0_142, %c0_143] : memref<128x384xf32, #tpu.memory_space<vmem>>, vector<128x384xf32>
      %cst_144 = arith.constant dense<0.000000e+00> : vector<8x384xf32>
      %382 = tpu.matmul %380, %381, %cst_144 {dimension_numbers = #tpu.dot_dimension_numbers<[1], [0], [0], [1], [0, 0, 1, 1], [], []>} : vector<8x128xf32>, vector<128x384xf32>, vector<8x384xf32> -> vector<8x384xf32>
      %c0_145 = arith.constant 0 : index
      %c0_146 = arith.constant 0 : index
      %383 = vector.load %arg8[%c0_145, %c0_146] : memref<8x384xf32, #tpu.memory_space<vmem>>, vector<8x384xf32>
      tpu.vector_store %arg8[%c0_145, %c0_146], %382 {strides = array<i32>} : memref<8x384xf32, #tpu.memory_space<vmem>>, vector<8x384xf32>,
    } else {
    }
    %c0_i32_57 = arith.constant 0 : i32
    %149 = arith.cmpi eq, %145, %c0_i32_57 : i32
    %150 = arith.extui %149 : i1 to i32
    %c0_i32_58 = arith.constant 0 : i32
    %151 = arith.cmpi ne, %150, %c0_i32_58 : i32
    scf.if %151 {
      %369 = arith.index_cast %c3_i32 : i32 to index
      %c0_140 = arith.constant 0 : index
      %c0_141 = arith.constant 0 : index
      %370 = vector.load %arg1[%369, %c0_140, %c0_141] : memref<8x8x384xf32, #tpu.memory_space<vmem>>, vector<1x8x384xf32>
      %371 = vector.shape_cast %370 : vector<1x8x384xf32> to vector<8x384xf32>
      %c0_142 = arith.constant 0 : index
      %c0_143 = arith.constant 0 : index
      %372 = vector.load %arg8[%c0_142, %c0_143] : memref<8x384xf32, #tpu.memory_space<vmem>>, vector<8x384xf32>
      tpu.vector_store %arg8[%c0_142, %c0_143], %371 {strides = array<i32>} : memref<8x384xf32, #tpu.memory_space<vmem>>, vector<8x384xf32>,
    } else {
    }
    %c0_59 = arith.constant 0 : index
    %c0_60 = arith.constant 0 : index
    %152 = vector.load %arg8[%c0_59, %c0_60] : memref<8x384xf32, #tpu.memory_space<vmem>>, vector<8x384xf32>
    %c0_61 = arith.constant 0 : index
    %c0_62 = arith.constant 0 : index
    %153 = vector.load %arg3[%c0_61, %c0_62] : memref<128x384xf32, #tpu.memory_space<vmem>>, vector<128x384xf32>
    %cst_63 = arith.constant dense<0.000000e+00> : vector<8x384xf32>
    %154 = tpu.matmul %136, %153, %cst_63 {dimension_numbers = #tpu.dot_dimension_numbers<[1], [0], [0], [1], [0, 0, 1, 1], [], []>} : vector<8x128xf32>, vector<128x384xf32>, vector<8x384xf32> -> vector<8x384xf32>
    %155 = arith.addf %154, %2 : vector<8x384xf32>
    %156 = vector.extract_strided_slice %152 {offsets = [0, 0], sizes = [8, 128], strides = [1, 1]} : vector<8x384xf32> to vector<8x128xf32>
    %157 = vector.extract_strided_slice %155 {offsets = [0, 0], sizes = [8, 128], strides = [1, 1]} : vector<8x384xf32> to vector<8x128xf32>
    %158 = arith.addf %156, %157 : vector<8x128xf32>
    %159 = arith.negf %158 : vector<8x128xf32>
    %160 = math.exp %159 : vector<8x128xf32>
    %cst_64 = arith.constant 1.000000e+00 : f32
    %161 = vector.broadcast %cst_64 : f32 to vector<8x128xf32>
    %162 = arith.addf %161, %160 : vector<8x128xf32>
    %163 = arith.divf %161, %162 : vector<8x128xf32>
    %164 = vector.extract_strided_slice %152 {offsets = [0, 128], sizes = [8, 128], strides = [1, 1]} : vector<8x384xf32> to vector<8x128xf32>
    %165 = vector.extract_strided_slice %155 {offsets = [0, 128], sizes = [8, 128], strides = [1, 1]} : vector<8x384xf32> to vector<8x128xf32>
    %166 = arith.addf %164, %165 : vector<8x128xf32>
    %167 = arith.negf %166 : vector<8x128xf32>
    %168 = math.exp %167 : vector<8x128xf32>
    %cst_65 = arith.constant 1.000000e+00 : f32
    %169 = vector.broadcast %cst_65 : f32 to vector<8x128xf32>
    %170 = arith.addf %169, %168 : vector<8x128xf32>
    %171 = arith.divf %169, %170 : vector<8x128xf32>
    %172 = vector.extract_strided_slice %152 {offsets = [0, 256], sizes = [8, 128], strides = [1, 1]} : vector<8x384xf32> to vector<8x128xf32>
    %173 = vector.extract_strided_slice %155 {offsets = [0, 256], sizes = [8, 128], strides = [1, 1]} : vector<8x384xf32> to vector<8x128xf32>
    %174 = arith.mulf %163, %173 : vector<8x128xf32>
    %175 = arith.addf %172, %174 : vector<8x128xf32>
    %176 = math.tanh %175 : vector<8x128xf32>
    %cst_66 = arith.constant 1.000000e+00 : f32
    %177 = vector.broadcast %cst_66 : f32 to vector<8x128xf32>
    %178 = arith.subf %177, %171 : vector<8x128xf32>
    %179 = arith.mulf %178, %176 : vector<8x128xf32>
    %180 = arith.mulf %171, %136 : vector<8x128xf32>
    %181 = arith.addf %179, %180 : vector<8x128xf32>
    %c0_67 = arith.constant 0 : index
    %c0_68 = arith.constant 0 : index
    %182 = vector.load %arg5[%c0_67, %c0_68] : memref<128x128xf32, #tpu.memory_space<vmem>>, vector<128x128xf32>
    %cst_69 = arith.constant dense<0.000000e+00> : vector<8x128xf32>
    %183 = tpu.matmul %181, %182, %cst_69 {dimension_numbers = #tpu.dot_dimension_numbers<[1], [0], [0], [1], [0, 0, 1, 1], [], []>} : vector<8x128xf32>, vector<128x128xf32>, vector<8x128xf32> -> vector<8x128xf32>
    %184 = arith.addf %183, %5 : vector<8x128xf32>
    %185 = arith.index_cast %c3_i32 : i32 to index
    %c0_70 = arith.constant 0 : index
    %c0_71 = arith.constant 0 : index
    %186 = vector.load %arg7[%185, %c0_70, %c0_71] : memref<8x8x128xf32, #tpu.memory_space<vmem>>, vector<1x8x128xf32>
    %187 = vector.shape_cast %186 : vector<1x8x128xf32> to vector<8x128xf32>
    %188 = vector.shape_cast %184 : vector<8x128xf32> to vector<1x8x128xf32>
    tpu.vector_store %arg7[%185, %c0_70, %c0_71], %188 {strides = array<i32>} : memref<8x8x128xf32, #tpu.memory_space<vmem>>, vector<1x8x128xf32>,
    %c4_i32 = arith.constant 4 : i32
    %189 = arith.index_cast %c4_i32 : i32 to index
    %190 = memref.load %arg0[%189] : memref<8xi32, #tpu.memory_space<smem>>
    %c1_i32_72 = arith.constant 1 : i32
    %191 = arith.cmpi eq, %190, %c1_i32_72 : i32
    %192 = arith.extui %191 : i1 to i32
    %c0_i32_73 = arith.constant 0 : i32
    %193 = arith.cmpi ne, %192, %c0_i32_73 : i32
    scf.if %193 {
      %cst_140 = arith.constant dense<0xFF800000> : vector<8xf32>
      %369 = vector.multi_reduction <maximumf>, %184, %cst_140 [1] : vector<8x128xf32> to vector<8xf32>
      %370 = vector.shape_cast %369 : vector<8xf32> to vector<8x1xf32>
      %371 = vector.broadcast %370 : vector<8x1xf32> to vector<8x128xf32>
      %372 = arith.cmpf oeq, %184, %371 : vector<8x128xf32>
      %c128_i32 = arith.constant 128 : i32
      %373 = vector.broadcast %c128_i32 : i32 to vector<8x128xi32>
      %374 = arith.select %372, %6, %373 : vector<8x128xi1>, vector<8x128xi32>
      %cst_141 = arith.constant dense<2147483647> : vector<8xi32>
      %375 = vector.multi_reduction <minsi>, %374, %cst_141 [1] : vector<8x128xi32> to vector<8xi32>
      %376 = vector.shape_cast %375 : vector<8xi32> to vector<8x1xi32>
      %377 = vector.broadcast %376 : vector<8x1xi32> to vector<8x128xi32>
      %378 = arith.cmpi eq, %6, %377 : vector<8x128xi32>
      %379 = arith.extui %378 : vector<8x128xi1> to vector<8x128xi32>
      %380 = arith.sitofp %379 : vector<8x128xi32> to vector<8x128xf32>
      %c0_142 = arith.constant 0 : index
      %c0_143 = arith.constant 0 : index
      %381 = vector.load %arg2[%c0_142, %c0_143] : memref<128x384xf32, #tpu.memory_space<vmem>>, vector<128x384xf32>
      %cst_144 = arith.constant dense<0.000000e+00> : vector<8x384xf32>
      %382 = tpu.matmul %380, %381, %cst_144 {dimension_numbers = #tpu.dot_dimension_numbers<[1], [0], [0], [1], [0, 0, 1, 1], [], []>} : vector<8x128xf32>, vector<128x384xf32>, vector<8x384xf32> -> vector<8x384xf32>
      %c0_145 = arith.constant 0 : index
      %c0_146 = arith.constant 0 : index
      %383 = vector.load %arg8[%c0_145, %c0_146] : memref<8x384xf32, #tpu.memory_space<vmem>>, vector<8x384xf32>
      tpu.vector_store %arg8[%c0_145, %c0_146], %382 {strides = array<i32>} : memref<8x384xf32, #tpu.memory_space<vmem>>, vector<8x384xf32>,
    } else {
    }
    %c0_i32_74 = arith.constant 0 : i32
    %194 = arith.cmpi eq, %190, %c0_i32_74 : i32
    %195 = arith.extui %194 : i1 to i32
    %c0_i32_75 = arith.constant 0 : i32
    %196 = arith.cmpi ne, %195, %c0_i32_75 : i32
    scf.if %196 {
      %369 = arith.index_cast %c4_i32 : i32 to index
      %c0_140 = arith.constant 0 : index
      %c0_141 = arith.constant 0 : index
      %370 = vector.load %arg1[%369, %c0_140, %c0_141] : memref<8x8x384xf32, #tpu.memory_space<vmem>>, vector<1x8x384xf32>
      %371 = vector.shape_cast %370 : vector<1x8x384xf32> to vector<8x384xf32>
      %c0_142 = arith.constant 0 : index
      %c0_143 = arith.constant 0 : index
      %372 = vector.load %arg8[%c0_142, %c0_143] : memref<8x384xf32, #tpu.memory_space<vmem>>, vector<8x384xf32>
      tpu.vector_store %arg8[%c0_142, %c0_143], %371 {strides = array<i32>} : memref<8x384xf32, #tpu.memory_space<vmem>>, vector<8x384xf32>,
    } else {
    }
    %c0_76 = arith.constant 0 : index
    %c0_77 = arith.constant 0 : index
    %197 = vector.load %arg8[%c0_76, %c0_77] : memref<8x384xf32, #tpu.memory_space<vmem>>, vector<8x384xf32>
    %c0_78 = arith.constant 0 : index
    %c0_79 = arith.constant 0 : index
    %198 = vector.load %arg3[%c0_78, %c0_79] : memref<128x384xf32, #tpu.memory_space<vmem>>, vector<128x384xf32>
    %cst_80 = arith.constant dense<0.000000e+00> : vector<8x384xf32>
    %199 = tpu.matmul %181, %198, %cst_80 {dimension_numbers = #tpu.dot_dimension_numbers<[1], [0], [0], [1], [0, 0, 1, 1], [], []>} : vector<8x128xf32>, vector<128x384xf32>, vector<8x384xf32> -> vector<8x384xf32>
    %200 = arith.addf %199, %2 : vector<8x384xf32>
    %201 = vector.extract_strided_slice %197 {offsets = [0, 0], sizes = [8, 128], strides = [1, 1]} : vector<8x384xf32> to vector<8x128xf32>
    %202 = vector.extract_strided_slice %200 {offsets = [0, 0], sizes = [8, 128], strides = [1, 1]} : vector<8x384xf32> to vector<8x128xf32>
    %203 = arith.addf %201, %202 : vector<8x128xf32>
    %204 = arith.negf %203 : vector<8x128xf32>
    %205 = math.exp %204 : vector<8x128xf32>
    %cst_81 = arith.constant 1.000000e+00 : f32
    %206 = vector.broadcast %cst_81 : f32 to vector<8x128xf32>
    %207 = arith.addf %206, %205 : vector<8x128xf32>
    %208 = arith.divf %206, %207 : vector<8x128xf32>
    %209 = vector.extract_strided_slice %197 {offsets = [0, 128], sizes = [8, 128], strides = [1, 1]} : vector<8x384xf32> to vector<8x128xf32>
    %210 = vector.extract_strided_slice %200 {offsets = [0, 128], sizes = [8, 128], strides = [1, 1]} : vector<8x384xf32> to vector<8x128xf32>
    %211 = arith.addf %209, %210 : vector<8x128xf32>
    %212 = arith.negf %211 : vector<8x128xf32>
    %213 = math.exp %212 : vector<8x128xf32>
    %cst_82 = arith.constant 1.000000e+00 : f32
    %214 = vector.broadcast %cst_82 : f32 to vector<8x128xf32>
    %215 = arith.addf %214, %213 : vector<8x128xf32>
    %216 = arith.divf %214, %215 : vector<8x128xf32>
    %217 = vector.extract_strided_slice %197 {offsets = [0, 256], sizes = [8, 128], strides = [1, 1]} : vector<8x384xf32> to vector<8x128xf32>
    %218 = vector.extract_strided_slice %200 {offsets = [0, 256], sizes = [8, 128], strides = [1, 1]} : vector<8x384xf32> to vector<8x128xf32>
    %219 = arith.mulf %208, %218 : vector<8x128xf32>
    %220 = arith.addf %217, %219 : vector<8x128xf32>
    %221 = math.tanh %220 : vector<8x128xf32>
    %cst_83 = arith.constant 1.000000e+00 : f32
    %222 = vector.broadcast %cst_83 : f32 to vector<8x128xf32>
    %223 = arith.subf %222, %216 : vector<8x128xf32>
    %224 = arith.mulf %223, %221 : vector<8x128xf32>
    %225 = arith.mulf %216, %181 : vector<8x128xf32>
    %226 = arith.addf %224, %225 : vector<8x128xf32>
    %c0_84 = arith.constant 0 : index
    %c0_85 = arith.constant 0 : index
    %227 = vector.load %arg5[%c0_84, %c0_85] : memref<128x128xf32, #tpu.memory_space<vmem>>, vector<128x128xf32>
    %cst_86 = arith.constant dense<0.000000e+00> : vector<8x128xf32>
    %228 = tpu.matmul %226, %227, %cst_86 {dimension_numbers = #tpu.dot_dimension_numbers<[1], [0], [0], [1], [0, 0, 1, 1], [], []>} : vector<8x128xf32>, vector<128x128xf32>, vector<8x128xf32> -> vector<8x128xf32>
    %229 = arith.addf %228, %5 : vector<8x128xf32>
    %230 = arith.index_cast %c4_i32 : i32 to index
    %c0_87 = arith.constant 0 : index
    %c0_88 = arith.constant 0 : index
    %231 = vector.load %arg7[%230, %c0_87, %c0_88] : memref<8x8x128xf32, #tpu.memory_space<vmem>>, vector<1x8x128xf32>
    %232 = vector.shape_cast %231 : vector<1x8x128xf32> to vector<8x128xf32>
    %233 = vector.shape_cast %229 : vector<8x128xf32> to vector<1x8x128xf32>
    tpu.vector_store %arg7[%230, %c0_87, %c0_88], %233 {strides = array<i32>} : memref<8x8x128xf32, #tpu.memory_space<vmem>>, vector<1x8x128xf32>,
    %c5_i32 = arith.constant 5 : i32
    %234 = arith.index_cast %c5_i32 : i32 to index
    %235 = memref.load %arg0[%234] : memref<8xi32, #tpu.memory_space<smem>>
    %c1_i32_89 = arith.constant 1 : i32
    %236 = arith.cmpi eq, %235, %c1_i32_89 : i32
    %237 = arith.extui %236 : i1 to i32
    %c0_i32_90 = arith.constant 0 : i32
    %238 = arith.cmpi ne, %237, %c0_i32_90 : i32
    scf.if %238 {
      %cst_140 = arith.constant dense<0xFF800000> : vector<8xf32>
      %369 = vector.multi_reduction <maximumf>, %229, %cst_140 [1] : vector<8x128xf32> to vector<8xf32>
      %370 = vector.shape_cast %369 : vector<8xf32> to vector<8x1xf32>
      %371 = vector.broadcast %370 : vector<8x1xf32> to vector<8x128xf32>
      %372 = arith.cmpf oeq, %229, %371 : vector<8x128xf32>
      %c128_i32 = arith.constant 128 : i32
      %373 = vector.broadcast %c128_i32 : i32 to vector<8x128xi32>
      %374 = arith.select %372, %6, %373 : vector<8x128xi1>, vector<8x128xi32>
      %cst_141 = arith.constant dense<2147483647> : vector<8xi32>
      %375 = vector.multi_reduction <minsi>, %374, %cst_141 [1] : vector<8x128xi32> to vector<8xi32>
      %376 = vector.shape_cast %375 : vector<8xi32> to vector<8x1xi32>
      %377 = vector.broadcast %376 : vector<8x1xi32> to vector<8x128xi32>
      %378 = arith.cmpi eq, %6, %377 : vector<8x128xi32>
      %379 = arith.extui %378 : vector<8x128xi1> to vector<8x128xi32>
      %380 = arith.sitofp %379 : vector<8x128xi32> to vector<8x128xf32>
      %c0_142 = arith.constant 0 : index
      %c0_143 = arith.constant 0 : index
      %381 = vector.load %arg2[%c0_142, %c0_143] : memref<128x384xf32, #tpu.memory_space<vmem>>, vector<128x384xf32>
      %cst_144 = arith.constant dense<0.000000e+00> : vector<8x384xf32>
      %382 = tpu.matmul %380, %381, %cst_144 {dimension_numbers = #tpu.dot_dimension_numbers<[1], [0], [0], [1], [0, 0, 1, 1], [], []>} : vector<8x128xf32>, vector<128x384xf32>, vector<8x384xf32> -> vector<8x384xf32>
      %c0_145 = arith.constant 0 : index
      %c0_146 = arith.constant 0 : index
      %383 = vector.load %arg8[%c0_145, %c0_146] : memref<8x384xf32, #tpu.memory_space<vmem>>, vector<8x384xf32>
      tpu.vector_store %arg8[%c0_145, %c0_146], %382 {strides = array<i32>} : memref<8x384xf32, #tpu.memory_space<vmem>>, vector<8x384xf32>,
    } else {
    }
    %c0_i32_91 = arith.constant 0 : i32
    %239 = arith.cmpi eq, %235, %c0_i32_91 : i32
    %240 = arith.extui %239 : i1 to i32
    %c0_i32_92 = arith.constant 0 : i32
    %241 = arith.cmpi ne, %240, %c0_i32_92 : i32
    scf.if %241 {
      %369 = arith.index_cast %c5_i32 : i32 to index
      %c0_140 = arith.constant 0 : index
      %c0_141 = arith.constant 0 : index
      %370 = vector.load %arg1[%369, %c0_140, %c0_141] : memref<8x8x384xf32, #tpu.memory_space<vmem>>, vector<1x8x384xf32>
      %371 = vector.shape_cast %370 : vector<1x8x384xf32> to vector<8x384xf32>
      %c0_142 = arith.constant 0 : index
      %c0_143 = arith.constant 0 : index
      %372 = vector.load %arg8[%c0_142, %c0_143] : memref<8x384xf32, #tpu.memory_space<vmem>>, vector<8x384xf32>
      tpu.vector_store %arg8[%c0_142, %c0_143], %371 {strides = array<i32>} : memref<8x384xf32, #tpu.memory_space<vmem>>, vector<8x384xf32>,
    } else {
    }
    %c0_93 = arith.constant 0 : index
    %c0_94 = arith.constant 0 : index
    %242 = vector.load %arg8[%c0_93, %c0_94] : memref<8x384xf32, #tpu.memory_space<vmem>>, vector<8x384xf32>
    %c0_95 = arith.constant 0 : index
    %c0_96 = arith.constant 0 : index
    %243 = vector.load %arg3[%c0_95, %c0_96] : memref<128x384xf32, #tpu.memory_space<vmem>>, vector<128x384xf32>
    %cst_97 = arith.constant dense<0.000000e+00> : vector<8x384xf32>
    %244 = tpu.matmul %226, %243, %cst_97 {dimension_numbers = #tpu.dot_dimension_numbers<[1], [0], [0], [1], [0, 0, 1, 1], [], []>} : vector<8x128xf32>, vector<128x384xf32>, vector<8x384xf32> -> vector<8x384xf32>
    %245 = arith.addf %244, %2 : vector<8x384xf32>
    %246 = vector.extract_strided_slice %242 {offsets = [0, 0], sizes = [8, 128], strides = [1, 1]} : vector<8x384xf32> to vector<8x128xf32>
    %247 = vector.extract_strided_slice %245 {offsets = [0, 0], sizes = [8, 128], strides = [1, 1]} : vector<8x384xf32> to vector<8x128xf32>
    %248 = arith.addf %246, %247 : vector<8x128xf32>
    %249 = arith.negf %248 : vector<8x128xf32>
    %250 = math.exp %249 : vector<8x128xf32>
    %cst_98 = arith.constant 1.000000e+00 : f32
    %251 = vector.broadcast %cst_98 : f32 to vector<8x128xf32>
    %252 = arith.addf %251, %250 : vector<8x128xf32>
    %253 = arith.divf %251, %252 : vector<8x128xf32>
    %254 = vector.extract_strided_slice %242 {offsets = [0, 128], sizes = [8, 128], strides = [1, 1]} : vector<8x384xf32> to vector<8x128xf32>
    %255 = vector.extract_strided_slice %245 {offsets = [0, 128], sizes = [8, 128], strides = [1, 1]} : vector<8x384xf32> to vector<8x128xf32>
    %256 = arith.addf %254, %255 : vector<8x128xf32>
    %257 = arith.negf %256 : vector<8x128xf32>
    %258 = math.exp %257 : vector<8x128xf32>
    %cst_99 = arith.constant 1.000000e+00 : f32
    %259 = vector.broadcast %cst_99 : f32 to vector<8x128xf32>
    %260 = arith.addf %259, %258 : vector<8x128xf32>
    %261 = arith.divf %259, %260 : vector<8x128xf32>
    %262 = vector.extract_strided_slice %242 {offsets = [0, 256], sizes = [8, 128], strides = [1, 1]} : vector<8x384xf32> to vector<8x128xf32>
    %263 = vector.extract_strided_slice %245 {offsets = [0, 256], sizes = [8, 128], strides = [1, 1]} : vector<8x384xf32> to vector<8x128xf32>
    %264 = arith.mulf %253, %263 : vector<8x128xf32>
    %265 = arith.addf %262, %264 : vector<8x128xf32>
    %266 = math.tanh %265 : vector<8x128xf32>
    %cst_100 = arith.constant 1.000000e+00 : f32
    %267 = vector.broadcast %cst_100 : f32 to vector<8x128xf32>
    %268 = arith.subf %267, %261 : vector<8x128xf32>
    %269 = arith.mulf %268, %266 : vector<8x128xf32>
    %270 = arith.mulf %261, %226 : vector<8x128xf32>
    %271 = arith.addf %269, %270 : vector<8x128xf32>
    %c0_101 = arith.constant 0 : index
    %c0_102 = arith.constant 0 : index
    %272 = vector.load %arg5[%c0_101, %c0_102] : memref<128x128xf32, #tpu.memory_space<vmem>>, vector<128x128xf32>
    %cst_103 = arith.constant dense<0.000000e+00> : vector<8x128xf32>
    %273 = tpu.matmul %271, %272, %cst_103 {dimension_numbers = #tpu.dot_dimension_numbers<[1], [0], [0], [1], [0, 0, 1, 1], [], []>} : vector<8x128xf32>, vector<128x128xf32>, vector<8x128xf32> -> vector<8x128xf32>
    %274 = arith.addf %273, %5 : vector<8x128xf32>
    %275 = arith.index_cast %c5_i32 : i32 to index
    %c0_104 = arith.constant 0 : index
    %c0_105 = arith.constant 0 : index
    %276 = vector.load %arg7[%275, %c0_104, %c0_105] : memref<8x8x128xf32, #tpu.memory_space<vmem>>, vector<1x8x128xf32>
    %277 = vector.shape_cast %276 : vector<1x8x128xf32> to vector<8x128xf32>
    %278 = vector.shape_cast %274 : vector<8x128xf32> to vector<1x8x128xf32>
    tpu.vector_store %arg7[%275, %c0_104, %c0_105], %278 {strides = array<i32>} : memref<8x8x128xf32, #tpu.memory_space<vmem>>, vector<1x8x128xf32>,
    %c6_i32 = arith.constant 6 : i32
    %279 = arith.index_cast %c6_i32 : i32 to index
    %280 = memref.load %arg0[%279] : memref<8xi32, #tpu.memory_space<smem>>
    %c1_i32_106 = arith.constant 1 : i32
    %281 = arith.cmpi eq, %280, %c1_i32_106 : i32
    %282 = arith.extui %281 : i1 to i32
    %c0_i32_107 = arith.constant 0 : i32
    %283 = arith.cmpi ne, %282, %c0_i32_107 : i32
    scf.if %283 {
      %cst_140 = arith.constant dense<0xFF800000> : vector<8xf32>
      %369 = vector.multi_reduction <maximumf>, %274, %cst_140 [1] : vector<8x128xf32> to vector<8xf32>
      %370 = vector.shape_cast %369 : vector<8xf32> to vector<8x1xf32>
      %371 = vector.broadcast %370 : vector<8x1xf32> to vector<8x128xf32>
      %372 = arith.cmpf oeq, %274, %371 : vector<8x128xf32>
      %c128_i32 = arith.constant 128 : i32
      %373 = vector.broadcast %c128_i32 : i32 to vector<8x128xi32>
      %374 = arith.select %372, %6, %373 : vector<8x128xi1>, vector<8x128xi32>
      %cst_141 = arith.constant dense<2147483647> : vector<8xi32>
      %375 = vector.multi_reduction <minsi>, %374, %cst_141 [1] : vector<8x128xi32> to vector<8xi32>
      %376 = vector.shape_cast %375 : vector<8xi32> to vector<8x1xi32>
      %377 = vector.broadcast %376 : vector<8x1xi32> to vector<8x128xi32>
      %378 = arith.cmpi eq, %6, %377 : vector<8x128xi32>
      %379 = arith.extui %378 : vector<8x128xi1> to vector<8x128xi32>
      %380 = arith.sitofp %379 : vector<8x128xi32> to vector<8x128xf32>
      %c0_142 = arith.constant 0 : index
      %c0_143 = arith.constant 0 : index
      %381 = vector.load %arg2[%c0_142, %c0_143] : memref<128x384xf32, #tpu.memory_space<vmem>>, vector<128x384xf32>
      %cst_144 = arith.constant dense<0.000000e+00> : vector<8x384xf32>
      %382 = tpu.matmul %380, %381, %cst_144 {dimension_numbers = #tpu.dot_dimension_numbers<[1], [0], [0], [1], [0, 0, 1, 1], [], []>} : vector<8x128xf32>, vector<128x384xf32>, vector<8x384xf32> -> vector<8x384xf32>
      %c0_145 = arith.constant 0 : index
      %c0_146 = arith.constant 0 : index
      %383 = vector.load %arg8[%c0_145, %c0_146] : memref<8x384xf32, #tpu.memory_space<vmem>>, vector<8x384xf32>
      tpu.vector_store %arg8[%c0_145, %c0_146], %382 {strides = array<i32>} : memref<8x384xf32, #tpu.memory_space<vmem>>, vector<8x384xf32>,
    } else {
    }
    %c0_i32_108 = arith.constant 0 : i32
    %284 = arith.cmpi eq, %280, %c0_i32_108 : i32
    %285 = arith.extui %284 : i1 to i32
    %c0_i32_109 = arith.constant 0 : i32
    %286 = arith.cmpi ne, %285, %c0_i32_109 : i32
    scf.if %286 {
      %369 = arith.index_cast %c6_i32 : i32 to index
      %c0_140 = arith.constant 0 : index
      %c0_141 = arith.constant 0 : index
      %370 = vector.load %arg1[%369, %c0_140, %c0_141] : memref<8x8x384xf32, #tpu.memory_space<vmem>>, vector<1x8x384xf32>
      %371 = vector.shape_cast %370 : vector<1x8x384xf32> to vector<8x384xf32>
      %c0_142 = arith.constant 0 : index
      %c0_143 = arith.constant 0 : index
      %372 = vector.load %arg8[%c0_142, %c0_143] : memref<8x384xf32, #tpu.memory_space<vmem>>, vector<8x384xf32>
      tpu.vector_store %arg8[%c0_142, %c0_143], %371 {strides = array<i32>} : memref<8x384xf32, #tpu.memory_space<vmem>>, vector<8x384xf32>,
    } else {
    }
    %c0_110 = arith.constant 0 : index
    %c0_111 = arith.constant 0 : index
    %287 = vector.load %arg8[%c0_110, %c0_111] : memref<8x384xf32, #tpu.memory_space<vmem>>, vector<8x384xf32>
    %c0_112 = arith.constant 0 : index
    %c0_113 = arith.constant 0 : index
    %288 = vector.load %arg3[%c0_112, %c0_113] : memref<128x384xf32, #tpu.memory_space<vmem>>, vector<128x384xf32>
    %cst_114 = arith.constant dense<0.000000e+00> : vector<8x384xf32>
    %289 = tpu.matmul %271, %288, %cst_114 {dimension_numbers = #tpu.dot_dimension_numbers<[1], [0], [0], [1], [0, 0, 1, 1], [], []>} : vector<8x128xf32>, vector<128x384xf32>, vector<8x384xf32> -> vector<8x384xf32>
    %290 = arith.addf %289, %2 : vector<8x384xf32>
    %291 = vector.extract_strided_slice %287 {offsets = [0, 0], sizes = [8, 128], strides = [1, 1]} : vector<8x384xf32> to vector<8x128xf32>
    %292 = vector.extract_strided_slice %290 {offsets = [0, 0], sizes = [8, 128], strides = [1, 1]} : vector<8x384xf32> to vector<8x128xf32>
    %293 = arith.addf %291, %292 : vector<8x128xf32>
    %294 = arith.negf %293 : vector<8x128xf32>
    %295 = math.exp %294 : vector<8x128xf32>
    %cst_115 = arith.constant 1.000000e+00 : f32
    %296 = vector.broadcast %cst_115 : f32 to vector<8x128xf32>
    %297 = arith.addf %296, %295 : vector<8x128xf32>
    %298 = arith.divf %296, %297 : vector<8x128xf32>
    %299 = vector.extract_strided_slice %287 {offsets = [0, 128], sizes = [8, 128], strides = [1, 1]} : vector<8x384xf32> to vector<8x128xf32>
    %300 = vector.extract_strided_slice %290 {offsets = [0, 128], sizes = [8, 128], strides = [1, 1]} : vector<8x384xf32> to vector<8x128xf32>
    %301 = arith.addf %299, %300 : vector<8x128xf32>
    %302 = arith.negf %301 : vector<8x128xf32>
    %303 = math.exp %302 : vector<8x128xf32>
    %cst_116 = arith.constant 1.000000e+00 : f32
    %304 = vector.broadcast %cst_116 : f32 to vector<8x128xf32>
    %305 = arith.addf %304, %303 : vector<8x128xf32>
    %306 = arith.divf %304, %305 : vector<8x128xf32>
    %307 = vector.extract_strided_slice %287 {offsets = [0, 256], sizes = [8, 128], strides = [1, 1]} : vector<8x384xf32> to vector<8x128xf32>
    %308 = vector.extract_strided_slice %290 {offsets = [0, 256], sizes = [8, 128], strides = [1, 1]} : vector<8x384xf32> to vector<8x128xf32>
    %309 = arith.mulf %298, %308 : vector<8x128xf32>
    %310 = arith.addf %307, %309 : vector<8x128xf32>
    %311 = math.tanh %310 : vector<8x128xf32>
    %cst_117 = arith.constant 1.000000e+00 : f32
    %312 = vector.broadcast %cst_117 : f32 to vector<8x128xf32>
    %313 = arith.subf %312, %306 : vector<8x128xf32>
    %314 = arith.mulf %313, %311 : vector<8x128xf32>
    %315 = arith.mulf %306, %271 : vector<8x128xf32>
    %316 = arith.addf %314, %315 : vector<8x128xf32>
    %c0_118 = arith.constant 0 : index
    %c0_119 = arith.constant 0 : index
    %317 = vector.load %arg5[%c0_118, %c0_119] : memref<128x128xf32, #tpu.memory_space<vmem>>, vector<128x128xf32>
    %cst_120 = arith.constant dense<0.000000e+00> : vector<8x128xf32>
    %318 = tpu.matmul %316, %317, %cst_120 {dimension_numbers = #tpu.dot_dimension_numbers<[1], [0], [0], [1], [0, 0, 1, 1], [], []>} : vector<8x128xf32>, vector<128x128xf32>, vector<8x128xf32> -> vector<8x128xf32>
    %319 = arith.addf %318, %5 : vector<8x128xf32>
    %320 = arith.index_cast %c6_i32 : i32 to index
    %c0_121 = arith.constant 0 : index
    %c0_122 = arith.constant 0 : index
    %321 = vector.load %arg7[%320, %c0_121, %c0_122] : memref<8x8x128xf32, #tpu.memory_space<vmem>>, vector<1x8x128xf32>
    %322 = vector.shape_cast %321 : vector<1x8x128xf32> to vector<8x128xf32>
    %323 = vector.shape_cast %319 : vector<8x128xf32> to vector<1x8x128xf32>
    tpu.vector_store %arg7[%320, %c0_121, %c0_122], %323 {strides = array<i32>} : memref<8x8x128xf32, #tpu.memory_space<vmem>>, vector<1x8x128xf32>,
    %c7_i32 = arith.constant 7 : i32
    %324 = arith.index_cast %c7_i32 : i32 to index
    %325 = memref.load %arg0[%324] : memref<8xi32, #tpu.memory_space<smem>>
    %c1_i32_123 = arith.constant 1 : i32
    %326 = arith.cmpi eq, %325, %c1_i32_123 : i32
    %327 = arith.extui %326 : i1 to i32
    %c0_i32_124 = arith.constant 0 : i32
    %328 = arith.cmpi ne, %327, %c0_i32_124 : i32
    scf.if %328 {
      %cst_140 = arith.constant dense<0xFF800000> : vector<8xf32>
      %369 = vector.multi_reduction <maximumf>, %319, %cst_140 [1] : vector<8x128xf32> to vector<8xf32>
      %370 = vector.shape_cast %369 : vector<8xf32> to vector<8x1xf32>
      %371 = vector.broadcast %370 : vector<8x1xf32> to vector<8x128xf32>
      %372 = arith.cmpf oeq, %319, %371 : vector<8x128xf32>
      %c128_i32 = arith.constant 128 : i32
      %373 = vector.broadcast %c128_i32 : i32 to vector<8x128xi32>
      %374 = arith.select %372, %6, %373 : vector<8x128xi1>, vector<8x128xi32>
      %cst_141 = arith.constant dense<2147483647> : vector<8xi32>
      %375 = vector.multi_reduction <minsi>, %374, %cst_141 [1] : vector<8x128xi32> to vector<8xi32>
      %376 = vector.shape_cast %375 : vector<8xi32> to vector<8x1xi32>
      %377 = vector.broadcast %376 : vector<8x1xi32> to vector<8x128xi32>
      %378 = arith.cmpi eq, %6, %377 : vector<8x128xi32>
      %379 = arith.extui %378 : vector<8x128xi1> to vector<8x128xi32>
      %380 = arith.sitofp %379 : vector<8x128xi32> to vector<8x128xf32>
      %c0_142 = arith.constant 0 : index
      %c0_143 = arith.constant 0 : index
      %381 = vector.load %arg2[%c0_142, %c0_143] : memref<128x384xf32, #tpu.memory_space<vmem>>, vector<128x384xf32>
      %cst_144 = arith.constant dense<0.000000e+00> : vector<8x384xf32>
      %382 = tpu.matmul %380, %381, %cst_144 {dimension_numbers = #tpu.dot_dimension_numbers<[1], [0], [0], [1], [0, 0, 1, 1], [], []>} : vector<8x128xf32>, vector<128x384xf32>, vector<8x384xf32> -> vector<8x384xf32>
      %c0_145 = arith.constant 0 : index
      %c0_146 = arith.constant 0 : index
      %383 = vector.load %arg8[%c0_145, %c0_146] : memref<8x384xf32, #tpu.memory_space<vmem>>, vector<8x384xf32>
      tpu.vector_store %arg8[%c0_145, %c0_146], %382 {strides = array<i32>} : memref<8x384xf32, #tpu.memory_space<vmem>>, vector<8x384xf32>,
    } else {
    }
    %c0_i32_125 = arith.constant 0 : i32
    %329 = arith.cmpi eq, %325, %c0_i32_125 : i32
    %330 = arith.extui %329 : i1 to i32
    %c0_i32_126 = arith.constant 0 : i32
    %331 = arith.cmpi ne, %330, %c0_i32_126 : i32
    scf.if %331 {
      %369 = arith.index_cast %c7_i32 : i32 to index
      %c0_140 = arith.constant 0 : index
      %c0_141 = arith.constant 0 : index
      %370 = vector.load %arg1[%369, %c0_140, %c0_141] : memref<8x8x384xf32, #tpu.memory_space<vmem>>, vector<1x8x384xf32>
      %371 = vector.shape_cast %370 : vector<1x8x384xf32> to vector<8x384xf32>
      %c0_142 = arith.constant 0 : index
      %c0_143 = arith.constant 0 : index
      %372 = vector.load %arg8[%c0_142, %c0_143] : memref<8x384xf32, #tpu.memory_space<vmem>>, vector<8x384xf32>
      tpu.vector_store %arg8[%c0_142, %c0_143], %371 {strides = array<i32>} : memref<8x384xf32, #tpu.memory_space<vmem>>, vector<8x384xf32>,
    } else {
    }
    %c0_127 = arith.constant 0 : index
    %c0_128 = arith.constant 0 : index
    %332 = vector.load %arg8[%c0_127, %c0_128] : memref<8x384xf32, #tpu.memory_space<vmem>>, vector<8x384xf32>
    %c0_129 = arith.constant 0 : index
    %c0_130 = arith.constant 0 : index
    %333 = vector.load %arg3[%c0_129, %c0_130] : memref<128x384xf32, #tpu.memory_space<vmem>>, vector<128x384xf32>
    %cst_131 = arith.constant dense<0.000000e+00> : vector<8x384xf32>
    %334 = tpu.matmul %316, %333, %cst_131 {dimension_numbers = #tpu.dot_dimension_numbers<[1], [0], [0], [1], [0, 0, 1, 1], [], []>} : vector<8x128xf32>, vector<128x384xf32>, vector<8x384xf32> -> vector<8x384xf32>
    %335 = arith.addf %334, %2 : vector<8x384xf32>
    %336 = vector.extract_strided_slice %332 {offsets = [0, 0], sizes = [8, 128], strides = [1, 1]} : vector<8x384xf32> to vector<8x128xf32>
    %337 = vector.extract_strided_slice %335 {offsets = [0, 0], sizes = [8, 128], strides = [1, 1]} : vector<8x384xf32> to vector<8x128xf32>
    %338 = arith.addf %336, %337 : vector<8x128xf32>
    %339 = arith.negf %338 : vector<8x128xf32>
    %340 = math.exp %339 : vector<8x128xf32>
    %cst_132 = arith.constant 1.000000e+00 : f32
    %341 = vector.broadcast %cst_132 : f32 to vector<8x128xf32>
    %342 = arith.addf %341, %340 : vector<8x128xf32>
    %343 = arith.divf %341, %342 : vector<8x128xf32>
    %344 = vector.extract_strided_slice %332 {offsets = [0, 128], sizes = [8, 128], strides = [1, 1]} : vector<8x384xf32> to vector<8x128xf32>
    %345 = vector.extract_strided_slice %335 {offsets = [0, 128], sizes = [8, 128], strides = [1, 1]} : vector<8x384xf32> to vector<8x128xf32>
    %346 = arith.addf %344, %345 : vector<8x128xf32>
    %347 = arith.negf %346 : vector<8x128xf32>
    %348 = math.exp %347 : vector<8x128xf32>
    %cst_133 = arith.constant 1.000000e+00 : f32
    %349 = vector.broadcast %cst_133 : f32 to vector<8x128xf32>
    %350 = arith.addf %349, %348 : vector<8x128xf32>
    %351 = arith.divf %349, %350 : vector<8x128xf32>
    %352 = vector.extract_strided_slice %332 {offsets = [0, 256], sizes = [8, 128], strides = [1, 1]} : vector<8x384xf32> to vector<8x128xf32>
    %353 = vector.extract_strided_slice %335 {offsets = [0, 256], sizes = [8, 128], strides = [1, 1]} : vector<8x384xf32> to vector<8x128xf32>
    %354 = arith.mulf %343, %353 : vector<8x128xf32>
    %355 = arith.addf %352, %354 : vector<8x128xf32>
    %356 = math.tanh %355 : vector<8x128xf32>
    %cst_134 = arith.constant 1.000000e+00 : f32
    %357 = vector.broadcast %cst_134 : f32 to vector<8x128xf32>
    %358 = arith.subf %357, %351 : vector<8x128xf32>
    %359 = arith.mulf %358, %356 : vector<8x128xf32>
    %360 = arith.mulf %351, %316 : vector<8x128xf32>
    %361 = arith.addf %359, %360 : vector<8x128xf32>
    %c0_135 = arith.constant 0 : index
    %c0_136 = arith.constant 0 : index
    %362 = vector.load %arg5[%c0_135, %c0_136] : memref<128x128xf32, #tpu.memory_space<vmem>>, vector<128x128xf32>
    %cst_137 = arith.constant dense<0.000000e+00> : vector<8x128xf32>
    %363 = tpu.matmul %361, %362, %cst_137 {dimension_numbers = #tpu.dot_dimension_numbers<[1], [0], [0], [1], [0, 0, 1, 1], [], []>} : vector<8x128xf32>, vector<128x128xf32>, vector<8x128xf32> -> vector<8x128xf32>
    %364 = arith.addf %363, %5 : vector<8x128xf32>
    %365 = arith.index_cast %c7_i32 : i32 to index
    %c0_138 = arith.constant 0 : index
    %c0_139 = arith.constant 0 : index
    %366 = vector.load %arg7[%365, %c0_138, %c0_139] : memref<8x8x128xf32, #tpu.memory_space<vmem>>, vector<1x8x128xf32>
    %367 = vector.shape_cast %366 : vector<1x8x128xf32> to vector<8x128xf32>
    %368 = vector.shape_cast %364 : vector<8x128xf32> to vector<1x8x128xf32>
    tpu.vector_store %arg7[%365, %c0_138, %c0_139], %368 {strides = array<i32>} : memref<8x8x128xf32, #tpu.memory_space<vmem>>, vector<1x8x128xf32>,
    %c8_i32 = arith.constant 8 : i32
    return
  }
}

</mosaic_0001>

<llo_original>
// kernel: tpu_custom_call.1
$region0: #{tpu_custom_call.1}
  #allocation0 [shape = 'u32[]', space=smem, size = 0x4, offset = 0x4, fixed_abs, tag = 'smem constant byte address 0x4 - core index']
  #allocation1 [shape = 'u32[144,128]{1,0:T(1,128)}', space=vmem, size = 0x12000, scoped, tag = 'internal scratch']
  #allocation2 [shape = 'f32[8,384]{1,0:T(8,128)}', space=vmem, size = 0x3000, scoped, tag = 'scratch operand']
  %s0 = inlined_call_operand.hbm [shape: s32[8], index: 0, kind: input, shape index: {}]
  %s1 = inlined_call_operand.hbm [shape: f32[8,8,384], index: 1, kind: input, shape index: {}]
  %s2 = inlined_call_operand.hbm [shape: f32[128,384], index: 2, kind: input, shape index: {}]
  %s3 = inlined_call_operand.hbm [shape: f32[128,384], index: 3, kind: input, shape index: {}]
  %s4 = inlined_call_operand.vmem [shape: f32[1,384], index: 4, kind: input, shape index: {}]
  %s5 = inlined_call_operand.hbm [shape: f32[128,128], index: 5, kind: input, shape index: {}]
  %s6 = inlined_call_operand.vmem [shape: f32[1,128], index: 6, kind: input, shape index: {}]
  %s7 = inlined_call_operand.hbm [shape: f32[8,8,128], index: 7, kind: output, shape index: {}]
  %s8 = sld [smem:[#allocation0]]
  $region122: #{tpu_custom_call.1} parent=0
    _
  %s10 = ssub.s32 1, %s8
  %s11 = scalar_select 0, %s10, %s8
  $region1: #{tpu_custom_call.1} parent=0
    #allocation3 [shape = 'u8[512]{0}', space=smem, size = 0x200, scoped, tag = 'input window, operand 0, single buffered']
    #allocation4 [shape = 's32[1]{0}', space=sflag, size = 0x4, scoped, tag = 'scoped memory for tpu_custom_call.1']
    #allocation5 [shape = 's32[1]{0}', space=sflag, size = 0x4, scoped, tag = 'scoped memory for tpu_custom_call.1']
    #allocation6 [shape = 's32[1]{0}', space=sflag, size = 0x4, scoped, tag = 'scoped memory for tpu_custom_call.1']
    #allocation7 [shape = 'u8[98304]{0}', space=vmem, size = 0x18000, scoped, tag = 'input window, operand 1, single buffered']
    #allocation8 [shape = 'u8[196608]{0}', space=vmem, size = 0x30000, scoped, tag = 'input window, operand 2, single buffered']
    #allocation9 [shape = 's32[1]{0}', space=sflag, size = 0x4, scoped, tag = 'scoped memory for tpu_custom_call.1']
    #allocation10 [shape = 'u8[196608]{0}', space=vmem, size = 0x30000, scoped, tag = 'input window, operand 3, single buffered']
    #allocation11 [shape = 'u8[65536]{0}', space=vmem, size = 0x10000, scoped, tag = 'input window, operand 5, single buffered']
    #allocation12 [shape = 's32[1]{0}', space=sflag, size = 0x4, scoped, tag = 'scoped memory for tpu_custom_call.1']
    #allocation13 [shape = 'u8[32768]{0}', space=vmem, size = 0x8000, scoped, tag = 'output window, operand 0, single buffered']
    %12 = vsyncpa [#allocation6], 0
    %13 = vsyncpa [#allocation4], 0
    %14 = vsyncpa [#allocation9], 0
    %15 = vsyncpa [#allocation12], 0
    %16 = vsyncpa [#allocation5], 0
    // Predicated region
    $region2: #{tpu_custom_call.1} parent=1 // pred_check
      _
    $region3: #{tpu_custom_call.1} parent=1 // pred_check_branch
      %18 = sbr.rel (0) target = $region5
    $region4: #{tpu_custom_call.1} parent=1 // pred_region
      %s20 = ssub.s32 16, 16
      %21 = vsyncadd [#allocation6], %s20
      %24 = dma.hbm_to_smem %s0, 16, [#allocation3], [#allocation6]
    $region5: #{tpu_custom_call.1} parent=1 // pred_fallthru
      _
    // Predicated region
    $region6: #{tpu_custom_call.1} parent=1 // pred_check
      _
    $region7: #{tpu_custom_call.1} parent=1 // pred_check_branch
      %26 = sbr.rel (0) target = $region9
    $region8: #{tpu_custom_call.1} parent=1 // pred_region
      %s28 = ssub.s32 3072, 3072
      %29 = vsyncadd [#allocation4], %s28
      %s30 = sshll.u32 [#allocation7], 4
      %s31 = int_to_ptr.vmem [resolvable:$true] %s30
      %36 = dma.hbm_to_vmem [thread:$0]  %s1, 3072, %s31, [#allocation4], 384, 384, 24
    $region9: #{tpu_custom_call.1} parent=1 // pred_fallthru
      _
    // Predicated region
    $region10: #{tpu_custom_call.1} parent=1 // pred_check
      _
    $region11: #{tpu_custom_call.1} parent=1 // pred_check_branch
      %38 = sbr.rel (0) target = $region13
    $region12: #{tpu_custom_call.1} parent=1 // pred_region
      %s40 = ssub.s32 6144, 6144
      %41 = vsyncadd [#allocation9], %s40
      %s42 = sshll.u32 [#allocation8], 4
      %s43 = int_to_ptr.vmem [resolvable:$true] %s42
      %48 = dma.hbm_to_vmem [thread:$0]  %s2, 6144, %s43, [#allocation9], 384, 384, 24
    $region13: #{tpu_custom_call.1} parent=1 // pred_fallthru
      _
    // Predicated region
    $region14: #{tpu_custom_call.1} parent=1 // pred_check
      _
    $region15: #{tpu_custom_call.1} parent=1 // pred_check_branch
      %50 = sbr.rel (0) target = $region17
    $region16: #{tpu_custom_call.1} parent=1 // pred_region
      %s52 = ssub.s32 6144, 6144
      %53 = vsyncadd [#allocation9], %s52
      %s54 = sshll.u32 [#allocation10], 4
      %s55 = int_to_ptr.vmem [resolvable:$true] %s54
      %60 = dma.hbm_to_vmem [thread:$0]  %s3, 6144, %s55, [#allocation9], 384, 384, 24
    $region17: #{tpu_custom_call.1} parent=1 // pred_fallthru
      _
    // Predicated region
    $region18: #{tpu_custom_call.1} parent=1 // pred_check
      _
    $region19: #{tpu_custom_call.1} parent=1 // pred_check_branch
      %62 = sbr.rel (0) target = $region21
    $region20: #{tpu_custom_call.1} parent=1 // pred_region
      _
    $region21: #{tpu_custom_call.1} parent=1 // pred_fallthru
      _
    // Predicated region
    $region22: #{tpu_custom_call.1} parent=1 // pred_check
      _
    $region23: #{tpu_custom_call.1} parent=1 // pred_check_branch
      %64 = sbr.rel (0) target = $region25
    $region24: #{tpu_custom_call.1} parent=1 // pred_region
      %s66 = ssub.s32 2048, 2048
      %67 = vsyncadd [#allocation12], %s66
      %s68 = sshll.u32 [#allocation11], 4
      %s69 = int_to_ptr.vmem [resolvable:$true] %s68
      %74 = dma.hbm_to_vmem [thread:$0]  %s5, 2048, %s69, [#allocation12], 128, 128, 8
    $region25: #{tpu_custom_call.1} parent=1 // pred_fallthru
      _
    // Predicated region
    $region26: #{tpu_custom_call.1} parent=1 // pred_check
      _
    $region27: #{tpu_custom_call.1} parent=1 // pred_check_branch
      %76 = sbr.rel (0) target = $region29
    $region28: #{tpu_custom_call.1} parent=1 // pred_region
      _
    $region29: #{tpu_custom_call.1} parent=1 // pred_fallthru
      _
    // Predicated region
    $region30: #{tpu_custom_call.1} parent=1 // pred_check
      _
    $region31: #{tpu_custom_call.1} parent=1 // pred_check_branch
      %78 = sbr.rel (0) target = $region33
    $region32: #{tpu_custom_call.1} parent=1 // pred_region
      %79 = dma.done [#allocation6], 16
    $region33: #{tpu_custom_call.1} parent=1 // pred_fallthru
      _
    // Predicated region
    $region34: #{tpu_custom_call.1} parent=1 // pred_check
      _
    $region35: #{tpu_custom_call.1} parent=1 // pred_check_branch
      %81 = sbr.rel (0) target = $region37
    $region36: #{tpu_custom_call.1} parent=1 // pred_region
      %82 = dma.done [#allocation4], 3072
    $region37: #{tpu_custom_call.1} parent=1 // pred_fallthru
      _
    // Predicated region
    $region38: #{tpu_custom_call.1} parent=1 // pred_check
      _
    $region39: #{tpu_custom_call.1} parent=1 // pred_check_branch
      %84 = sbr.rel (0) target = $region41
    $region40: #{tpu_custom_call.1} parent=1 // pred_region
      %85 = dma.done [#allocation9], 6144
    $region41: #{tpu_custom_call.1} parent=1 // pred_fallthru
      _
    // Predicated region
    $region42: #{tpu_custom_call.1} parent=1 // pred_check
      _
    $region43: #{tpu_custom_call.1} parent=1 // pred_check_branch
      %87 = sbr.rel (0) target = $region45
    $region44: #{tpu_custom_call.1} parent=1 // pred_region
      %88 = dma.done [#allocation9], 6144
    $region45: #{tpu_custom_call.1} parent=1 // pred_fallthru
      _
    // Predicated region
    $region46: #{tpu_custom_call.1} parent=1 // pred_check
      _
    $region47: #{tpu_custom_call.1} parent=1 // pred_check_branch
      %90 = sbr.rel (0) target = $region49
    $region48: #{tpu_custom_call.1} parent=1 // pred_region
      %91 = dma.done [#allocation12], 2048
    $region49: #{tpu_custom_call.1} parent=1 // pred_fallthru
      _
    %92 = sfence
    %v93 = vld [vmem:[%s4] sm:$0x7]
    %v95 = vlaneseq
    %v96 = vshrl.u32 %v95, 7
    %v97 = vsub.s32 0, %v96
    %v98 = vrot.slane %v93, %v97
    %v99 = vlaneseq
    %v100 = vshrl.u32 %v99, 7
    %v101 = vsub.s32 1, %v100
    %v102 = vrot.slane %v93, %v101
    %v103 = vlaneseq
    %v104 = vshrl.u32 %v103, 7
    %v105 = vsub.s32 2, %v104
    %v106 = vrot.slane %v93, %v105
    %v110 = vld [vmem:[%s6] sm:$0x1]
    %v112 = vlaneseq
    %v113 = vshrl.u32 %v112, 7
    %v114 = vsub.s32 0, %v113
    %v115 = vrot.slane %v110, %v114
    %v117 = vlaneseq
    %v118 = vand.u32 %v117, 127
    %s119 = sld [smem:[#allocation3]]
    %p120 = scmp.eq.s32.totalorder %s119, 1
    // Predicated region
    $region50: #{tpu_custom_call.1} parent=1 // pred_check
      %p121 = pneg %p120
    $region51: #{tpu_custom_call.1} parent=1 // pred_check_branch
      %123 = sbr.rel (%p121) target = $region53
    $region52: #{tpu_custom_call.1} parent=1 // pred_region
      %vm124 = vcmp.eq.f32.partialorder 0.0, 0.0
      %v125 = vsel %vm124, %v118, 128
      %v126 = vand.u32 %v125, 65535
      %v127 = vshra.s32 %v125, 16
      %v128 = vcvt.s32.f32 %v126
      %v129 = vcvt.s32.f32 %v127
      %130 = vmin.xlane.f32.xlu0 %v129
      %v131 = vpop.xlane.xlu0 %130
      %vm132 = vcmp.eq.f32.partialorder %v129, %v131
      %v133 = vsel %vm132, %v128, inf
      %134 = vmin.xlane.f32.xlu0 %v133
      %v135 = vpop.xlane.xlu0 %134
      %v136 = vcvt.f32.s32 %v135
      %v137 = vcvt.f32.s32 %v131
      %v138 = vshll.u32 %v137, 16
      %v139 = vadd.s32 %v138, %v136
      %vm140 = vcmp.eq.s32.totalorder %v118, %v139
      %v141 = vsel %vm140, 1, 0
      %v142 = vcvt.s32.f32 %v141
      %v143 = vld [vmem:[#allocation8] sm:$0xff]
      %v144 = vld [vmem:[#allocation8 + $0x8] sm:$0xff]
      %v145 = vld [vmem:[#allocation8 + $0x10] sm:$0xff]
      %v146 = vld [vmem:[#allocation8 + $0x18] sm:$0xff]
      %v147 = vld [vmem:[#allocation8 + $0x20] sm:$0xff]
      %v148 = vld [vmem:[#allocation8 + $0x28] sm:$0xff]
      %v149 = vld [vmem:[#allocation8 + $0x30] sm:$0xff]
      %v150 = vld [vmem:[#allocation8 + $0x38] sm:$0xff]
      %v151 = vld [vmem:[#allocation8 + $0x40] sm:$0xff]
      %v152 = vld [vmem:[#allocation8 + $0x48] sm:$0xff]
      %v153 = vld [vmem:[#allocation8 + $0x50] sm:$0xff]
      %v154 = vld [vmem:[#allocation8 + $0x58] sm:$0xff]
      %v155 = vld [vmem:[#allocation8 + $0x60] sm:$0xff]
      %v156 = vld [vmem:[#allocation8 + $0x68] sm:$0xff]
      %v157 = vld [vmem:[#allocation8 + $0x70] sm:$0xff]
      %v158 = vld [vmem:[#allocation8 + $0x78] sm:$0xff]
      %v159 = vld [vmem:[#allocation8 + $0x80] sm:$0xff]
      %v160 = vld [vmem:[#allocation8 + $0x88] sm:$0xff]
      %v161 = vld [vmem:[#allocation8 + $0x90] sm:$0xff]
      %v162 = vld [vmem:[#allocation8 + $0x98] sm:$0xff]
      %v163 = vld [vmem:[#allocation8 + $0xa0] sm:$0xff]
      %v164 = vld [vmem:[#allocation8 + $0xa8] sm:$0xff]
      %v165 = vld [vmem:[#allocation8 + $0xb0] sm:$0xff]
      %v166 = vld [vmem:[#allocation8 + $0xb8] sm:$0xff]
      %v167 = vld [vmem:[#allocation8 + $0xc0] sm:$0xff]
      %v168 = vld [vmem:[#allocation8 + $0xc8] sm:$0xff]
      %v169 = vld [vmem:[#allocation8 + $0xd0] sm:$0xff]
      %v170 = vld [vmem:[#allocation8 + $0xd8] sm:$0xff]
      %v171 = vld [vmem:[#allocation8 + $0xe0] sm:$0xff]
      %v172 = vld [vmem:[#allocation8 + $0xe8] sm:$0xff]
      %v173 = vld [vmem:[#allocation8 + $0xf0] sm:$0xff]
      %v174 = vld [vmem:[#allocation8 + $0xf8] sm:$0xff]
      %v175 = vld [vmem:[#allocation8 + $0x100] sm:$0xff]
      %v176 = vld [vmem:[#allocation8 + $0x108] sm:$0xff]
      %v177 = vld [vmem:[#allocation8 + $0x110] sm:$0xff]
      %v178 = vld [vmem:[#allocation8 + $0x118] sm:$0xff]
      %v179 = vld [vmem:[#allocation8 + $0x120] sm:$0xff]
      %v180 = vld [vmem:[#allocation8 + $0x128] sm:$0xff]
      %v181 = vld [vmem:[#allocation8 + $0x130] sm:$0xff]
      %v182 = vld [vmem:[#allocation8 + $0x138] sm:$0xff]
      %v183 = vld [vmem:[#allocation8 + $0x140] sm:$0xff]
      %v184 = vld [vmem:[#allocation8 + $0x148] sm:$0xff]
      %v185 = vld [vmem:[#allocation8 + $0x150] sm:$0xff]
      %v186 = vld [vmem:[#allocation8 + $0x158] sm:$0xff]
      %v187 = vld [vmem:[#allocation8 + $0x160] sm:$0xff]
      %v188 = vld [vmem:[#allocation8 + $0x168] sm:$0xff]
      %v189 = vld [vmem:[#allocation8 + $0x170] sm:$0xff]
      %v190 = vld [vmem:[#allocation8 + $0x178] sm:$0xff]
      %191 = vmatprep.subr.mxu0 %v144
      %192 = vmatpush1.msra.mxu0 %v143
      %193 = vmatprep.subr.mxu0 %v147
      %194 = vmatpush1.msra.mxu0 %v146
      %195 = vmatprep.subr.mxu0 %v150
      %196 = vmatpush1.msra.mxu0 %v149
      %197 = vmatprep.subr.mxu0 %v153
      %198 = vmatpush1.msra.mxu0 %v152
      %199 = vmatprep.subr.mxu0 %v156
      %200 = vmatpush1.msra.mxu0 %v155
      %201 = vmatprep.subr.mxu0 %v159
      %202 = vmatpush1.msra.mxu0 %v158
      %203 = vmatprep.subr.mxu0 %v162
      %204 = vmatpush1.msra.mxu0 %v161
      %205 = vmatprep.subr.mxu0 %v165
      %206 = vmatpush1.msra.mxu0 %v164
      %207 = vmatprep.subr.mxu0 %v168
      %208 = vmatpush1.msra.mxu0 %v167
      %209 = vmatprep.subr.mxu0 %v171
      %210 = vmatpush1.msra.mxu0 %v170
      %211 = vmatprep.subr.mxu0 %v174
      %212 = vmatpush1.msra.mxu0 %v173
      %213 = vmatprep.subr.mxu0 %v177
      %214 = vmatpush1.msra.mxu0 %v176
      %215 = vmatprep.subr.mxu0 %v180
      %216 = vmatpush1.msra.mxu0 %v179
      %217 = vmatprep.subr.mxu0 %v183
      %218 = vmatpush1.msra.mxu0 %v182
      %219 = vmatprep.subr.mxu0 %v186
      %220 = vmatpush1.msra.mxu0 %v185
      %221 = vmatprep.subr.mxu0 %v189
      %222 = vmatpush1.msra.mxu0 %v188
      %223 = vmatprep.subr.mxu0 0.0
      %224 = vmatpush1.msra.mxu0 0.0
      %225 = vmatprep.subr.mxu0 0.0
      %226 = vmatpush1.msra.mxu0 0.0
      %227 = vmatprep.subr.mxu0 0.0
      %228 = vmatpush1.msra.mxu0 0.0
      %229 = vmatprep.subr.mxu0 0.0
      %230 = vmatpush1.msra.mxu0 0.0
      %231 = vmatprep.subr.mxu0 0.0
      %232 = vmatpush1.msra.mxu0 0.0
      %233 = vmatprep.subr.mxu0 0.0
      %234 = vmatpush1.msra.mxu0 0.0
      %235 = vmatprep.subr.mxu0 0.0
      %236 = vmatpush1.msra.mxu0 0.0
      %237 = vmatprep.subr.mxu0 0.0
      %238 = vmatpush1.msra.mxu0 0.0
      %239 = vmatprep.subr.mxu0 0.0
      %240 = vmatpush1.msra.mxu0 0.0
      %241 = vmatprep.subr.mxu0 0.0
      %242 = vmatpush1.msra.mxu0 0.0
      %243 = vmatprep.subr.mxu0 0.0
      %244 = vmatpush1.msra.mxu0 0.0
      %245 = vmatprep.subr.mxu0 0.0
      %246 = vmatpush1.msra.mxu0 0.0
      %247 = vmatprep.subr.mxu0 0.0
      %248 = vmatpush1.msra.mxu0 0.0
      %249 = vmatprep.subr.mxu0 0.0
      %250 = vmatpush1.msra.mxu0 0.0
      %251 = vmatprep.subr.mxu0 0.0
      %252 = vmatpush1.msra.mxu0 0.0
      %253 = vmatprep.subr.mxu0 0.0
      %254 = vmatpush1.msra.mxu0 0.0
      %255 = vmatprep.mubr.f32.mxu0 0.0
      %256 = vmatmul.mubr.f32.gmra.mrb[0].mxu0 %v142
      %v257 = vpop.f32.mrb[0].mxu0
      %v258 = vadd.f32 0.0, %v257
      %v259 = vpop.f32.mrb[0].mxu0
      %v260 = vadd.f32 0.0, %v259
      %261 = vdwg.mxu0
      %262 = vmatprep.subr.mxu0 0.0
      %263 = vmatpush1.msra.mxu0 %v145
      %264 = vmatprep.subr.mxu0 0.0
      %265 = vmatpush1.msra.mxu0 %v148
      %266 = vmatprep.subr.mxu0 0.0
      %267 = vmatpush1.msra.mxu0 %v151
      %268 = vmatprep.subr.mxu0 0.0
      %269 = vmatpush1.msra.mxu0 %v154
      %270 = vmatprep.subr.mxu0 0.0
      %271 = vmatpush1.msra.mxu0 %v157
      %272 = vmatprep.subr.mxu0 0.0
      %273 = vmatpush1.msra.mxu0 %v160
      %274 = vmatprep.subr.mxu0 0.0
      %275 = vmatpush1.msra.mxu0 %v163
      %276 = vmatprep.subr.mxu0 0.0
      %277 = vmatpush1.msra.mxu0 %v166
      %278 = vmatprep.subr.mxu0 0.0
      %279 = vmatpush1.msra.mxu0 %v169
      %280 = vmatprep.subr.mxu0 0.0
      %281 = vmatpush1.msra.mxu0 %v172
      %282 = vmatprep.subr.mxu0 0.0
      %283 = vmatpush1.msra.mxu0 %v175
      %284 = vmatprep.subr.mxu0 0.0
      %285 = vmatpush1.msra.mxu0 %v178
      %286 = vmatprep.subr.mxu0 0.0
      %287 = vmatpush1.msra.mxu0 %v181
      %288 = vmatprep.subr.mxu0 0.0
      %289 = vmatpush1.msra.mxu0 %v184
      %290 = vmatprep.subr.mxu0 0.0
      %291 = vmatpush1.msra.mxu0 %v187
      %292 = vmatprep.subr.mxu0 0.0
      %293 = vmatpush1.msra.mxu0 %v190
      %294 = vmatprep.subr.mxu0 0.0
      %295 = vmatpush1.msra.mxu0 0.0
      %296 = vmatprep.subr.mxu0 0.0
      %297 = vmatpush1.msra.mxu0 0.0
      %298 = vmatprep.subr.mxu0 0.0
      %299 = vmatpush1.msra.mxu0 0.0
      %300 = vmatprep.subr.mxu0 0.0
      %301 = vmatpush1.msra.mxu0 0.0
      %302 = vmatprep.subr.mxu0 0.0
      %303 = vmatpush1.msra.mxu0 0.0
      %304 = vmatprep.subr.mxu0 0.0
      %305 = vmatpush1.msra.mxu0 0.0
      %306 = vmatprep.subr.mxu0 0.0
      %307 = vmatpush1.msra.mxu0 0.0
      %308 = vmatprep.subr.mxu0 0.0
      %309 = vmatpush1.msra.mxu0 0.0
      %310 = vmatprep.subr.mxu0 0.0
      %311 = vmatpush1.msra.mxu0 0.0
      %312 = vmatprep.subr.mxu0 0.0
      %313 = vmatpush1.msra.mxu0 0.0
      %314 = vmatprep.subr.mxu0 0.0
      %315 = vmatpush1.msra.mxu0 0.0
      %316 = vmatprep.subr.mxu0 0.0
      %317 = vmatpush1.msra.mxu0 0.0
      %318 = vmatprep.subr.mxu0 0.0
      %319 = vmatpush1.msra.mxu0 0.0
      %320 = vmatprep.subr.mxu0 0.0
      %321 = vmatpush1.msra.mxu0 0.0
      %322 = vmatprep.subr.mxu0 0.0
      %323 = vmatpush1.msra.mxu0 0.0
      %324 = vmatprep.subr.mxu0 0.0
      %325 = vmatpush1.msra.mxu0 0.0
      %326 = vmatprep.mubr.f32.mxu0 0.0
      %327 = vmatmul.mubr.f32.gmra.mrb[0].mxu0 %v142
      %v328 = vpop.f32.mrb[0].mxu0
      %v329 = vadd.f32 0.0, %v328
      %v330 = vpop.f32.mrb[0].mxu0
      %331 = vdwg.mxu0
      %332 = vst [vmem:[#allocation2] sm:$0xff] %v258
      %333 = vst [vmem:[#allocation2 + $0x8] sm:$0xff] %v260
      %334 = vst [vmem:[#allocation2 + $0x10] sm:$0xff] %v329
    $region53: #{tpu_custom_call.1} parent=1 // pred_fallthru
      _
    %p335 = scmp.eq.s32.totalorder %s119, 0
    // Predicated region
    $region54: #{tpu_custom_call.1} parent=1 // pred_check
      %p336 = pneg %p335
    $region55: #{tpu_custom_call.1} parent=1 // pred_check_branch
      %338 = sbr.rel (%p336) target = $region57
    $region56: #{tpu_custom_call.1} parent=1 // pred_region
      %v339 = vld [vmem:[#allocation7] sm:$0xff]
      %v340 = vld [vmem:[#allocation7 + $0x8] sm:$0xff]
      %v341 = vld [vmem:[#allocation7 + $0x10] sm:$0xff]
      %342 = vst [vmem:[#allocation2] sm:$0xff] %v339
      %343 = vst [vmem:[#allocation2 + $0x8] sm:$0xff] %v340
      %344 = vst [vmem:[#allocation2 + $0x10] sm:$0xff] %v341
    $region57: #{tpu_custom_call.1} parent=1 // pred_fallthru
      _
    %v345 = vld [vmem:[#allocation2] sm:$0xff]
    %v346 = vld [vmem:[#allocation2 + $0x8] sm:$0xff]
    %v347 = vld [vmem:[#allocation2 + $0x10] sm:$0xff]
    %v348 = vld [vmem:[#allocation10] sm:$0xff]
    %v349 = vld [vmem:[#allocation10 + $0x8] sm:$0xff]
    %v350 = vld [vmem:[#allocation10 + $0x10] sm:$0xff]
    %v351 = vld [vmem:[#allocation10 + $0x18] sm:$0xff]
    %v352 = vld [vmem:[#allocation10 + $0x20] sm:$0xff]
    %v353 = vld [vmem:[#allocation10 + $0x28] sm:$0xff]
    %v354 = vld [vmem:[#allocation10 + $0x30] sm:$0xff]
    %v355 = vld [vmem:[#allocation10 + $0x38] sm:$0xff]
    %v356 = vld [vmem:[#allocation10 + $0x40] sm:$0xff]
    %v357 = vld [vmem:[#allocation10 + $0x48] sm:$0xff]
    %v358 = vld [vmem:[#allocation10 + $0x50] sm:$0xff]
    %v359 = vld [vmem:[#allocation10 + $0x58] sm:$0xff]
    %v360 = vld [vmem:[#allocation10 + $0x60] sm:$0xff]
    %v361 = vld [vmem:[#allocation10 + $0x68] sm:$0xff]
    %v362 = vld [vmem:[#allocation10 + $0x70] sm:$0xff]
    %v363 = vld [vmem:[#allocation10 + $0x78] sm:$0xff]
    %v364 = vld [vmem:[#allocation10 + $0x80] sm:$0xff]
    %v365 = vld [vmem:[#allocation10 + $0x88] sm:$0xff]
    %v366 = vld [vmem:[#allocation10 + $0x90] sm:$0xff]
    %v367 = vld [vmem:[#allocation10 + $0x98] sm:$0xff]
    %v368 = vld [vmem:[#allocation10 + $0xa0] sm:$0xff]
    %v369 = vld [vmem:[#allocation10 + $0xa8] sm:$0xff]
    %v370 = vld [vmem:[#allocation10 + $0xb0] sm:$0xff]
    %v371 = vld [vmem:[#allocation10 + $0xb8] sm:$0xff]
    %v372 = vld [vmem:[#allocation10 + $0xc0] sm:$0xff]
    %v373 = vld [vmem:[#allocation10 + $0xc8] sm:$0xff]
    %v374 = vld [vmem:[#allocation10 + $0xd0] sm:$0xff]
    %v375 = vld [vmem:[#allocation10 + $0xd8] sm:$0xff]
    %v376 = vld [vmem:[#allocation10 + $0xe0] sm:$0xff]
    %v377 = vld [vmem:[#allocation10 + $0xe8] sm:$0xff]
    %v378 = vld [vmem:[#allocation10 + $0xf0] sm:$0xff]
    %v379 = vld [vmem:[#allocation10 + $0xf8] sm:$0xff]
    %v380 = vld [vmem:[#allocation10 + $0x100] sm:$0xff]
    %v381 = vld [vmem:[#allocation10 + $0x108] sm:$0xff]
    %v382 = vld [vmem:[#allocation10 + $0x110] sm:$0xff]
    %v383 = vld [vmem:[#allocation10 + $0x118] sm:$0xff]
    %v384 = vld [vmem:[#allocation10 + $0x120] sm:$0xff]
    %v385 = vld [vmem:[#allocation10 + $0x128] sm:$0xff]
    %v386 = vld [vmem:[#allocation10 + $0x130] sm:$0xff]
    %v387 = vld [vmem:[#allocation10 + $0x138] sm:$0xff]
    %v388 = vld [vmem:[#allocation10 + $0x140] sm:$0xff]
    %v389 = vld [vmem:[#allocation10 + $0x148] sm:$0xff]
    %v390 = vld [vmem:[#allocation10 + $0x150] sm:$0xff]
    %v391 = vld [vmem:[#allocation10 + $0x158] sm:$0xff]
    %v392 = vld [vmem:[#allocation10 + $0x160] sm:$0xff]
    %v393 = vld [vmem:[#allocation10 + $0x168] sm:$0xff]
    %v394 = vld [vmem:[#allocation10 + $0x170] sm:$0xff]
    %v395 = vld [vmem:[#allocation10 + $0x178] sm:$0xff]
    %396 = vmatprep.subr.mxu0 %v349
    %397 = vmatpush1.msra.mxu0 %v348
    %398 = vmatprep.subr.mxu0 %v352
    %399 = vmatpush1.msra.mxu0 %v351
    %400 = vmatprep.subr.mxu0 %v355
    %401 = vmatpush1.msra.mxu0 %v354
    %402 = vmatprep.subr.mxu0 %v358
    %403 = vmatpush1.msra.mxu0 %v357
    %404 = vmatprep.subr.mxu0 %v361
    %405 = vmatpush1.msra.mxu0 %v360
    %406 = vmatprep.subr.mxu0 %v364
    %407 = vmatpush1.msra.mxu0 %v363
    %408 = vmatprep.subr.mxu0 %v367
    %409 = vmatpush1.msra.mxu0 %v366
    %410 = vmatprep.subr.mxu0 %v370
    %411 = vmatpush1.msra.mxu0 %v369
    %412 = vmatprep.subr.mxu0 %v373
    %413 = vmatpush1.msra.mxu0 %v372
    %414 = vmatprep.subr.mxu0 %v376
    %415 = vmatpush1.msra.mxu0 %v375
    %416 = vmatprep.subr.mxu0 %v379
    %417 = vmatpush1.msra.mxu0 %v378
    %418 = vmatprep.subr.mxu0 %v382
    %419 = vmatpush1.msra.mxu0 %v381
    %420 = vmatprep.subr.mxu0 %v385
    %421 = vmatpush1.msra.mxu0 %v384
    %422 = vmatprep.subr.mxu0 %v388
    %423 = vmatpush1.msra.mxu0 %v387
    %424 = vmatprep.subr.mxu0 %v391
    %425 = vmatpush1.msra.mxu0 %v390
    %426 = vmatprep.subr.mxu0 %v394
    %427 = vmatpush1.msra.mxu0 %v393
    %428 = vmatprep.subr.mxu0 0.0
    %429 = vmatpush1.msra.mxu0 0.0
    %430 = vmatprep.subr.mxu0 0.0
    %431 = vmatpush1.msra.mxu0 0.0
    %432 = vmatprep.subr.mxu0 0.0
    %433 = vmatpush1.msra.mxu0 0.0
    %434 = vmatprep.subr.mxu0 0.0
    %435 = vmatpush1.msra.mxu0 0.0
    %436 = vmatprep.subr.mxu0 0.0
    %437 = vmatpush1.msra.mxu0 0.0
    %438 = vmatprep.subr.mxu0 0.0
    %439 = vmatpush1.msra.mxu0 0.0
    %440 = vmatprep.subr.mxu0 0.0
    %441 = vmatpush1.msra.mxu0 0.0
    %442 = vmatprep.subr.mxu0 0.0
    %443 = vmatpush1.msra.mxu0 0.0
    %444 = vmatprep.subr.mxu0 0.0
    %445 = vmatpush1.msra.mxu0 0.0
    %446 = vmatprep.subr.mxu0 0.0
    %447 = vmatpush1.msra.mxu0 0.0
    %448 = vmatprep.subr.mxu0 0.0
    %449 = vmatpush1.msra.mxu0 0.0
    %450 = vmatprep.subr.mxu0 0.0
    %451 = vmatpush1.msra.mxu0 0.0
    %452 = vmatprep.subr.mxu0 0.0
    %453 = vmatpush1.msra.mxu0 0.0
    %454 = vmatprep.subr.mxu0 0.0
    %455 = vmatpush1.msra.mxu0 0.0
    %456 = vmatprep.subr.mxu0 0.0
    %457 = vmatpush1.msra.mxu0 0.0
    %458 = vmatprep.subr.mxu0 0.0
    %459 = vmatpush1.msra.mxu0 0.0
    %460 = vmatprep.mubr.f32.mxu0 0.0
    %461 = vmatmul.mubr.f32.gmra.mrb[0].mxu0 0.0
    %v462 = vpop.f32.mrb[0].mxu0
    %v463 = vadd.f32 %v98, %v462
    %v464 = vpop.f32.mrb[0].mxu0
    %v465 = vadd.f32 %v102, %v464
    %466 = vdwg.mxu0
    %467 = vmatprep.subr.mxu0 0.0
    %468 = vmatpush1.msra.mxu0 %v350
    %469 = vmatprep.subr.mxu0 0.0
    %470 = vmatpush1.msra.mxu0 %v353
    %471 = vmatprep.subr.mxu0 0.0
    %472 = vmatpush1.msra.mxu0 %v356
    %473 = vmatprep.subr.mxu0 0.0
    %474 = vmatpush1.msra.mxu0 %v359
    %475 = vmatprep.subr.mxu0 0.0
    %476 = vmatpush1.msra.mxu0 %v362
    %477 = vmatprep.subr.mxu0 0.0
    %478 = vmatpush1.msra.mxu0 %v365
    %479 = vmatprep.subr.mxu0 0.0
    %480 = vmatpush1.msra.mxu0 %v368
    %481 = vmatprep.subr.mxu0 0.0
    %482 = vmatpush1.msra.mxu0 %v371
    %483 = vmatprep.subr.mxu0 0.0
    %484 = vmatpush1.msra.mxu0 %v374
    %485 = vmatprep.subr.mxu0 0.0
    %486 = vmatpush1.msra.mxu0 %v377
    %487 = vmatprep.subr.mxu0 0.0
    %488 = vmatpush1.msra.mxu0 %v380
    %489 = vmatprep.subr.mxu0 0.0
    %490 = vmatpush1.msra.mxu0 %v383
    %491 = vmatprep.subr.mxu0 0.0
    %492 = vmatpush1.msra.mxu0 %v386
    %493 = vmatprep.subr.mxu0 0.0
    %494 = vmatpush1.msra.mxu0 %v389
    %495 = vmatprep.subr.mxu0 0.0
    %496 = vmatpush1.msra.mxu0 %v392
    %497 = vmatprep.subr.mxu0 0.0
    %498 = vmatpush1.msra.mxu0 %v395
    %499 = vmatprep.subr.mxu0 0.0
    %500 = vmatpush1.msra.mxu0 0.0
    %501 = vmatprep.subr.mxu0 0.0
    %502 = vmatpush1.msra.mxu0 0.0
    %503 = vmatprep.subr.mxu0 0.0
    %504 = vmatpush1.msra.mxu0 0.0
    %505 = vmatprep.subr.mxu0 0.0
    %506 = vmatpush1.msra.mxu0 0.0
    %507 = vmatprep.subr.mxu0 0.0
    %508 = vmatpush1.msra.mxu0 0.0
    %509 = vmatprep.subr.mxu0 0.0
    %510 = vmatpush1.msra.mxu0 0.0
    %511 = vmatprep.subr.mxu0 0.0
    %512 = vmatpush1.msra.mxu0 0.0
    %513 = vmatprep.subr.mxu0 0.0
    %514 = vmatpush1.msra.mxu0 0.0
    %515 = vmatprep.subr.mxu0 0.0
    %516 = vmatpush1.msra.mxu0 0.0
    %517 = vmatprep.subr.mxu0 0.0
    %518 = vmatpush1.msra.mxu0 0.0
    %519 = vmatprep.subr.mxu0 0.0
    %520 = vmatpush1.msra.mxu0 0.0
    %521 = vmatprep.subr.mxu0 0.0
    %522 = vmatpush1.msra.mxu0 0.0
    %523 = vmatprep.subr.mxu0 0.0
    %524 = vmatpush1.msra.mxu0 0.0
    %525 = vmatprep.subr.mxu0 0.0
    %526 = vmatpush1.msra.mxu0 0.0
    %527 = vmatprep.subr.mxu0 0.0
    %528 = vmatpush1.msra.mxu0 0.0
    %529 = vmatprep.subr.mxu0 0.0
    %530 = vmatpush1.msra.mxu0 0.0
    %531 = vmatprep.mubr.f32.mxu0 0.0
    %532 = vmatmul.mubr.f32.gmra.mrb[0].mxu0 0.0
    %v533 = vpop.f32.mrb[0].mxu0
    %v534 = vadd.f32 %v106, %v533
    %v535 = vpop.f32.mrb[0].mxu0
    %536 = vdwg.mxu0
    %v537 = vadd.f32 %v345, %v463
    %v538 = vxor.u32 %v537, 2147483648
    %v539 = vmul.f32 %v538, 1.442695
    %v540 = vpow.pop %v539
    %v541 = vadd.f32 %v540, 1.0
    %v542 = vrcp.pop %v541
    %v543 = vmul.f32 1.0, %v542
    %v544 = vadd.f32 %v346, %v465
    %v545 = vxor.u32 %v544, 2147483648
    %v546 = vmul.f32 %v545, 1.442695
    %v547 = vpow.pop %v546
    %v548 = vadd.f32 %v547, 1.0
    %v549 = vrcp.pop %v548
    %v550 = vmul.f32 1.0, %v549
    %v551 = vmul.f32 %v543, %v534
    %v552 = vadd.f32 %v347, %v551
    %v553 = vtanh.pop %v552
    %v554 = vsub.f32 1.0, %v550
    %v555 = vmul.f32 %v554, %v553
    %v556 = vmul.f32 %v550, 0.0
    %v557 = vadd.f32 %v555, %v556
    %v558 = vld [vmem:[#allocation11] sm:$0xff]
    %v559 = vld [vmem:[#allocation11 + $0x8] sm:$0xff]
    %v560 = vld [vmem:[#allocation11 + $0x10] sm:$0xff]
    %v561 = vld [vmem:[#allocation11 + $0x18] sm:$0xff]
    %v562 = vld [vmem:[#allocation11 + $0x20] sm:$0xff]
    %v563 = vld [vmem:[#allocation11 + $0x28] sm:$0xff]
    %v564 = vld [vmem:[#allocation11 + $0x30] sm:$0xff]
    %v565 = vld [vmem:[#allocation11 + $0x38] sm:$0xff]
    %v566 = vld [vmem:[#allocation11 + $0x40] sm:$0xff]
    %v567 = vld [vmem:[#allocation11 + $0x48] sm:$0xff]
    %v568 = vld [vmem:[#allocation11 + $0x50] sm:$0xff]
    %v569 = vld [vmem:[#allocation11 + $0x58] sm:$0xff]
    %v570 = vld [vmem:[#allocation11 + $0x60] sm:$0xff]
    %v571 = vld [vmem:[#allocation11 + $0x68] sm:$0xff]
    %v572 = vld [vmem:[#allocation11 + $0x70] sm:$0xff]
    %v573 = vld [vmem:[#allocation11 + $0x78] sm:$0xff]
    %574 = vmatprep.subr.mxu0 0.0
    %575 = vmatpush1.msra.mxu0 %v558
    %576 = vmatprep.subr.mxu0 0.0
    %577 = vmatpush1.msra.mxu0 %v559
    %578 = vmatprep.subr.mxu0 0.0
    %579 = vmatpush1.msra.mxu0 %v560
    %580 = vmatprep.subr.mxu0 0.0
    %581 = vmatpush1.msra.mxu0 %v561
    %582 = vmatprep.subr.mxu0 0.0
    %583 = vmatpush1.msra.mxu0 %v562
    %584 = vmatprep.subr.mxu0 0.0
    %585 = vmatpush1.msra.mxu0 %v563
    %586 = vmatprep.subr.mxu0 0.0
    %587 = vmatpush1.msra.mxu0 %v564
    %588 = vmatprep.subr.mxu0 0.0
    %589 = vmatpush1.msra.mxu0 %v565
    %590 = vmatprep.subr.mxu0 0.0
    %591 = vmatpush1.msra.mxu0 %v566
    %592 = vmatprep.subr.mxu0 0.0
    %593 = vmatpush1.msra.mxu0 %v567
    %594 = vmatprep.subr.mxu0 0.0
    %595 = vmatpush1.msra.mxu0 %v568
    %596 = vmatprep.subr.mxu0 0.0
    %597 = vmatpush1.msra.mxu0 %v569
    %598 = vmatprep.subr.mxu0 0.0
    %599 = vmatpush1.msra.mxu0 %v570
    %600 = vmatprep.subr.mxu0 0.0
    %601 = vmatpush1.msra.mxu0 %v571
    %602 = vmatprep.subr.mxu0 0.0
    %603 = vmatpush1.msra.mxu0 %v572
    %604 = vmatprep.subr.mxu0 0.0
    %605 = vmatpush1.msra.mxu0 %v573
    %606 = vmatprep.subr.mxu0 0.0
    %607 = vmatpush1.msra.mxu0 0.0
    %608 = vmatprep.subr.mxu0 0.0
    %609 = vmatpush1.msra.mxu0 0.0
    %610 = vmatprep.subr.mxu0 0.0
    %611 = vmatpush1.msra.mxu0 0.0
    %612 = vmatprep.subr.mxu0 0.0
    %613 = vmatpush1.msra.mxu0 0.0
    %614 = vmatprep.subr.mxu0 0.0
    %615 = vmatpush1.msra.mxu0 0.0
    %616 = vmatprep.subr.mxu0 0.0
    %617 = vmatpush1.msra.mxu0 0.0
    %618 = vmatprep.subr.mxu0 0.0
    %619 = vmatpush1.msra.mxu0 0.0
    %620 = vmatprep.subr.mxu0 0.0
    %621 = vmatpush1.msra.mxu0 0.0
    %622 = vmatprep.subr.mxu0 0.0
    %623 = vmatpush1.msra.mxu0 0.0
    %624 = vmatprep.subr.mxu0 0.0
    %625 = vmatpush1.msra.mxu0 0.0
    %626 = vmatprep.subr.mxu0 0.0
    %627 = vmatpush1.msra.mxu0 0.0
    %628 = vmatprep.subr.mxu0 0.0
    %629 = vmatpush1.msra.mxu0 0.0
    %630 = vmatprep.subr.mxu0 0.0
    %631 = vmatpush1.msra.mxu0 0.0
    %632 = vmatprep.subr.mxu0 0.0
    %633 = vmatpush1.msra.mxu0 0.0
    %634 = vmatprep.subr.mxu0 0.0
    %635 = vmatpush1.msra.mxu0 0.0
    %636 = vmatprep.subr.mxu0 0.0
    %637 = vmatpush1.msra.mxu0 0.0
    %638 = vmatprep.mubr.f32.mxu0 0.0
    %639 = vmatmul.mubr.f32.gmra.mrb[0].mxu0 %v557
    %v640 = vpop.f32.mrb[0].mxu0
    %v641 = vadd.f32 %v115, %v640
    %v642 = vpop.f32.mrb[0].mxu0
    %643 = vdwg.mxu0
    %644 = vst [vmem:[#allocation13] sm:$0xff] %v641
    %s645 = sld [smem:[#allocation3 + $0x1]]
    %p646 = scmp.eq.s32.totalorder %s645, 1
    // Predicated region
    $region58: #{tpu_custom_call.1} parent=1 // pred_check
      %p647 = pneg %p646
    $region59: #{tpu_custom_call.1} parent=1 // pred_check_branch
      %649 = sbr.rel (%p647) target = $region61
    $region60: #{tpu_custom_call.1} parent=1 // pred_region
      %650 = vmax.xlane.f32.xlu0 %v641
      %v651 = vpop.xlane.xlu0 %650
      %vm652 = vcmp.eq.f32.partialorder %v641, %v651
      %v653 = vsel %vm652, %v118, 128
      %v654 = vand.u32 %v653, 65535
      %v655 = vshra.s32 %v653, 16
      %v656 = vcvt.s32.f32 %v654
      %v657 = vcvt.s32.f32 %v655
      %658 = vmin.xlane.f32.xlu0 %v657
      %v659 = vpop.xlane.xlu0 %658
      %vm660 = vcmp.eq.f32.partialorder %v657, %v659
      %v661 = vsel %vm660, %v656, inf
      %662 = vmin.xlane.f32.xlu0 %v661
      %v663 = vpop.xlane.xlu0 %662
      %v664 = vcvt.f32.s32 %v663
      %v665 = vcvt.f32.s32 %v659
      %v666 = vshll.u32 %v665, 16
      %v667 = vadd.s32 %v666, %v664
      %vm668 = vcmp.eq.s32.totalorder %v118, %v667
      %v669 = vsel %vm668, 1, 0
      %v670 = vcvt.s32.f32 %v669
      %v671 = vld [vmem:[#allocation8] sm:$0xff]
      %v672 = vld [vmem:[#allocation8 + $0x8] sm:$0xff]
      %v673 = vld [vmem:[#allocation8 + $0x10] sm:$0xff]
      %v674 = vld [vmem:[#allocation8 + $0x18] sm:$0xff]
      %v675 = vld [vmem:[#allocation8 + $0x20] sm:$0xff]
      %v676 = vld [vmem:[#allocation8 + $0x28] sm:$0xff]
      %v677 = vld [vmem:[#allocation8 + $0x30] sm:$0xff]
      %v678 = vld [vmem:[#allocation8 + $0x38] sm:$0xff]
      %v679 = vld [vmem:[#allocation8 + $0x40] sm:$0xff]
      %v680 = vld [vmem:[#allocation8 + $0x48] sm:$0xff]
      %v681 = vld [vmem:[#allocation8 + $0x50] sm:$0xff]
      %v682 = vld [vmem:[#allocation8 + $0x58] sm:$0xff]
      %v683 = vld [vmem:[#allocation8 + $0x60] sm:$0xff]
      %v684 = vld [vmem:[#allocation8 + $0x68] sm:$0xff]
      %v685 = vld [vmem:[#allocation8 + $0x70] sm:$0xff]
      %v686 = vld [vmem:[#allocation8 + $0x78] sm:$0xff]
      %v687 = vld [vmem:[#allocation8 + $0x80] sm:$0xff]
      %v688 = vld [vmem:[#allocation8 + $0x88] sm:$0xff]
      %v689 = vld [vmem:[#allocation8 + $0x90] sm:$0xff]
      %v690 = vld [vmem:[#allocation8 + $0x98] sm:$0xff]
      %v691 = vld [vmem:[#allocation8 + $0xa0] sm:$0xff]
      %v692 = vld [vmem:[#allocation8 + $0xa8] sm:$0xff]
      %v693 = vld [vmem:[#allocation8 + $0xb0] sm:$0xff]
      %v694 = vld [vmem:[#allocation8 + $0xb8] sm:$0xff]
      %v695 = vld [vmem:[#allocation8 + $0xc0] sm:$0xff]
      %v696 = vld [vmem:[#allocation8 + $0xc8] sm:$0xff]
      %v697 = vld [vmem:[#allocation8 + $0xd0] sm:$0xff]
      %v698 = vld [vmem:[#allocation8 + $0xd8] sm:$0xff]
      %v699 = vld [vmem:[#allocation8 + $0xe0] sm:$0xff]
      %v700 = vld [vmem:[#allocation8 + $0xe8] sm:$0xff]
      %v701 = vld [vmem:[#allocation8 + $0xf0] sm:$0xff]
      %v702 = vld [vmem:[#allocation8 + $0xf8] sm:$0xff]
      %v703 = vld [vmem:[#allocation8 + $0x100] sm:$0xff]
      %v704 = vld [vmem:[#allocation8 + $0x108] sm:$0xff]
      %v705 = vld [vmem:[#allocation8 + $0x110] sm:$0xff]
      %v706 = vld [vmem:[#allocation8 + $0x118] sm:$0xff]
      %v707 = vld [vmem:[#allocation8 + $0x120] sm:$0xff]
      %v708 = vld [vmem:[#allocation8 + $0x128] sm:$0xff]
      %v709 = vld [vmem:[#allocation8 + $0x130] sm:$0xff]
      %v710 = vld [vmem:[#allocation8 + $0x138] sm:$0xff]
      %v711 = vld [vmem:[#allocation8 + $0x140] sm:$0xff]
      %v712 = vld [vmem:[#allocation8 + $0x148] sm:$0xff]
      %v713 = vld [vmem:[#allocation8 + $0x150] sm:$0xff]
      %v714 = vld [vmem:[#allocation8 + $0x158] sm:$0xff]
      %v715 = vld [vmem:[#allocation8 + $0x160] sm:$0xff]
      %v716 = vld [vmem:[#allocation8 + $0x168] sm:$0xff]
      %v717 = vld [vmem:[#allocation8 + $0x170] sm:$0xff]
      %v718 = vld [vmem:[#allocation8 + $0x178] sm:$0xff]
      %719 = vmatprep.subr.mxu0 %v672
      %720 = vmatpush1.msra.mxu0 %v671
      %721 = vmatprep.subr.mxu0 %v675
      %722 = vmatpush1.msra.mxu0 %v674
      %723 = vmatprep.subr.mxu0 %v678
      %724 = vmatpush1.msra.mxu0 %v677
      %725 = vmatprep.subr.mxu0 %v681
      %726 = vmatpush1.msra.mxu0 %v680
      %727 = vmatprep.subr.mxu0 %v684
      %728 = vmatpush1.msra.mxu0 %v683
      %729 = vmatprep.subr.mxu0 %v687
      %730 = vmatpush1.msra.mxu0 %v686
      %731 = vmatprep.subr.mxu0 %v690
      %732 = vmatpush1.msra.mxu0 %v689
      %733 = vmatprep.subr.mxu0 %v693
      %734 = vmatpush1.msra.mxu0 %v692
      %735 = vmatprep.subr.mxu0 %v696
      %736 = vmatpush1.msra.mxu0 %v695
      %737 = vmatprep.subr.mxu0 %v699
      %738 = vmatpush1.msra.mxu0 %v698
      %739 = vmatprep.subr.mxu0 %v702
      %740 = vmatpush1.msra.mxu0 %v701
      %741 = vmatprep.subr.mxu0 %v705
      %742 = vmatpush1.msra.mxu0 %v704
      %743 = vmatprep.subr.mxu0 %v708
      %744 = vmatpush1.msra.mxu0 %v707
      %745 = vmatprep.subr.mxu0 %v711
      %746 = vmatpush1.msra.mxu0 %v710
      %747 = vmatprep.subr.mxu0 %v714
      %748 = vmatpush1.msra.mxu0 %v713
      %749 = vmatprep.subr.mxu0 %v717
      %750 = vmatpush1.msra.mxu0 %v716
      %751 = vmatprep.subr.mxu0 0.0
      %752 = vmatpush1.msra.mxu0 0.0
      %753 = vmatprep.subr.mxu0 0.0
      %754 = vmatpush1.msra.mxu0 0.0
      %755 = vmatprep.subr.mxu0 0.0
      %756 = vmatpush1.msra.mxu0 0.0
      %757 = vmatprep.subr.mxu0 0.0
      %758 = vmatpush1.msra.mxu0 0.0
      %759 = vmatprep.subr.mxu0 0.0
      %760 = vmatpush1.msra.mxu0 0.0
      %761 = vmatprep.subr.mxu0 0.0
      %762 = vmatpush1.msra.mxu0 0.0
      %763 = vmatprep.subr.mxu0 0.0
      %764 = vmatpush1.msra.mxu0 0.0
      %765 = vmatprep.subr.mxu0 0.0
      %766 = vmatpush1.msra.mxu0 0.0
      %767 = vmatprep.subr.mxu0 0.0
      %768 = vmatpush1.msra.mxu0 0.0
      %769 = vmatprep.subr.mxu0 0.0
      %770 = vmatpush1.msra.mxu0 0.0
      %771 = vmatprep.subr.mxu0 0.0
      %772 = vmatpush1.msra.mxu0 0.0
      %773 = vmatprep.subr.mxu0 0.0
      %774 = vmatpush1.msra.mxu0 0.0
      %775 = vmatprep.subr.mxu0 0.0
      %776 = vmatpush1.msra.mxu0 0.0
      %777 = vmatprep.subr.mxu0 0.0
      %778 = vmatpush1.msra.mxu0 0.0
      %779 = vmatprep.subr.mxu0 0.0
      %780 = vmatpush1.msra.mxu0 0.0
      %781 = vmatprep.subr.mxu0 0.0
      %782 = vmatpush1.msra.mxu0 0.0
      %783 = vmatprep.mubr.f32.mxu0 0.0
      %784 = vmatmul.mubr.f32.gmra.mrb[0].mxu0 %v670
      %v785 = vpop.f32.mrb[0].mxu0
      %v786 = vadd.f32 0.0, %v785
      %v787 = vpop.f32.mrb[0].mxu0
      %v788 = vadd.f32 0.0, %v787
      %789 = vdwg.mxu0
      %790 = vmatprep.subr.mxu0 0.0
      %791 = vmatpush1.msra.mxu0 %v673
      %792 = vmatprep.subr.mxu0 0.0
      %793 = vmatpush1.msra.mxu0 %v676
      %794 = vmatprep.subr.mxu0 0.0
      %795 = vmatpush1.msra.mxu0 %v679
      %796 = vmatprep.subr.mxu0 0.0
      %797 = vmatpush1.msra.mxu0 %v682
      %798 = vmatprep.subr.mxu0 0.0
      %799 = vmatpush1.msra.mxu0 %v685
      %800 = vmatprep.subr.mxu0 0.0
      %801 = vmatpush1.msra.mxu0 %v688
      %802 = vmatprep.subr.mxu0 0.0
      %803 = vmatpush1.msra.mxu0 %v691
      %804 = vmatprep.subr.mxu0 0.0
      %805 = vmatpush1.msra.mxu0 %v694
      %806 = vmatprep.subr.mxu0 0.0
      %807 = vmatpush1.msra.mxu0 %v697
      %808 = vmatprep.subr.mxu0 0.0
      %809 = vmatpush1.msra.mxu0 %v700
      %810 = vmatprep.subr.mxu0 0.0
      %811 = vmatpush1.msra.mxu0 %v703
      %812 = vmatprep.subr.mxu0 0.0
      %813 = vmatpush1.msra.mxu0 %v706
      %814 = vmatprep.subr.mxu0 0.0
      %815 = vmatpush1.msra.mxu0 %v709
      %816 = vmatprep.subr.mxu0 0.0
      %817 = vmatpush1.msra.mxu0 %v712
      %818 = vmatprep.subr.mxu0 0.0
      %819 = vmatpush1.msra.mxu0 %v715
      %820 = vmatprep.subr.mxu0 0.0
      %821 = vmatpush1.msra.mxu0 %v718
      %822 = vmatprep.subr.mxu0 0.0
      %823 = vmatpush1.msra.mxu0 0.0
      %824 = vmatprep.subr.mxu0 0.0
      %825 = vmatpush1.msra.mxu0 0.0
      %826 = vmatprep.subr.mxu0 0.0
      %827 = vmatpush1.msra.mxu0 0.0
      %828 = vmatprep.subr.mxu0 0.0
      %829 = vmatpush1.msra.mxu0 0.0
      %830 = vmatprep.subr.mxu0 0.0
      %831 = vmatpush1.msra.mxu0 0.0
      %832 = vmatprep.subr.mxu0 0.0
      %833 = vmatpush1.msra.mxu0 0.0
      %834 = vmatprep.subr.mxu0 0.0
      %835 = vmatpush1.msra.mxu0 0.0
      %836 = vmatprep.subr.mxu0 0.0
      %837 = vmatpush1.msra.mxu0 0.0
      %838 = vmatprep.subr.mxu0 0.0
      %839 = vmatpush1.msra.mxu0 0.0
      %840 = vmatprep.subr.mxu0 0.0
      %841 = vmatpush1.msra.mxu0 0.0
      %842 = vmatprep.subr.mxu0 0.0
      %843 = vmatpush1.msra.mxu0 0.0
      %844 = vmatprep.subr.mxu0 0.0
      %845 = vmatpush1.msra.mxu0 0.0
      %846 = vmatprep.subr.mxu0 0.0
      %847 = vmatpush1.msra.mxu0 0.0
      %848 = vmatprep.subr.mxu0 0.0
      %849 = vmatpush1.msra.mxu0 0.0
      %850 = vmatprep.subr.mxu0 0.0
      %851 = vmatpush1.msra.mxu0 0.0
      %852 = vmatprep.subr.mxu0 0.0
      %853 = vmatpush1.msra.mxu0 0.0
      %854 = vmatprep.mubr.f32.mxu0 0.0
      %855 = vmatmul.mubr.f32.gmra.mrb[0].mxu0 %v670
      %v856 = vpop.f32.mrb[0].mxu0
      %v857 = vadd.f32 0.0, %v856
      %v858 = vpop.f32.mrb[0].mxu0
      %859 = vdwg.mxu0
      %860 = vst [vmem:[#allocation2] sm:$0xff] %v786
      %861 = vst [vmem:[#allocation2 + $0x8] sm:$0xff] %v788
      %862 = vst [vmem:[#allocation2 + $0x10] sm:$0xff] %v857
    $region61: #{tpu_custom_call.1} parent=1 // pred_fallthru
      _
    %p863 = scmp.eq.s32.totalorder %s645, 0
    // Predicated region
    $region62: #{tpu_custom_call.1} parent=1 // pred_check
      %p864 = pneg %p863
    $region63: #{tpu_custom_call.1} parent=1 // pred_check_branch
      %866 = sbr.rel (%p864) target = $region65
    $region64: #{tpu_custom_call.1} parent=1 // pred_region
      %s867 = scalar_lea.vmem [#allocation7], 24
      %v868 = vld [vmem:[%s867] sm:$0xff]
      %v869 = vld [vmem:[%s867 + $0x8] sm:$0xff]
      %v870 = vld [vmem:[%s867 + $0x10] sm:$0xff]
      %871 = vst [vmem:[#allocation2] sm:$0xff] %v868
      %872 = vst [vmem:[#allocation2 + $0x8] sm:$0xff] %v869
      %873 = vst [vmem:[#allocation2 + $0x10] sm:$0xff] %v870
    $region65: #{tpu_custom_call.1} parent=1 // pred_fallthru
      _
    %v874 = vld [vmem:[#allocation2] sm:$0xff]
    %v875 = vld [vmem:[#allocation2 + $0x8] sm:$0xff]
    %v876 = vld [vmem:[#allocation2 + $0x10] sm:$0xff]
    %v877 = vld [vmem:[#allocation10] sm:$0xff]
    %v878 = vld [vmem:[#allocation10 + $0x8] sm:$0xff]
    %v879 = vld [vmem:[#allocation10 + $0x10] sm:$0xff]
    %v880 = vld [vmem:[#allocation10 + $0x18] sm:$0xff]
    %v881 = vld [vmem:[#allocation10 + $0x20] sm:$0xff]
    %v882 = vld [vmem:[#allocation10 + $0x28] sm:$0xff]
    %v883 = vld [vmem:[#allocation10 + $0x30] sm:$0xff]
    %v884 = vld [vmem:[#allocation10 + $0x38] sm:$0xff]
    %v885 = vld [vmem:[#allocation10 + $0x40] sm:$0xff]
    %v886 = vld [vmem:[#allocation10 + $0x48] sm:$0xff]
    %v887 = vld [vmem:[#allocation10 + $0x50] sm:$0xff]
    %v888 = vld [vmem:[#allocation10 + $0x58] sm:$0xff]
    %v889 = vld [vmem:[#allocation10 + $0x60] sm:$0xff]
    %v890 = vld [vmem:[#allocation10 + $0x68] sm:$0xff]
    %v891 = vld [vmem:[#allocation10 + $0x70] sm:$0xff]
    %v892 = vld [vmem:[#allocation10 + $0x78] sm:$0xff]
    %v893 = vld [vmem:[#allocation10 + $0x80] sm:$0xff]
    %v894 = vld [vmem:[#allocation10 + $0x88] sm:$0xff]
    %v895 = vld [vmem:[#allocation10 + $0x90] sm:$0xff]
    %v896 = vld [vmem:[#allocation10 + $0x98] sm:$0xff]
    %v897 = vld [vmem:[#allocation10 + $0xa0] sm:$0xff]
    %v898 = vld [vmem:[#allocation10 + $0xa8] sm:$0xff]
    %v899 = vld [vmem:[#allocation10 + $0xb0] sm:$0xff]
    %v900 = vld [vmem:[#allocation10 + $0xb8] sm:$0xff]
    %v901 = vld [vmem:[#allocation10 + $0xc0] sm:$0xff]
    %v902 = vld [vmem:[#allocation10 + $0xc8] sm:$0xff]
    %v903 = vld [vmem:[#allocation10 + $0xd0] sm:$0xff]
    %v904 = vld [vmem:[#allocation10 + $0xd8] sm:$0xff]
    %v905 = vld [vmem:[#allocation10 + $0xe0] sm:$0xff]
    %v906 = vld [vmem:[#allocation10 + $0xe8] sm:$0xff]
    %v907 = vld [vmem:[#allocation10 + $0xf0] sm:$0xff]
    %v908 = vld [vmem:[#allocation10 + $0xf8] sm:$0xff]
    %v909 = vld [vmem:[#allocation10 + $0x100] sm:$0xff]
    %v910 = vld [vmem:[#allocation10 + $0x108] sm:$0xff]
    %v911 = vld [vmem:[#allocation10 + $0x110] sm:$0xff]
    %v912 = vld [vmem:[#allocation10 + $0x118] sm:$0xff]
    %v913 = vld [vmem:[#allocation10 + $0x120] sm:$0xff]
    %v914 = vld [vmem:[#allocation10 + $0x128] sm:$0xff]
    %v915 = vld [vmem:[#allocation10 + $0x130] sm:$0xff]
    %v916 = vld [vmem:[#allocation10 + $0x138] sm:$0xff]
    %v917 = vld [vmem:[#allocation10 + $0x140] sm:$0xff]
    %v918 = vld [vmem:[#allocation10 + $0x148] sm:$0xff]
    %v919 = vld [vmem:[#allocation10 + $0x150] sm:$0xff]
    %v920 = vld [vmem:[#allocation10 + $0x158] sm:$0xff]
    %v921 = vld [vmem:[#allocation10 + $0x160] sm:$0xff]
    %v922 = vld [vmem:[#allocation10 + $0x168] sm:$0xff]
    %v923 = vld [vmem:[#allocation10 + $0x170] sm:$0xff]
    %v924 = vld [vmem:[#allocation10 + $0x178] sm:$0xff]
    %925 = vmatprep.subr.mxu0 %v878
    %926 = vmatpush1.msra.mxu0 %v877
    %927 = vmatprep.subr.mxu0 %v881
    %928 = vmatpush1.msra.mxu0 %v880
    %929 = vmatprep.subr.mxu0 %v884
    %930 = vmatpush1.msra.mxu0 %v883
    %931 = vmatprep.subr.mxu0 %v887
    %932 = vmatpush1.msra.mxu0 %v886
    %933 = vmatprep.subr.mxu0 %v890
    %934 = vmatpush1.msra.mxu0 %v889
    %935 = vmatprep.subr.mxu0 %v893
    %936 = vmatpush1.msra.mxu0 %v892
    %937 = vmatprep.subr.mxu0 %v896
    %938 = vmatpush1.msra.mxu0 %v895
    %939 = vmatprep.subr.mxu0 %v899
    %940 = vmatpush1.msra.mxu0 %v898
    %941 = vmatprep.subr.mxu0 %v902
    %942 = vmatpush1.msra.mxu0 %v901
    %943 = vmatprep.subr.mxu0 %v905
    %944 = vmatpush1.msra.mxu0 %v904
    %945 = vmatprep.subr.mxu0 %v908
    %946 = vmatpush1.msra.mxu0 %v907
    %947 = vmatprep.subr.mxu0 %v911
    %948 = vmatpush1.msra.mxu0 %v910
    %949 = vmatprep.subr.mxu0 %v914
    %950 = vmatpush1.msra.mxu0 %v913
    %951 = vmatprep.subr.mxu0 %v917
    %952 = vmatpush1.msra.mxu0 %v916
    %953 = vmatprep.subr.mxu0 %v920
    %954 = vmatpush1.msra.mxu0 %v919
    %955 = vmatprep.subr.mxu0 %v923
    %956 = vmatpush1.msra.mxu0 %v922
    %957 = vmatprep.subr.mxu0 0.0
    %958 = vmatpush1.msra.mxu0 0.0
    %959 = vmatprep.subr.mxu0 0.0
    %960 = vmatpush1.msra.mxu0 0.0
    %961 = vmatprep.subr.mxu0 0.0
    %962 = vmatpush1.msra.mxu0 0.0
    %963 = vmatprep.subr.mxu0 0.0
    %964 = vmatpush1.msra.mxu0 0.0
    %965 = vmatprep.subr.mxu0 0.0
    %966 = vmatpush1.msra.mxu0 0.0
    %967 = vmatprep.subr.mxu0 0.0
    %968 = vmatpush1.msra.mxu0 0.0
    %969 = vmatprep.subr.mxu0 0.0
    %970 = vmatpush1.msra.mxu0 0.0
    %971 = vmatprep.subr.mxu0 0.0
    %972 = vmatpush1.msra.mxu0 0.0
    %973 = vmatprep.subr.mxu0 0.0
    %974 = vmatpush1.msra.mxu0 0.0
    %975 = vmatprep.subr.mxu0 0.0
    %976 = vmatpush1.msra.mxu0 0.0
    %977 = vmatprep.subr.mxu0 0.0
    %978 = vmatpush1.msra.mxu0 0.0
    %979 = vmatprep.subr.mxu0 0.0
    %980 = vmatpush1.msra.mxu0 0.0
    %981 = vmatprep.subr.mxu0 0.0
    %982 = vmatpush1.msra.mxu0 0.0
    %983 = vmatprep.subr.mxu0 0.0
    %984 = vmatpush1.msra.mxu0 0.0
    %985 = vmatprep.subr.mxu0 0.0
    %986 = vmatpush1.msra.mxu0 0.0
    %987 = vmatprep.subr.mxu0 0.0
    %988 = vmatpush1.msra.mxu0 0.0
    %989 = vmatprep.mubr.f32.mxu0 0.0
    %990 = vmatmul.mubr.f32.gmra.mrb[0].mxu0 %v557
    %v991 = vpop.f32.mrb[0].mxu0
    %v992 = vadd.f32 %v98, %v991
    %v993 = vpop.f32.mrb[0].mxu0
    %v994 = vadd.f32 %v102, %v993
    %995 = vdwg.mxu0
    %996 = vmatprep.subr.mxu0 0.0
    %997 = vmatpush1.msra.mxu0 %v879
    %998 = vmatprep.subr.mxu0 0.0
    %999 = vmatpush1.msra.mxu0 %v882
    %1000 = vmatprep.subr.mxu0 0.0
    %1001 = vmatpush1.msra.mxu0 %v885
    %1002 = vmatprep.subr.mxu0 0.0
    %1003 = vmatpush1.msra.mxu0 %v888
    %1004 = vmatprep.subr.mxu0 0.0
    %1005 = vmatpush1.msra.mxu0 %v891
    %1006 = vmatprep.subr.mxu0 0.0
    %1007 = vmatpush1.msra.mxu0 %v894
    %1008 = vmatprep.subr.mxu0 0.0
    %1009 = vmatpush1.msra.mxu0 %v897
    %1010 = vmatprep.subr.mxu0 0.0
    %1011 = vmatpush1.msra.mxu0 %v900
    %1012 = vmatprep.subr.mxu0 0.0
    %1013 = vmatpush1.msra.mxu0 %v903
    %1014 = vmatprep.subr.mxu0 0.0
    %1015 = vmatpush1.msra.mxu0 %v906
    %1016 = vmatprep.subr.mxu0 0.0
    %1017 = vmatpush1.msra.mxu0 %v909
    %1018 = vmatprep.subr.mxu0 0.0
    %1019 = vmatpush1.msra.mxu0 %v912
    %1020 = vmatprep.subr.mxu0 0.0
    %1021 = vmatpush1.msra.mxu0 %v915
    %1022 = vmatprep.subr.mxu0 0.0
    %1023 = vmatpush1.msra.mxu0 %v918
    %1024 = vmatprep.subr.mxu0 0.0
    %1025 = vmatpush1.msra.mxu0 %v921
    %1026 = vmatprep.subr.mxu0 0.0
    %1027 = vmatpush1.msra.mxu0 %v924
    %1028 = vmatprep.subr.mxu0 0.0
    %1029 = vmatpush1.msra.mxu0 0.0
    %1030 = vmatprep.subr.mxu0 0.0
    %1031 = vmatpush1.msra.mxu0 0.0
    %1032 = vmatprep.subr.mxu0 0.0
    %1033 = vmatpush1.msra.mxu0 0.0
    %1034 = vmatprep.subr.mxu0 0.0
    %1035 = vmatpush1.msra.mxu0 0.0
    %1036 = vmatprep.subr.mxu0 0.0
    %1037 = vmatpush1.msra.mxu0 0.0
    %1038 = vmatprep.subr.mxu0 0.0
    %1039 = vmatpush1.msra.mxu0 0.0
    %1040 = vmatprep.subr.mxu0 0.0
    %1041 = vmatpush1.msra.mxu0 0.0
    %1042 = vmatprep.subr.mxu0 0.0
    %1043 = vmatpush1.msra.mxu0 0.0
    %1044 = vmatprep.subr.mxu0 0.0
    %1045 = vmatpush1.msra.mxu0 0.0
    %1046 = vmatprep.subr.mxu0 0.0
    %1047 = vmatpush1.msra.mxu0 0.0
    %1048 = vmatprep.subr.mxu0 0.0
    %1049 = vmatpush1.msra.mxu0 0.0
    %1050 = vmatprep.subr.mxu0 0.0
    %1051 = vmatpush1.msra.mxu0 0.0
    %1052 = vmatprep.subr.mxu0 0.0
    %1053 = vmatpush1.msra.mxu0 0.0
    %1054 = vmatprep.subr.mxu0 0.0
    %1055 = vmatpush1.msra.mxu0 0.0
    %1056 = vmatprep.subr.mxu0 0.0
    %1057 = vmatpush1.msra.mxu0 0.0
    %1058 = vmatprep.subr.mxu0 0.0
    %1059 = vmatpush1.msra.mxu0 0.0
    %1060 = vmatprep.mubr.f32.mxu0 0.0
    %1061 = vmatmul.mubr.f32.gmra.mrb[0].mxu0 %v557
    %v1062 = vpop.f32.mrb[0].mxu0
    %v1063 = vadd.f32 %v106, %v1062
    %v1064 = vpop.f32.mrb[0].mxu0
    %1065 = vdwg.mxu0
    %v1066 = vadd.f32 %v874, %v992
    %v1067 = vxor.u32 %v1066, 2147483648
    %v1068 = vmul.f32 %v1067, 1.442695
    %v1069 = vpow.pop %v1068
    %v1070 = vadd.f32 %v1069, 1.0
    %v1071 = vrcp.pop %v1070
    %v1072 = vmul.f32 1.0, %v1071
    %v1073 = vadd.f32 %v875, %v994
    %v1074 = vxor.u32 %v1073, 2147483648
    %v1075 = vmul.f32 %v1074, 1.442695
    %v1076 = vpow.pop %v1075
    %v1077 = vadd.f32 %v1076, 1.0
    %v1078 = vrcp.pop %v1077
    %v1079 = vmul.f32 1.0, %v1078
    %v1080 = vmul.f32 %v1072, %v1063
    %v1081 = vadd.f32 %v876, %v1080
    %v1082 = vtanh.pop %v1081
    %v1083 = vsub.f32 1.0, %v1079
    %v1084 = vmul.f32 %v1083, %v1082
    %v1085 = vmul.f32 %v1079, %v557
    %v1086 = vadd.f32 %v1084, %v1085
    %v1087 = vld [vmem:[#allocation11] sm:$0xff]
    %v1088 = vld [vmem:[#allocation11 + $0x8] sm:$0xff]
    %v1089 = vld [vmem:[#allocation11 + $0x10] sm:$0xff]
    %v1090 = vld [vmem:[#allocation11 + $0x18] sm:$0xff]
    %v1091 = vld [vmem:[#allocation11 + $0x20] sm:$0xff]
    %v1092 = vld [vmem:[#allocation11 + $0x28] sm:$0xff]
    %v1093 = vld [vmem:[#allocation11 + $0x30] sm:$0xff]
    %v1094 = vld [vmem:[#allocation11 + $0x38] sm:$0xff]
    %v1095 = vld [vmem:[#allocation11 + $0x40] sm:$0xff]
    %v1096 = vld [vmem:[#allocation11 + $0x48] sm:$0xff]
    %v1097 = vld [vmem:[#allocation11 + $0x50] sm:$0xff]
    %v1098 = vld [vmem:[#allocation11 + $0x58] sm:$0xff]
    %v1099 = vld [vmem:[#allocation11 + $0x60] sm:$0xff]
    %v1100 = vld [vmem:[#allocation11 + $0x68] sm:$0xff]
    %v1101 = vld [vmem:[#allocation11 + $0x70] sm:$0xff]
    %v1102 = vld [vmem:[#allocation11 + $0x78] sm:$0xff]
    %1103 = vmatprep.subr.mxu0 0.0
    %1104 = vmatpush1.msra.mxu0 %v1087
    %1105 = vmatprep.subr.mxu0 0.0
    %1106 = vmatpush1.msra.mxu0 %v1088
    %1107 = vmatprep.subr.mxu0 0.0
    %1108 = vmatpush1.msra.mxu0 %v1089
    %1109 = vmatprep.subr.mxu0 0.0
    %1110 = vmatpush1.msra.mxu0 %v1090
    %1111 = vmatprep.subr.mxu0 0.0
    %1112 = vmatpush1.msra.mxu0 %v1091
    %1113 = vmatprep.subr.mxu0 0.0
    %1114 = vmatpush1.msra.mxu0 %v1092
    %1115 = vmatprep.subr.mxu0 0.0
    %1116 = vmatpush1.msra.mxu0 %v1093
    %1117 = vmatprep.subr.mxu0 0.0
    %1118 = vmatpush1.msra.mxu0 %v1094
    %1119 = vmatprep.subr.mxu0 0.0
    %1120 = vmatpush1.msra.mxu0 %v1095
    %1121 = vmatprep.subr.mxu0 0.0
    %1122 = vmatpush1.msra.mxu0 %v1096
    %1123 = vmatprep.subr.mxu0 0.0
    %1124 = vmatpush1.msra.mxu0 %v1097
    %1125 = vmatprep.subr.mxu0 0.0
    %1126 = vmatpush1.msra.mxu0 %v1098
    %1127 = vmatprep.subr.mxu0 0.0
    %1128 = vmatpush1.msra.mxu0 %v1099
    %1129 = vmatprep.subr.mxu0 0.0
    %1130 = vmatpush1.msra.mxu0 %v1100
    %1131 = vmatprep.subr.mxu0 0.0
    %1132 = vmatpush1.msra.mxu0 %v1101
    %1133 = vmatprep.subr.mxu0 0.0
    %1134 = vmatpush1.msra.mxu0 %v1102
    %1135 = vmatprep.subr.mxu0 0.0
    %1136 = vmatpush1.msra.mxu0 0.0
    %1137 = vmatprep.subr.mxu0 0.0
    %1138 = vmatpush1.msra.mxu0 0.0
    %1139 = vmatprep.subr.mxu0 0.0
    %1140 = vmatpush1.msra.mxu0 0.0
    %1141 = vmatprep.subr.mxu0 0.0
    %1142 = vmatpush1.msra.mxu0 0.0
    %1143 = vmatprep.subr.mxu0 0.0
    %1144 = vmatpush1.msra.mxu0 0.0
    %1145 = vmatprep.subr.mxu0 0.0
    %1146 = vmatpush1.msra.mxu0 0.0
    %1147 = vmatprep.subr.mxu0 0.0
    %1148 = vmatpush1.msra.mxu0 0.0
    %1149 = vmatprep.subr.mxu0 0.0
    %1150 = vmatpush1.msra.mxu0 0.0
    %1151 = vmatprep.subr.mxu0 0.0
    %1152 = vmatpush1.msra.mxu0 0.0
    %1153 = vmatprep.subr.mxu0 0.0
    %1154 = vmatpush1.msra.mxu0 0.0
    %1155 = vmatprep.subr.mxu0 0.0
    %1156 = vmatpush1.msra.mxu0 0.0
    %1157 = vmatprep.subr.mxu0 0.0
    %1158 = vmatpush1.msra.mxu0 0.0
    %1159 = vmatprep.subr.mxu0 0.0
    %1160 = vmatpush1.msra.mxu0 0.0
    %1161 = vmatprep.subr.mxu0 0.0
    %1162 = vmatpush1.msra.mxu0 0.0
    %1163 = vmatprep.subr.mxu0 0.0
    %1164 = vmatpush1.msra.mxu0 0.0
    %1165 = vmatprep.subr.mxu0 0.0
    %1166 = vmatpush1.msra.mxu0 0.0
    %1167 = vmatprep.mubr.f32.mxu0 0.0
    %1168 = vmatmul.mubr.f32.gmra.mrb[0].mxu0 %v1086
    %v1169 = vpop.f32.mrb[0].mxu0
    %v1170 = vadd.f32 %v115, %v1169
    %v1171 = vpop.f32.mrb[0].mxu0
    %1172 = vdwg.mxu0
    %s1173 = scalar_lea.vmem [#allocation13], 8
    %1174 = vst [vmem:[%s1173] sm:$0xff] %v1170
    %s1175 = sld [smem:[#allocation3 + $0x2]]
    %p1176 = scmp.eq.s32.totalorder %s1175, 1
    // Predicated region
    $region66: #{tpu_custom_call.1} parent=1 // pred_check
      %p1177 = pneg %p1176
    $region67: #{tpu_custom_call.1} parent=1 // pred_check_branch
      %1179 = sbr.rel (%p1177) target = $region69
    $region68: #{tpu_custom_call.1} parent=1 // pred_region
      %1180 = vmax.xlane.f32.xlu0 %v1170
      %v1181 = vpop.xlane.xlu0 %1180
      %vm1182 = vcmp.eq.f32.partialorder %v1170, %v1181
      %v1183 = vsel %vm1182, %v118, 128
      %v1184 = vand.u32 %v1183, 65535
      %v1185 = vshra.s32 %v1183, 16
      %v1186 = vcvt.s32.f32 %v1184
      %v1187 = vcvt.s32.f32 %v1185
      %1188 = vmin.xlane.f32.xlu0 %v1187
      %v1189 = vpop.xlane.xlu0 %1188
      %vm1190 = vcmp.eq.f32.partialorder %v1187, %v1189
      %v1191 = vsel %vm1190, %v1186, inf
      %1192 = vmin.xlane.f32.xlu0 %v1191
      %v1193 = vpop.xlane.xlu0 %1192
      %v1194 = vcvt.f32.s32 %v1193
      %v1195 = vcvt.f32.s32 %v1189
      %v1196 = vshll.u32 %v1195, 16
      %v1197 = vadd.s32 %v1196, %v1194
      %vm1198 = vcmp.eq.s32.totalorder %v118, %v1197
      %v1199 = vsel %vm1198, 1, 0
      %v1200 = vcvt.s32.f32 %v1199
      %v1201 = vld [vmem:[#allocation8] sm:$0xff]
      %v1202 = vld [vmem:[#allocation8 + $0x8] sm:$0xff]
      %v1203 = vld [vmem:[#allocation8 + $0x10] sm:$0xff]
      %v1204 = vld [vmem:[#allocation8 + $0x18] sm:$0xff]
      %v1205 = vld [vmem:[#allocation8 + $0x20] sm:$0xff]
      %v1206 = vld [vmem:[#allocation8 + $0x28] sm:$0xff]
      %v1207 = vld [vmem:[#allocation8 + $0x30] sm:$0xff]
      %v1208 = vld [vmem:[#allocation8 + $0x38] sm:$0xff]
      %v1209 = vld [vmem:[#allocation8 + $0x40] sm:$0xff]
      %v1210 = vld [vmem:[#allocation8 + $0x48] sm:$0xff]
      %v1211 = vld [vmem:[#allocation8 + $0x50] sm:$0xff]
      %v1212 = vld [vmem:[#allocation8 + $0x58] sm:$0xff]
      %v1213 = vld [vmem:[#allocation8 + $0x60] sm:$0xff]
      %v1214 = vld [vmem:[#allocation8 + $0x68] sm:$0xff]
      %v1215 = vld [vmem:[#allocation8 + $0x70] sm:$0xff]
      %v1216 = vld [vmem:[#allocation8 + $0x78] sm:$0xff]
      %v1217 = vld [vmem:[#allocation8 + $0x80] sm:$0xff]
      %v1218 = vld [vmem:[#allocation8 + $0x88] sm:$0xff]
      %v1219 = vld [vmem:[#allocation8 + $0x90] sm:$0xff]
      %v1220 = vld [vmem:[#allocation8 + $0x98] sm:$0xff]
      %v1221 = vld [vmem:[#allocation8 + $0xa0] sm:$0xff]
      %v1222 = vld [vmem:[#allocation8 + $0xa8] sm:$0xff]
      %v1223 = vld [vmem:[#allocation8 + $0xb0] sm:$0xff]
      %v1224 = vld [vmem:[#allocation8 + $0xb8] sm:$0xff]
      %v1225 = vld [vmem:[#allocation8 + $0xc0] sm:$0xff]
      %v1226 = vld [vmem:[#allocation8 + $0xc8] sm:$0xff]
      %v1227 = vld [vmem:[#allocation8 + $0xd0] sm:$0xff]
      %v1228 = vld [vmem:[#allocation8 + $0xd8] sm:$0xff]
      %v1229 = vld [vmem:[#allocation8 + $0xe0] sm:$0xff]
      %v1230 = vld [vmem:[#allocation8 + $0xe8] sm:$0xff]
      %v1231 = vld [vmem:[#allocation8 + $0xf0] sm:$0xff]
      %v1232 = vld [vmem:[#allocation8 + $0xf8] sm:$0xff]
      %v1233 = vld [vmem:[#allocation8 + $0x100] sm:$0xff]
      %v1234 = vld [vmem:[#allocation8 + $0x108] sm:$0xff]
      %v1235 = vld [vmem:[#allocation8 + $0x110] sm:$0xff]
      %v1236 = vld [vmem:[#allocation8 + $0x118] sm:$0xff]
      %v1237 = vld [vmem:[#allocation8 + $0x120] sm:$0xff]
      %v1238 = vld [vmem:[#allocation8 + $0x128] sm:$0xff]
      %v1239 = vld [vmem:[#allocation8 + $0x130] sm:$0xff]
      %v1240 = vld [vmem:[#allocation8 + $0x138] sm:$0xff]
      %v1241 = vld [vmem:[#allocation8 + $0x140] sm:$0xff]
      %v1242 = vld [vmem:[#allocation8 + $0x148] sm:$0xff]
      %v1243 = vld [vmem:[#allocation8 + $0x150] sm:$0xff]
      %v1244 = vld [vmem:[#allocation8 + $0x158] sm:$0xff]
      %v1245 = vld [vmem:[#allocation8 + $0x160] sm:$0xff]
      %v1246 = vld [vmem:[#allocation8 + $0x168] sm:$0xff]
      %v1247 = vld [vmem:[#allocation8 + $0x170] sm:$0xff]
      %v1248 = vld [vmem:[#allocation8 + $0x178] sm:$0xff]
      %1249 = vmatprep.subr.mxu0 %v1202
      %1250 = vmatpush1.msra.mxu0 %v1201
      %1251 = vmatprep.subr.mxu0 %v1205
      %1252 = vmatpush1.msra.mxu0 %v1204
      %1253 = vmatprep.subr.mxu0 %v1208
      %1254 = vmatpush1.msra.mxu0 %v1207
      %1255 = vmatprep.subr.mxu0 %v1211
      %1256 = vmatpush1.msra.mxu0 %v1210
      %1257 = vmatprep.subr.mxu0 %v1214
      %1258 = vmatpush1.msra.mxu0 %v1213
      %1259 = vmatprep.subr.mxu0 %v1217
      %1260 = vmatpush1.msra.mxu0 %v1216
      %1261 = vmatprep.subr.mxu0 %v1220
      %1262 = vmatpush1.msra.mxu0 %v1219
      %1263 = vmatprep.subr.mxu0 %v1223
      %1264 = vmatpush1.msra.mxu0 %v1222
      %1265 = vmatprep.subr.mxu0 %v1226
      %1266 = vmatpush1.msra.mxu0 %v1225
      %1267 = vmatprep.subr.mxu0 %v1229
      %1268 = vmatpush1.msra.mxu0 %v1228
      %1269 = vmatprep.subr.mxu0 %v1232
      %1270 = vmatpush1.msra.mxu0 %v1231
      %1271 = vmatprep.subr.mxu0 %v1235
      %1272 = vmatpush1.msra.mxu0 %v1234
      %1273 = vmatprep.subr.mxu0 %v1238
      %1274 = vmatpush1.msra.mxu0 %v1237
      %1275 = vmatprep.subr.mxu0 %v1241
      %1276 = vmatpush1.msra.mxu0 %v1240
      %1277 = vmatprep.subr.mxu0 %v1244
      %1278 = vmatpush1.msra.mxu0 %v1243
      %1279 = vmatprep.subr.mxu0 %v1247
      %1280 = vmatpush1.msra.mxu0 %v1246
      %1281 = vmatprep.subr.mxu0 0.0
      %1282 = vmatpush1.msra.mxu0 0.0
      %1283 = vmatprep.subr.mxu0 0.0
      %1284 = vmatpush1.msra.mxu0 0.0
      %1285 = vmatprep.subr.mxu0 0.0
      %1286 = vmatpush1.msra.mxu0 0.0
      %1287 = vmatprep.subr.mxu0 0.0
      %1288 = vmatpush1.msra.mxu0 0.0
      %1289 = vmatprep.subr.mxu0 0.0
      %1290 = vmatpush1.msra.mxu0 0.0
      %1291 = vmatprep.subr.mxu0 0.0
      %1292 = vmatpush1.msra.mxu0 0.0
      %1293 = vmatprep.subr.mxu0 0.0
      %1294 = vmatpush1.msra.mxu0 0.0
      %1295 = vmatprep.subr.mxu0 0.0
      %1296 = vmatpush1.msra.mxu0 0.0
      %1297 = vmatprep.subr.mxu0 0.0
      %1298 = vmatpush1.msra.mxu0 0.0
      %1299 = vmatprep.subr.mxu0 0.0
      %1300 = vmatpush1.msra.mxu0 0.0
      %1301 = vmatprep.subr.mxu0 0.0
      %1302 = vmatpush1.msra.mxu0 0.0
      %1303 = vmatprep.subr.mxu0 0.0
      %1304 = vmatpush1.msra.mxu0 0.0
      %1305 = vmatprep.subr.mxu0 0.0
      %1306 = vmatpush1.msra.mxu0 0.0
      %1307 = vmatprep.subr.mxu0 0.0
      %1308 = vmatpush1.msra.mxu0 0.0
      %1309 = vmatprep.subr.mxu0 0.0
      %1310 = vmatpush1.msra.mxu0 0.0
      %1311 = vmatprep.subr.mxu0 0.0
      %1312 = vmatpush1.msra.mxu0 0.0
      %1313 = vmatprep.mubr.f32.mxu0 0.0
      %1314 = vmatmul.mubr.f32.gmra.mrb[0].mxu0 %v1200
      %v1315 = vpop.f32.mrb[0].mxu0
      %v1316 = vadd.f32 0.0, %v1315
      %v1317 = vpop.f32.mrb[0].mxu0
      %v1318 = vadd.f32 0.0, %v1317
      %1319 = vdwg.mxu0
      %1320 = vmatprep.subr.mxu0 0.0
      %1321 = vmatpush1.msra.mxu0 %v1203
      %1322 = vmatprep.subr.mxu0 0.0
      %1323 = vmatpush1.msra.mxu0 %v1206
      %1324 = vmatprep.subr.mxu0 0.0
      %1325 = vmatpush1.msra.mxu0 %v1209
      %1326 = vmatprep.subr.mxu0 0.0
      %1327 = vmatpush1.msra.mxu0 %v1212
      %1328 = vmatprep.subr.mxu0 0.0
      %1329 = vmatpush1.msra.mxu0 %v1215
      %1330 = vmatprep.subr.mxu0 0.0
      %1331 = vmatpush1.msra.mxu0 %v1218
      %1332 = vmatprep.subr.mxu0 0.0
      %1333 = vmatpush1.msra.mxu0 %v1221
      %1334 = vmatprep.subr.mxu0 0.0
      %1335 = vmatpush1.msra.mxu0 %v1224
      %1336 = vmatprep.subr.mxu0 0.0
      %1337 = vmatpush1.msra.mxu0 %v1227
      %1338 = vmatprep.subr.mxu0 0.0
      %1339 = vmatpush1.msra.mxu0 %v1230
      %1340 = vmatprep.subr.mxu0 0.0
      %1341 = vmatpush1.msra.mxu0 %v1233
      %1342 = vmatprep.subr.mxu0 0.0
      %1343 = vmatpush1.msra.mxu0 %v1236
      %1344 = vmatprep.subr.mxu0 0.0
      %1345 = vmatpush1.msra.mxu0 %v1239
      %1346 = vmatprep.subr.mxu0 0.0
      %1347 = vmatpush1.msra.mxu0 %v1242
      %1348 = vmatprep.subr.mxu0 0.0
      %1349 = vmatpush1.msra.mxu0 %v1245
      %1350 = vmatprep.subr.mxu0 0.0
      %1351 = vmatpush1.msra.mxu0 %v1248
      %1352 = vmatprep.subr.mxu0 0.0
      %1353 = vmatpush1.msra.mxu0 0.0
      %1354 = vmatprep.subr.mxu0 0.0
      %1355 = vmatpush1.msra.mxu0 0.0
      %1356 = vmatprep.subr.mxu0 0.0
      %1357 = vmatpush1.msra.mxu0 0.0
      %1358 = vmatprep.subr.mxu0 0.0
      %1359 = vmatpush1.msra.mxu0 0.0
      %1360 = vmatprep.subr.mxu0 0.0
      %1361 = vmatpush1.msra.mxu0 0.0
      %1362 = vmatprep.subr.mxu0 0.0
      %1363 = vmatpush1.msra.mxu0 0.0
      %1364 = vmatprep.subr.mxu0 0.0
      %1365 = vmatpush1.msra.mxu0 0.0
      %1366 = vmatprep.subr.mxu0 0.0
      %1367 = vmatpush1.msra.mxu0 0.0
      %1368 = vmatprep.subr.mxu0 0.0
      %1369 = vmatpush1.msra.mxu0 0.0
      %1370 = vmatprep.subr.mxu0 0.0
      %1371 = vmatpush1.msra.mxu0 0.0
      %1372 = vmatprep.subr.mxu0 0.0
      %1373 = vmatpush1.msra.mxu0 0.0
      %1374 = vmatprep.subr.mxu0 0.0
      %1375 = vmatpush1.msra.mxu0 0.0
      %1376 = vmatprep.subr.mxu0 0.0
      %1377 = vmatpush1.msra.mxu0 0.0
      %1378 = vmatprep.subr.mxu0 0.0
      %1379 = vmatpush1.msra.mxu0 0.0
      %1380 = vmatprep.subr.mxu0 0.0
      %1381 = vmatpush1.msra.mxu0 0.0
      %1382 = vmatprep.subr.mxu0 0.0
      %1383 = vmatpush1.msra.mxu0 0.0
      %1384 = vmatprep.mubr.f32.mxu0 0.0
      %1385 = vmatmul.mubr.f32.gmra.mrb[0].mxu0 %v1200
      %v1386 = vpop.f32.mrb[0].mxu0
      %v1387 = vadd.f32 0.0, %v1386
      %v1388 = vpop.f32.mrb[0].mxu0
      %1389 = vdwg.mxu0
      %1390 = vst [vmem:[#allocation2] sm:$0xff] %v1316
      %1391 = vst [vmem:[#allocation2 + $0x8] sm:$0xff] %v1318
      %1392 = vst [vmem:[#allocation2 + $0x10] sm:$0xff] %v1387
    $region69: #{tpu_custom_call.1} parent=1 // pred_fallthru
      _
    %p1393 = scmp.eq.s32.totalorder %s1175, 0
    // Predicated region
    $region70: #{tpu_custom_call.1} parent=1 // pred_check
      %p1394 = pneg %p1393
    $region71: #{tpu_custom_call.1} parent=1 // pred_check_branch
      %1396 = sbr.rel (%p1394) target = $region73
    $region72: #{tpu_custom_call.1} parent=1 // pred_region
      %s1397 = scalar_lea.vmem [#allocation7], 48
      %v1398 = vld [vmem:[%s1397] sm:$0xff]
      %v1399 = vld [vmem:[%s1397 + $0x8] sm:$0xff]
      %v1400 = vld [vmem:[%s1397 + $0x10] sm:$0xff]
      %1401 = vst [vmem:[#allocation2] sm:$0xff] %v1398
      %1402 = vst [vmem:[#allocation2 + $0x8] sm:$0xff] %v1399
      %1403 = vst [vmem:[#allocation2 + $0x10] sm:$0xff] %v1400
    $region73: #{tpu_custom_call.1} parent=1 // pred_fallthru
      _
    %v1404 = vld [vmem:[#allocation2] sm:$0xff]
    %v1405 = vld [vmem:[#allocation2 + $0x8] sm:$0xff]
    %v1406 = vld [vmem:[#allocation2 + $0x10] sm:$0xff]
    %v1407 = vld [vmem:[#allocation10] sm:$0xff]
    %v1408 = vld [vmem:[#allocation10 + $0x8] sm:$0xff]
    %v1409 = vld [vmem:[#allocation10 + $0x10] sm:$0xff]
    %v1410 = vld [vmem:[#allocation10 + $0x18] sm:$0xff]
    %v1411 = vld [vmem:[#allocation10 + $0x20] sm:$0xff]
    %v1412 = vld [vmem:[#allocation10 + $0x28] sm:$0xff]
    %v1413 = vld [vmem:[#allocation10 + $0x30] sm:$0xff]
    %v1414 = vld [vmem:[#allocation10 + $0x38] sm:$0xff]
    %v1415 = vld [vmem:[#allocation10 + $0x40] sm:$0xff]
    %v1416 = vld [vmem:[#allocation10 + $0x48] sm:$0xff]
    %v1417 = vld [vmem:[#allocation10 + $0x50] sm:$0xff]
    %v1418 = vld [vmem:[#allocation10 + $0x58] sm:$0xff]
    %v1419 = vld [vmem:[#allocation10 + $0x60] sm:$0xff]
    %v1420 = vld [vmem:[#allocation10 + $0x68] sm:$0xff]
    %v1421 = vld [vmem:[#allocation10 + $0x70] sm:$0xff]
    %v1422 = vld [vmem:[#allocation10 + $0x78] sm:$0xff]
    %v1423 = vld [vmem:[#allocation10 + $0x80] sm:$0xff]
    %v1424 = vld [vmem:[#allocation10 + $0x88] sm:$0xff]
    %v1425 = vld [vmem:[#allocation10 + $0x90] sm:$0xff]
    %v1426 = vld [vmem:[#allocation10 + $0x98] sm:$0xff]
    %v1427 = vld [vmem:[#allocation10 + $0xa0] sm:$0xff]
    %v1428 = vld [vmem:[#allocation10 + $0xa8] sm:$0xff]
    %v1429 = vld [vmem:[#allocation10 + $0xb0] sm:$0xff]
    %v1430 = vld [vmem:[#allocation10 + $0xb8] sm:$0xff]
    %v1431 = vld [vmem:[#allocation10 + $0xc0] sm:$0xff]
    %v1432 = vld [vmem:[#allocation10 + $0xc8] sm:$0xff]
    %v1433 = vld [vmem:[#allocation10 + $0xd0] sm:$0xff]
    %v1434 = vld [vmem:[#allocation10 + $0xd8] sm:$0xff]
    %v1435 = vld [vmem:[#allocation10 + $0xe0] sm:$0xff]
    %v1436 = vld [vmem:[#allocation10 + $0xe8] sm:$0xff]
    %v1437 = vld [vmem:[#allocation10 + $0xf0] sm:$0xff]
    %v1438 = vld [vmem:[#allocation10 + $0xf8] sm:$0xff]
    %v1439 = vld [vmem:[#allocation10 + $0x100] sm:$0xff]
    %v1440 = vld [vmem:[#allocation10 + $0x108] sm:$0xff]
    %v1441 = vld [vmem:[#allocation10 + $0x110] sm:$0xff]
    %v1442 = vld [vmem:[#allocation10 + $0x118] sm:$0xff]
    %v1443 = vld [vmem:[#allocation10 + $0x120] sm:$0xff]
    %v1444 = vld [vmem:[#allocation10 + $0x128] sm:$0xff]
    %v1445 = vld [vmem:[#allocation10 + $0x130] sm:$0xff]
    %v1446 = vld [vmem:[#allocation10 + $0x138] sm:$0xff]
    %v1447 = vld [vmem:[#allocation10 + $0x140] sm:$0xff]
    %v1448 = vld [vmem:[#allocation10 + $0x148] sm:$0xff]
    %v1449 = vld [vmem:[#allocation10 + $0x150] sm:$0xff]
    %v1450 = vld [vmem:[#allocation10 + $0x158] sm:$0xff]
    %v1451 = vld [vmem:[#allocation10 + $0x160] sm:$0xff]
    %v1452 = vld [vmem:[#allocation10 + $0x168] sm:$0xff]
    %v1453 = vld [vmem:[#allocation10 + $0x170] sm:$0xff]
    %v1454 = vld [vmem:[#allocation10 + $0x178] sm:$0xff]
    %1455 = vmatprep.subr.mxu0 %v1408
    %1456 = vmatpush1.msra.mxu0 %v1407
    %1457 = vmatprep.subr.mxu0 %v1411
    %1458 = vmatpush1.msra.mxu0 %v1410
    %1459 = vmatprep.subr.mxu0 %v1414
    %1460 = vmatpush1.msra.mxu0 %v1413
    %1461 = vmatprep.subr.mxu0 %v1417
    %1462 = vmatpush1.msra.mxu0 %v1416
    %1463 = vmatprep.subr.mxu0 %v1420
    %1464 = vmatpush1.msra.mxu0 %v1419
    %1465 = vmatprep.subr.mxu0 %v1423
    %1466 = vmatpush1.msra.mxu0 %v1422
    %1467 = vmatprep.subr.mxu0 %v1426
    %1468 = vmatpush1.msra.mxu0 %v1425
    %1469 = vmatprep.subr.mxu0 %v1429
    %1470 = vmatpush1.msra.mxu0 %v1428
    %1471 = vmatprep.subr.mxu0 %v1432
    %1472 = vmatpush1.msra.mxu0 %v1431
    %1473 = vmatprep.subr.mxu0 %v1435
    %1474 = vmatpush1.msra.mxu0 %v1434
    %1475 = vmatprep.subr.mxu0 %v1438
    %1476 = vmatpush1.msra.mxu0 %v1437
    %1477 = vmatprep.subr.mxu0 %v1441
    %1478 = vmatpush1.msra.mxu0 %v1440
    %1479 = vmatprep.subr.mxu0 %v1444
    %1480 = vmatpush1.msra.mxu0 %v1443
    %1481 = vmatprep.subr.mxu0 %v1447
    %1482 = vmatpush1.msra.mxu0 %v1446
    %1483 = vmatprep.subr.mxu0 %v1450
    %1484 = vmatpush1.msra.mxu0 %v1449
    %1485 = vmatprep.subr.mxu0 %v1453
    %1486 = vmatpush1.msra.mxu0 %v1452
    %1487 = vmatprep.subr.mxu0 0.0
    %1488 = vmatpush1.msra.mxu0 0.0
    %1489 = vmatprep.subr.mxu0 0.0
    %1490 = vmatpush1.msra.mxu0 0.0
    %1491 = vmatprep.subr.mxu0 0.0
    %1492 = vmatpush1.msra.mxu0 0.0
    %1493 = vmatprep.subr.mxu0 0.0
    %1494 = vmatpush1.msra.mxu0 0.0
    %1495 = vmatprep.subr.mxu0 0.0
    %1496 = vmatpush1.msra.mxu0 0.0
    %1497 = vmatprep.subr.mxu0 0.0
    %1498 = vmatpush1.msra.mxu0 0.0
    %1499 = vmatprep.subr.mxu0 0.0
    %1500 = vmatpush1.msra.mxu0 0.0
    %1501 = vmatprep.subr.mxu0 0.0
    %1502 = vmatpush1.msra.mxu0 0.0
    %1503 = vmatprep.subr.mxu0 0.0
    %1504 = vmatpush1.msra.mxu0 0.0
    %1505 = vmatprep.subr.mxu0 0.0
    %1506 = vmatpush1.msra.mxu0 0.0
    %1507 = vmatprep.subr.mxu0 0.0
    %1508 = vmatpush1.msra.mxu0 0.0
    %1509 = vmatprep.subr.mxu0 0.0
    %1510 = vmatpush1.msra.mxu0 0.0
    %1511 = vmatprep.subr.mxu0 0.0
    %1512 = vmatpush1.msra.mxu0 0.0
    %1513 = vmatprep.subr.mxu0 0.0
    %1514 = vmatpush1.msra.mxu0 0.0
    %1515 = vmatprep.subr.mxu0 0.0
    %1516 = vmatpush1.msra.mxu0 0.0
    %1517 = vmatprep.subr.mxu0 0.0
    %1518 = vmatpush1.msra.mxu0 0.0
    %1519 = vmatprep.mubr.f32.mxu0 0.0
    %1520 = vmatmul.mubr.f32.gmra.mrb[0].mxu0 %v1086
    %v1521 = vpop.f32.mrb[0].mxu0
    %v1522 = vadd.f32 %v98, %v1521
    %v1523 = vpop.f32.mrb[0].mxu0
    %v1524 = vadd.f32 %v102, %v1523
    %1525 = vdwg.mxu0
    %1526 = vmatprep.subr.mxu0 0.0
    %1527 = vmatpush1.msra.mxu0 %v1409
    %1528 = vmatprep.subr.mxu0 0.0
    %1529 = vmatpush1.msra.mxu0 %v1412
    %1530 = vmatprep.subr.mxu0 0.0
    %1531 = vmatpush1.msra.mxu0 %v1415
    %1532 = vmatprep.subr.mxu0 0.0
    %1533 = vmatpush1.msra.mxu0 %v1418
    %1534 = vmatprep.subr.mxu0 0.0
    %1535 = vmatpush1.msra.mxu0 %v1421
    %1536 = vmatprep.subr.mxu0 0.0
    %1537 = vmatpush1.msra.mxu0 %v1424
    %1538 = vmatprep.subr.mxu0 0.0
    %1539 = vmatpush1.msra.mxu0 %v1427
    %1540 = vmatprep.subr.mxu0 0.0
    %1541 = vmatpush1.msra.mxu0 %v1430
    %1542 = vmatprep.subr.mxu0 0.0
    %1543 = vmatpush1.msra.mxu0 %v1433
    %1544 = vmatprep.subr.mxu0 0.0
    %1545 = vmatpush1.msra.mxu0 %v1436
    %1546 = vmatprep.subr.mxu0 0.0
    %1547 = vmatpush1.msra.mxu0 %v1439
    %1548 = vmatprep.subr.mxu0 0.0
    %1549 = vmatpush1.msra.mxu0 %v1442
    %1550 = vmatprep.subr.mxu0 0.0
    %1551 = vmatpush1.msra.mxu0 %v1445
    %1552 = vmatprep.subr.mxu0 0.0
    %1553 = vmatpush1.msra.mxu0 %v1448
    %1554 = vmatprep.subr.mxu0 0.0
    %1555 = vmatpush1.msra.mxu0 %v1451
    %1556 = vmatprep.subr.mxu0 0.0
    %1557 = vmatpush1.msra.mxu0 %v1454
    %1558 = vmatprep.subr.mxu0 0.0
    %1559 = vmatpush1.msra.mxu0 0.0
    %1560 = vmatprep.subr.mxu0 0.0
    %1561 = vmatpush1.msra.mxu0 0.0
    %1562 = vmatprep.subr.mxu0 0.0
    %1563 = vmatpush1.msra.mxu0 0.0
    %1564 = vmatprep.subr.mxu0 0.0
    %1565 = vmatpush1.msra.mxu0 0.0
    %1566 = vmatprep.subr.mxu0 0.0
    %1567 = vmatpush1.msra.mxu0 0.0
    %1568 = vmatprep.subr.mxu0 0.0
    %1569 = vmatpush1.msra.mxu0 0.0
    %1570 = vmatprep.subr.mxu0 0.0
    %1571 = vmatpush1.msra.mxu0 0.0
    %1572 = vmatprep.subr.mxu0 0.0
    %1573 = vmatpush1.msra.mxu0 0.0
    %1574 = vmatprep.subr.mxu0 0.0
    %1575 = vmatpush1.msra.mxu0 0.0
    %1576 = vmatprep.subr.mxu0 0.0
    %1577 = vmatpush1.msra.mxu0 0.0
    %1578 = vmatprep.subr.mxu0 0.0
    %1579 = vmatpush1.msra.mxu0 0.0
    %1580 = vmatprep.subr.mxu0 0.0
    %1581 = vmatpush1.msra.mxu0 0.0
    %1582 = vmatprep.subr.mxu0 0.0
    %1583 = vmatpush1.msra.mxu0 0.0
    %1584 = vmatprep.subr.mxu0 0.0
    %1585 = vmatpush1.msra.mxu0 0.0
    %1586 = vmatprep.subr.mxu0 0.0
    %1587 = vmatpush1.msra.mxu0 0.0
    %1588 = vmatprep.subr.mxu0 0.0
    %1589 = vmatpush1.msra.mxu0 0.0
    %1590 = vmatprep.mubr.f32.mxu0 0.0
    %1591 = vmatmul.mubr.f32.gmra.mrb[0].mxu0 %v1086
    %v1592 = vpop.f32.mrb[0].mxu0
    %v1593 = vadd.f32 %v106, %v1592
    %v1594 = vpop.f32.mrb[0].mxu0
    %1595 = vdwg.mxu0
    %v1596 = vadd.f32 %v1404, %v1522
    %v1597 = vxor.u32 %v1596, 2147483648
    %v1598 = vmul.f32 %v1597, 1.442695
    %v1599 = vpow.pop %v1598
    %v1600 = vadd.f32 %v1599, 1.0
    %v1601 = vrcp.pop %v1600
    %v1602 = vmul.f32 1.0, %v1601
    %v1603 = vadd.f32 %v1405, %v1524
    %v1604 = vxor.u32 %v1603, 2147483648
    %v1605 = vmul.f32 %v1604, 1.442695
    %v1606 = vpow.pop %v1605
    %v1607 = vadd.f32 %v1606, 1.0
    %v1608 = vrcp.pop %v1607
    %v1609 = vmul.f32 1.0, %v1608
    %v1610 = vmul.f32 %v1602, %v1593
    %v1611 = vadd.f32 %v1406, %v1610
    %v1612 = vtanh.pop %v1611
    %v1613 = vsub.f32 1.0, %v1609
    %v1614 = vmul.f32 %v1613, %v1612
    %v1615 = vmul.f32 %v1609, %v1086
    %v1616 = vadd.f32 %v1614, %v1615
    %v1617 = vld [vmem:[#allocation11] sm:$0xff]
    %v1618 = vld [vmem:[#allocation11 + $0x8] sm:$0xff]
    %v1619 = vld [vmem:[#allocation11 + $0x10] sm:$0xff]
    %v1620 = vld [vmem:[#allocation11 + $0x18] sm:$0xff]
    %v1621 = vld [vmem:[#allocation11 + $0x20] sm:$0xff]
    %v1622 = vld [vmem:[#allocation11 + $0x28] sm:$0xff]
    %v1623 = vld [vmem:[#allocation11 + $0x30] sm:$0xff]
    %v1624 = vld [vmem:[#allocation11 + $0x38] sm:$0xff]
    %v1625 = vld [vmem:[#allocation11 + $0x40] sm:$0xff]
    %v1626 = vld [vmem:[#allocation11 + $0x48] sm:$0xff]
    %v1627 = vld [vmem:[#allocation11 + $0x50] sm:$0xff]
    %v1628 = vld [vmem:[#allocation11 + $0x58] sm:$0xff]
    %v1629 = vld [vmem:[#allocation11 + $0x60] sm:$0xff]
    %v1630 = vld [vmem:[#allocation11 + $0x68] sm:$0xff]
    %v1631 = vld [vmem:[#allocation11 + $0x70] sm:$0xff]
    %v1632 = vld [vmem:[#allocation11 + $0x78] sm:$0xff]
    %1633 = vmatprep.subr.mxu0 0.0
    %1634 = vmatpush1.msra.mxu0 %v1617
    %1635 = vmatprep.subr.mxu0 0.0
    %1636 = vmatpush1.msra.mxu0 %v1618
    %1637 = vmatprep.subr.mxu0 0.0
    %1638 = vmatpush1.msra.mxu0 %v1619
    %1639 = vmatprep.subr.mxu0 0.0
    %1640 = vmatpush1.msra.mxu0 %v1620
    %1641 = vmatprep.subr.mxu0 0.0
    %1642 = vmatpush1.msra.mxu0 %v1621
    %1643 = vmatprep.subr.mxu0 0.0
    %1644 = vmatpush1.msra.mxu0 %v1622
    %1645 = vmatprep.subr.mxu0 0.0
    %1646 = vmatpush1.msra.mxu0 %v1623
    %1647 = vmatprep.subr.mxu0 0.0
    %1648 = vmatpush1.msra.mxu0 %v1624
    %1649 = vmatprep.subr.mxu0 0.0
    %1650 = vmatpush1.msra.mxu0 %v1625
    %1651 = vmatprep.subr.mxu0 0.0
    %1652 = vmatpush1.msra.mxu0 %v1626
    %1653 = vmatprep.subr.mxu0 0.0
    %1654 = vmatpush1.msra.mxu0 %v1627
    %1655 = vmatprep.subr.mxu0 0.0
    %1656 = vmatpush1.msra.mxu0 %v1628
    %1657 = vmatprep.subr.mxu0 0.0
    %1658 = vmatpush1.msra.mxu0 %v1629
    %1659 = vmatprep.subr.mxu0 0.0
    %1660 = vmatpush1.msra.mxu0 %v1630
    %1661 = vmatprep.subr.mxu0 0.0
    %1662 = vmatpush1.msra.mxu0 %v1631
    %1663 = vmatprep.subr.mxu0 0.0
    %1664 = vmatpush1.msra.mxu0 %v1632
    %1665 = vmatprep.subr.mxu0 0.0
    %1666 = vmatpush1.msra.mxu0 0.0
    %1667 = vmatprep.subr.mxu0 0.0
    %1668 = vmatpush1.msra.mxu0 0.0
    %1669 = vmatprep.subr.mxu0 0.0
    %1670 = vmatpush1.msra.mxu0 0.0
    %1671 = vmatprep.subr.mxu0 0.0
    %1672 = vmatpush1.msra.mxu0 0.0
    %1673 = vmatprep.subr.mxu0 0.0
    %1674 = vmatpush1.msra.mxu0 0.0
    %1675 = vmatprep.subr.mxu0 0.0
    %1676 = vmatpush1.msra.mxu0 0.0
    %1677 = vmatprep.subr.mxu0 0.0
    %1678 = vmatpush1.msra.mxu0 0.0
    %1679 = vmatprep.subr.mxu0 0.0
    %1680 = vmatpush1.msra.mxu0 0.0
    %1681 = vmatprep.subr.mxu0 0.0
    %1682 = vmatpush1.msra.mxu0 0.0
    %1683 = vmatprep.subr.mxu0 0.0
    %1684 = vmatpush1.msra.mxu0 0.0
    %1685 = vmatprep.subr.mxu0 0.0
    %1686 = vmatpush1.msra.mxu0 0.0
    %1687 = vmatprep.subr.mxu0 0.0
    %1688 = vmatpush1.msra.mxu0 0.0
    %1689 = vmatprep.subr.mxu0 0.0
    %1690 = vmatpush1.msra.mxu0 0.0
    %1691 = vmatprep.subr.mxu0 0.0
    %1692 = vmatpush1.msra.mxu0 0.0
    %1693 = vmatprep.subr.mxu0 0.0
    %1694 = vmatpush1.msra.mxu0 0.0
    %1695 = vmatprep.subr.mxu0 0.0
    %1696 = vmatpush1.msra.mxu0 0.0
    %1697 = vmatprep.mubr.f32.mxu0 0.0
    %1698 = vmatmul.mubr.f32.gmra.mrb[0].mxu0 %v1616
    %v1699 = vpop.f32.mrb[0].mxu0
    %v1700 = vadd.f32 %v115, %v1699
    %v1701 = vpop.f32.mrb[0].mxu0
    %1702 = vdwg.mxu0
    %s1703 = scalar_lea.vmem [#allocation13], 16
    %1704 = vst [vmem:[%s1703] sm:$0xff] %v1700
    %s1705 = sld [smem:[#allocation3 + $0x3]]
    %p1706 = scmp.eq.s32.totalorder %s1705, 1
    // Predicated region
    $region74: #{tpu_custom_call.1} parent=1 // pred_check
      %p1707 = pneg %p1706
    $region75: #{tpu_custom_call.1} parent=1 // pred_check_branch
      %1709 = sbr.rel (%p1707) target = $region77
    $region76: #{tpu_custom_call.1} parent=1 // pred_region
      %1710 = vmax.xlane.f32.xlu0 %v1700
      %v1711 = vpop.xlane.xlu0 %1710
      %vm1712 = vcmp.eq.f32.partialorder %v1700, %v1711
      %v1713 = vsel %vm1712, %v118, 128
      %v1714 = vand.u32 %v1713, 65535
      %v1715 = vshra.s32 %v1713, 16
      %v1716 = vcvt.s32.f32 %v1714
      %v1717 = vcvt.s32.f32 %v1715
      %1718 = vmin.xlane.f32.xlu0 %v1717
      %v1719 = vpop.xlane.xlu0 %1718
      %vm1720 = vcmp.eq.f32.partialorder %v1717, %v1719
      %v1721 = vsel %vm1720, %v1716, inf
      %1722 = vmin.xlane.f32.xlu0 %v1721
      %v1723 = vpop.xlane.xlu0 %1722
      %v1724 = vcvt.f32.s32 %v1723
      %v1725 = vcvt.f32.s32 %v1719
      %v1726 = vshll.u32 %v1725, 16
      %v1727 = vadd.s32 %v1726, %v1724
      %vm1728 = vcmp.eq.s32.totalorder %v118, %v1727
      %v1729 = vsel %vm1728, 1, 0
      %v1730 = vcvt.s32.f32 %v1729
      %v1731 = vld [vmem:[#allocation8] sm:$0xff]
      %v1732 = vld [vmem:[#allocation8 + $0x8] sm:$0xff]
      %v1733 = vld [vmem:[#allocation8 + $0x10] sm:$0xff]
      %v1734 = vld [vmem:[#allocation8 + $0x18] sm:$0xff]
      %v1735 = vld [vmem:[#allocation8 + $0x20] sm:$0xff]
      %v1736 = vld [vmem:[#allocation8 + $0x28] sm:$0xff]
      %v1737 = vld [vmem:[#allocation8 + $0x30] sm:$0xff]
      %v1738 = vld [vmem:[#allocation8 + $0x38] sm:$0xff]
      %v1739 = vld [vmem:[#allocation8 + $0x40] sm:$0xff]
      %v1740 = vld [vmem:[#allocation8 + $0x48] sm:$0xff]
      %v1741 = vld [vmem:[#allocation8 + $0x50] sm:$0xff]
      %v1742 = vld [vmem:[#allocation8 + $0x58] sm:$0xff]
      %v1743 = vld [vmem:[#allocation8 + $0x60] sm:$0xff]
      %v1744 = vld [vmem:[#allocation8 + $0x68] sm:$0xff]
      %v1745 = vld [vmem:[#allocation8 + $0x70] sm:$0xff]
      %v1746 = vld [vmem:[#allocation8 + $0x78] sm:$0xff]
      %v1747 = vld [vmem:[#allocation8 + $0x80] sm:$0xff]
      %v1748 = vld [vmem:[#allocation8 + $0x88] sm:$0xff]
      %v1749 = vld [vmem:[#allocation8 + $0x90] sm:$0xff]
      %v1750 = vld [vmem:[#allocation8 + $0x98] sm:$0xff]
      %v1751 = vld [vmem:[#allocation8 + $0xa0] sm:$0xff]
      %v1752 = vld [vmem:[#allocation8 + $0xa8] sm:$0xff]
      %v1753 = vld [vmem:[#allocation8 + $0xb0] sm:$0xff]
      %v1754 = vld [vmem:[#allocation8 + $0xb8] sm:$0xff]
      %v1755 = vld [vmem:[#allocation8 + $0xc0] sm:$0xff]
      %v1756 = vld [vmem:[#allocation8 + $0xc8] sm:$0xff]
      %v1757 = vld [vmem:[#allocation8 + $0xd0] sm:$0xff]
      %v1758 = vld [vmem:[#allocation8 + $0xd8] sm:$0xff]
      %v1759 = vld [vmem:[#allocation8 + $0xe0] sm:$0xff]
      %v1760 = vld [vmem:[#allocation8 + $0xe8] sm:$0xff]
      %v1761 = vld [vmem:[#allocation8 + $0xf0] sm:$0xff]
      %v1762 = vld [vmem:[#allocation8 + $0xf8] sm:$0xff]
      %v1763 = vld [vmem:[#allocation8 + $0x100] sm:$0xff]
      %v1764 = vld [vmem:[#allocation8 + $0x108] sm:$0xff]
      %v1765 = vld [vmem:[#allocation8 + $0x110] sm:$0xff]
      %v1766 = vld [vmem:[#allocation8 + $0x118] sm:$0xff]
      %v1767 = vld [vmem:[#allocation8 + $0x120] sm:$0xff]
      %v1768 = vld [vmem:[#allocation8 + $0x128] sm:$0xff]
      %v1769 = vld [vmem:[#allocation8 + $0x130] sm:$0xff]
      %v1770 = vld [vmem:[#allocation8 + $0x138] sm:$0xff]
      %v1771 = vld [vmem:[#allocation8 + $0x140] sm:$0xff]
      %v1772 = vld [vmem:[#allocation8 + $0x148] sm:$0xff]
      %v1773 = vld [vmem:[#allocation8 + $0x150] sm:$0xff]
      %v1774 = vld [vmem:[#allocation8 + $0x158] sm:$0xff]
      %v1775 = vld [vmem:[#allocation8 + $0x160] sm:$0xff]
      %v1776 = vld [vmem:[#allocation8 + $0x168] sm:$0xff]
      %v1777 = vld [vmem:[#allocation8 + $0x170] sm:$0xff]
      %v1778 = vld [vmem:[#allocation8 + $0x178] sm:$0xff]
      %1779 = vmatprep.subr.mxu0 %v1732
      %1780 = vmatpush1.msra.mxu0 %v1731
      %1781 = vmatprep.subr.mxu0 %v1735
      %1782 = vmatpush1.msra.mxu0 %v1734
      %1783 = vmatprep.subr.mxu0 %v1738
      %1784 = vmatpush1.msra.mxu0 %v1737
      %1785 = vmatprep.subr.mxu0 %v1741
      %1786 = vmatpush1.msra.mxu0 %v1740
      %1787 = vmatprep.subr.mxu0 %v1744
      %1788 = vmatpush1.msra.mxu0 %v1743
      %1789 = vmatprep.subr.mxu0 %v1747
      %1790 = vmatpush1.msra.mxu0 %v1746
      %1791 = vmatprep.subr.mxu0 %v1750
      %1792 = vmatpush1.msra.mxu0 %v1749
      %1793 = vmatprep.subr.mxu0 %v1753
      %1794 = vmatpush1.msra.mxu0 %v1752
      %1795 = vmatprep.subr.mxu0 %v1756
      %1796 = vmatpush1.msra.mxu0 %v1755
      %1797 = vmatprep.subr.mxu0 %v1759
      %1798 = vmatpush1.msra.mxu0 %v1758
      %1799 = vmatprep.subr.mxu0 %v1762
      %1800 = vmatpush1.msra.mxu0 %v1761
      %1801 = vmatprep.subr.mxu0 %v1765
      %1802 = vmatpush1.msra.mxu0 %v1764
      %1803 = vmatprep.subr.mxu0 %v1768
      %1804 = vmatpush1.msra.mxu0 %v1767
      %1805 = vmatprep.subr.mxu0 %v1771
      %1806 = vmatpush1.msra.mxu0 %v1770
      %1807 = vmatprep.subr.mxu0 %v1774
      %1808 = vmatpush1.msra.mxu0 %v1773
      %1809 = vmatprep.subr.mxu0 %v1777
      %1810 = vmatpush1.msra.mxu0 %v1776
      %1811 = vmatprep.subr.mxu0 0.0
      %1812 = vmatpush1.msra.mxu0 0.0
      %1813 = vmatprep.subr.mxu0 0.0
      %1814 = vmatpush1.msra.mxu0 0.0
      %1815 = vmatprep.subr.mxu0 0.0
      %1816 = vmatpush1.msra.mxu0 0.0
      %1817 = vmatprep.subr.mxu0 0.0
      %1818 = vmatpush1.msra.mxu0 0.0
      %1819 = vmatprep.subr.mxu0 0.0
      %1820 = vmatpush1.msra.mxu0 0.0
      %1821 = vmatprep.subr.mxu0 0.0
      %1822 = vmatpush1.msra.mxu0 0.0
      %1823 = vmatprep.subr.mxu0 0.0
      %1824 = vmatpush1.msra.mxu0 0.0
      %1825 = vmatprep.subr.mxu0 0.0
      %1826 = vmatpush1.msra.mxu0 0.0
      %1827 = vmatprep.subr.mxu0 0.0
      %1828 = vmatpush1.msra.mxu0 0.0
      %1829 = vmatprep.subr.mxu0 0.0
      %1830 = vmatpush1.msra.mxu0 0.0
      %1831 = vmatprep.subr.mxu0 0.0
      %1832 = vmatpush1.msra.mxu0 0.0
      %1833 = vmatprep.subr.mxu0 0.0
      %1834 = vmatpush1.msra.mxu0 0.0
      %1835 = vmatprep.subr.mxu0 0.0
      %1836 = vmatpush1.msra.mxu0 0.0
      %1837 = vmatprep.subr.mxu0 0.0
      %1838 = vmatpush1.msra.mxu0 0.0
      %1839 = vmatprep.subr.mxu0 0.0
      %1840 = vmatpush1.msra.mxu0 0.0
      %1841 = vmatprep.subr.mxu0 0.0
      %1842 = vmatpush1.msra.mxu0 0.0
      %1843 = vmatprep.mubr.f32.mxu0 0.0
      %1844 = vmatmul.mubr.f32.gmra.mrb[0].mxu0 %v1730
      %v1845 = vpop.f32.mrb[0].mxu0
      %v1846 = vadd.f32 0.0, %v1845
      %v1847 = vpop.f32.mrb[0].mxu0
      %v1848 = vadd.f32 0.0, %v1847
      %1849 = vdwg.mxu0
      %1850 = vmatprep.subr.mxu0 0.0
      %1851 = vmatpush1.msra.mxu0 %v1733
      %1852 = vmatprep.subr.mxu0 0.0
      %1853 = vmatpush1.msra.mxu0 %v1736
      %1854 = vmatprep.subr.mxu0 0.0
      %1855 = vmatpush1.msra.mxu0 %v1739
      %1856 = vmatprep.subr.mxu0 0.0
      %1857 = vmatpush1.msra.mxu0 %v1742
      %1858 = vmatprep.subr.mxu0 0.0
      %1859 = vmatpush1.msra.mxu0 %v1745
      %1860 = vmatprep.subr.mxu0 0.0
      %1861 = vmatpush1.msra.mxu0 %v1748
      %1862 = vmatprep.subr.mxu0 0.0
      %1863 = vmatpush1.msra.mxu0 %v1751
      %1864 = vmatprep.subr.mxu0 0.0
      %1865 = vmatpush1.msra.mxu0 %v1754
      %1866 = vmatprep.subr.mxu0 0.0
      %1867 = vmatpush1.msra.mxu0 %v1757
      %1868 = vmatprep.subr.mxu0 0.0
      %1869 = vmatpush1.msra.mxu0 %v1760
      %1870 = vmatprep.subr.mxu0 0.0
      %1871 = vmatpush1.msra.mxu0 %v1763
      %1872 = vmatprep.subr.mxu0 0.0
      %1873 = vmatpush1.msra.mxu0 %v1766
      %1874 = vmatprep.subr.mxu0 0.0
      %1875 = vmatpush1.msra.mxu0 %v1769
      %1876 = vmatprep.subr.mxu0 0.0
      %1877 = vmatpush1.msra.mxu0 %v1772
      %1878 = vmatprep.subr.mxu0 0.0
      %1879 = vmatpush1.msra.mxu0 %v1775
      %1880 = vmatprep.subr.mxu0 0.0
      %1881 = vmatpush1.msra.mxu0 %v1778
      %1882 = vmatprep.subr.mxu0 0.0
      %1883 = vmatpush1.msra.mxu0 0.0
      %1884 = vmatprep.subr.mxu0 0.0
      %1885 = vmatpush1.msra.mxu0 0.0
      %1886 = vmatprep.subr.mxu0 0.0
      %1887 = vmatpush1.msra.mxu0 0.0
      %1888 = vmatprep.subr.mxu0 0.0
      %1889 = vmatpush1.msra.mxu0 0.0
      %1890 = vmatprep.subr.mxu0 0.0
      %1891 = vmatpush1.msra.mxu0 0.0
      %1892 = vmatprep.subr.mxu0 0.0
      %1893 = vmatpush1.msra.mxu0 0.0
      %1894 = vmatprep.subr.mxu0 0.0
      %1895 = vmatpush1.msra.mxu0 0.0
      %1896 = vmatprep.subr.mxu0 0.0
      %1897 = vmatpush1.msra.mxu0 0.0
      %1898 = vmatprep.subr.mxu0 0.0
      %1899 = vmatpush1.msra.mxu0 0.0
      %1900 = vmatprep.subr.mxu0 0.0
      %1901 = vmatpush1.msra.mxu0 0.0
      %1902 = vmatprep.subr.mxu0 0.0
      %1903 = vmatpush1.msra.mxu0 0.0
      %1904 = vmatprep.subr.mxu0 0.0
      %1905 = vmatpush1.msra.mxu0 0.0
      %1906 = vmatprep.subr.mxu0 0.0
      %1907 = vmatpush1.msra.mxu0 0.0
      %1908 = vmatprep.subr.mxu0 0.0
      %1909 = vmatpush1.msra.mxu0 0.0
      %1910 = vmatprep.subr.mxu0 0.0
      %1911 = vmatpush1.msra.mxu0 0.0
      %1912 = vmatprep.subr.mxu0 0.0
      %1913 = vmatpush1.msra.mxu0 0.0
      %1914 = vmatprep.mubr.f32.mxu0 0.0
      %1915 = vmatmul.mubr.f32.gmra.mrb[0].mxu0 %v1730
      %v1916 = vpop.f32.mrb[0].mxu0
      %v1917 = vadd.f32 0.0, %v1916
      %v1918 = vpop.f32.mrb[0].mxu0
      %1919 = vdwg.mxu0
      %1920 = vst [vmem:[#allocation2] sm:$0xff] %v1846
      %1921 = vst [vmem:[#allocation2 + $0x8] sm:$0xff] %v1848
      %1922 = vst [vmem:[#allocation2 + $0x10] sm:$0xff] %v1917
    $region77: #{tpu_custom_call.1} parent=1 // pred_fallthru
      _
    %p1923 = scmp.eq.s32.totalorder %s1705, 0
    // Predicated region
    $region78: #{tpu_custom_call.1} parent=1 // pred_check
      %p1924 = pneg %p1923
    $region79: #{tpu_custom_call.1} parent=1 // pred_check_branch
      %1926 = sbr.rel (%p1924) target = $region81
    $region80: #{tpu_custom_call.1} parent=1 // pred_region
      %s1927 = scalar_lea.vmem [#allocation7], 72
      %v1928 = vld [vmem:[%s1927] sm:$0xff]
      %v1929 = vld [vmem:[%s1927 + $0x8] sm:$0xff]
      %v1930 = vld [vmem:[%s1927 + $0x10] sm:$0xff]
      %1931 = vst [vmem:[#allocation2] sm:$0xff] %v1928
      %1932 = vst [vmem:[#allocation2 + $0x8] sm:$0xff] %v1929
      %1933 = vst [vmem:[#allocation2 + $0x10] sm:$0xff] %v1930
    $region81: #{tpu_custom_call.1} parent=1 // pred_fallthru
      _
    %v1934 = vld [vmem:[#allocation2] sm:$0xff]
    %v1935 = vld [vmem:[#allocation2 + $0x8] sm:$0xff]
    %v1936 = vld [vmem:[#allocation2 + $0x10] sm:$0xff]
    %v1937 = vld [vmem:[#allocation10] sm:$0xff]
    %v1938 = vld [vmem:[#allocation10 + $0x8] sm:$0xff]
    %v1939 = vld [vmem:[#allocation10 + $0x10] sm:$0xff]
    %v1940 = vld [vmem:[#allocation10 + $0x18] sm:$0xff]
    %v1941 = vld [vmem:[#allocation10 + $0x20] sm:$0xff]
    %v1942 = vld [vmem:[#allocation10 + $0x28] sm:$0xff]
    %v1943 = vld [vmem:[#allocation10 + $0x30] sm:$0xff]
    %v1944 = vld [vmem:[#allocation10 + $0x38] sm:$0xff]
    %v1945 = vld [vmem:[#allocation10 + $0x40] sm:$0xff]
    %v1946 = vld [vmem:[#allocation10 + $0x48] sm:$0xff]
    %v1947 = vld [vmem:[#allocation10 + $0x50] sm:$0xff]
    %v1948 = vld [vmem:[#allocation10 + $0x58] sm:$0xff]
    %v1949 = vld [vmem:[#allocation10 + $0x60] sm:$0xff]
    %v1950 = vld [vmem:[#allocation10 + $0x68] sm:$0xff]
    %v1951 = vld [vmem:[#allocation10 + $0x70] sm:$0xff]
    %v1952 = vld [vmem:[#allocation10 + $0x78] sm:$0xff]
    %v1953 = vld [vmem:[#allocation10 + $0x80] sm:$0xff]
    %v1954 = vld [vmem:[#allocation10 + $0x88] sm:$0xff]
    %v1955 = vld [vmem:[#allocation10 + $0x90] sm:$0xff]
    %v1956 = vld [vmem:[#allocation10 + $0x98] sm:$0xff]
    %v1957 = vld [vmem:[#allocation10 + $0xa0] sm:$0xff]
    %v1958 = vld [vmem:[#allocation10 + $0xa8] sm:$0xff]
    %v1959 = vld [vmem:[#allocation10 + $0xb0] sm:$0xff]
    %v1960 = vld [vmem:[#allocation10 + $0xb8] sm:$0xff]
    %v1961 = vld [vmem:[#allocation10 + $0xc0] sm:$0xff]
    %v1962 = vld [vmem:[#allocation10 + $0xc8] sm:$0xff]
    %v1963 = vld [vmem:[#allocation10 + $0xd0] sm:$0xff]
    %v1964 = vld [vmem:[#allocation10 + $0xd8] sm:$0xff]
    %v1965 = vld [vmem:[#allocation10 + $0xe0] sm:$0xff]
    %v1966 = vld [vmem:[#allocation10 + $0xe8] sm:$0xff]
    %v1967 = vld [vmem:[#allocation10 + $0xf0] sm:$0xff]
    %v1968 = vld [vmem:[#allocation10 + $0xf8] sm:$0xff]
    %v1969 = vld [vmem:[#allocation10 + $0x100] sm:$0xff]
    %v1970 = vld [vmem:[#allocation10 + $0x108] sm:$0xff]
    %v1971 = vld [vmem:[#allocation10 + $0x110] sm:$0xff]
    %v1972 = vld [vmem:[#allocation10 + $0x118] sm:$0xff]
    %v1973 = vld [vmem:[#allocation10 + $0x120] sm:$0xff]
    %v1974 = vld [vmem:[#allocation10 + $0x128] sm:$0xff]
    %v1975 = vld [vmem:[#allocation10 + $0x130] sm:$0xff]
    %v1976 = vld [vmem:[#allocation10 + $0x138] sm:$0xff]
    %v1977 = vld [vmem:[#allocation10 + $0x140] sm:$0xff]
    %v1978 = vld [vmem:[#allocation10 + $0x148] sm:$0xff]
    %v1979 = vld [vmem:[#allocation10 + $0x150] sm:$0xff]
    %v1980 = vld [vmem:[#allocation10 + $0x158] sm:$0xff]
    %v1981 = vld [vmem:[#allocation10 + $0x160] sm:$0xff]
    %v1982 = vld [vmem:[#allocation10 + $0x168] sm:$0xff]
    %v1983 = vld [vmem:[#allocation10 + $0x170] sm:$0xff]
    %v1984 = vld [vmem:[#allocation10 + $0x178] sm:$0xff]
    %1985 = vmatprep.subr.mxu0 %v1938
    %1986 = vmatpush1.msra.mxu0 %v1937
    %1987 = vmatprep.subr.mxu0 %v1941
    %1988 = vmatpush1.msra.mxu0 %v1940
    %1989 = vmatprep.subr.mxu0 %v1944
    %1990 = vmatpush1.msra.mxu0 %v1943
    %1991 = vmatprep.subr.mxu0 %v1947
    %1992 = vmatpush1.msra.mxu0 %v1946
    %1993 = vmatprep.subr.mxu0 %v1950
    %1994 = vmatpush1.msra.mxu0 %v1949
    %1995 = vmatprep.subr.mxu0 %v1953
    %1996 = vmatpush1.msra.mxu0 %v1952
    %1997 = vmatprep.subr.mxu0 %v1956
    %1998 = vmatpush1.msra.mxu0 %v1955
    %1999 = vmatprep.subr.mxu0 %v1959
    %2000 = vmatpush1.msra.mxu0 %v1958
    %2001 = vmatprep.subr.mxu0 %v1962
    %2002 = vmatpush1.msra.mxu0 %v1961
    %2003 = vmatprep.subr.mxu0 %v1965
    %2004 = vmatpush1.msra.mxu0 %v1964
    %2005 = vmatprep.subr.mxu0 %v1968
    %2006 = vmatpush1.msra.mxu0 %v1967
    %2007 = vmatprep.subr.mxu0 %v1971
    %2008 = vmatpush1.msra.mxu0 %v1970
    %2009 = vmatprep.subr.mxu0 %v1974
    %2010 = vmatpush1.msra.mxu0 %v1973
    %2011 = vmatprep.subr.mxu0 %v1977
    %2012 = vmatpush1.msra.mxu0 %v1976
    %2013 = vmatprep.subr.mxu0 %v1980
    %2014 = vmatpush1.msra.mxu0 %v1979
    %2015 = vmatprep.subr.mxu0 %v1983
    %2016 = vmatpush1.msra.mxu0 %v1982
    %2017 = vmatprep.subr.mxu0 0.0
    %2018 = vmatpush1.msra.mxu0 0.0
    %2019 = vmatprep.subr.mxu0 0.0
    %2020 = vmatpush1.msra.mxu0 0.0
    %2021 = vmatprep.subr.mxu0 0.0
    %2022 = vmatpush1.msra.mxu0 0.0
    %2023 = vmatprep.subr.mxu0 0.0
    %2024 = vmatpush1.msra.mxu0 0.0
    %2025 = vmatprep.subr.mxu0 0.0
    %2026 = vmatpush1.msra.mxu0 0.0
    %2027 = vmatprep.subr.mxu0 0.0
    %2028 = vmatpush1.msra.mxu0 0.0
    %2029 = vmatprep.subr.mxu0 0.0
    %2030 = vmatpush1.msra.mxu0 0.0
    %2031 = vmatprep.subr.mxu0 0.0
    %2032 = vmatpush1.msra.mxu0 0.0
    %2033 = vmatprep.subr.mxu0 0.0
    %2034 = vmatpush1.msra.mxu0 0.0
    %2035 = vmatprep.subr.mxu0 0.0
    %2036 = vmatpush1.msra.mxu0 0.0
    %2037 = vmatprep.subr.mxu0 0.0
    %2038 = vmatpush1.msra.mxu0 0.0
    %2039 = vmatprep.subr.mxu0 0.0
    %2040 = vmatpush1.msra.mxu0 0.0
    %2041 = vmatprep.subr.mxu0 0.0
    %2042 = vmatpush1.msra.mxu0 0.0
    %2043 = vmatprep.subr.mxu0 0.0
    %2044 = vmatpush1.msra.mxu0 0.0
    %2045 = vmatprep.subr.mxu0 0.0
    %2046 = vmatpush1.msra.mxu0 0.0
    %2047 = vmatprep.subr.mxu0 0.0
    %2048 = vmatpush1.msra.mxu0 0.0
    %2049 = vmatprep.mubr.f32.mxu0 0.0
    %2050 = vmatmul.mubr.f32.gmra.mrb[0].mxu0 %v1616
    %v2051 = vpop.f32.mrb[0].mxu0
    %v2052 = vadd.f32 %v98, %v2051
    %v2053 = vpop.f32.mrb[0].mxu0
    %v2054 = vadd.f32 %v102, %v2053
    %2055 = vdwg.mxu0
    %2056 = vmatprep.subr.mxu0 0.0
    %2057 = vmatpush1.msra.mxu0 %v1939
    %2058 = vmatprep.subr.mxu0 0.0
    %2059 = vmatpush1.msra.mxu0 %v1942
    %2060 = vmatprep.subr.mxu0 0.0
    %2061 = vmatpush1.msra.mxu0 %v1945
    %2062 = vmatprep.subr.mxu0 0.0
    %2063 = vmatpush1.msra.mxu0 %v1948
    %2064 = vmatprep.subr.mxu0 0.0
    %2065 = vmatpush1.msra.mxu0 %v1951
    %2066 = vmatprep.subr.mxu0 0.0
    %2067 = vmatpush1.msra.mxu0 %v1954
    %2068 = vmatprep.subr.mxu0 0.0
    %2069 = vmatpush1.msra.mxu0 %v1957
    %2070 = vmatprep.subr.mxu0 0.0
    %2071 = vmatpush1.msra.mxu0 %v1960
    %2072 = vmatprep.subr.mxu0 0.0
    %2073 = vmatpush1.msra.mxu0 %v1963
    %2074 = vmatprep.subr.mxu0 0.0
    %2075 = vmatpush1.msra.mxu0 %v1966
    %2076 = vmatprep.subr.mxu0 0.0
    %2077 = vmatpush1.msra.mxu0 %v1969
    %2078 = vmatprep.subr.mxu0 0.0
    %2079 = vmatpush1.msra.mxu0 %v1972
    %2080 = vmatprep.subr.mxu0 0.0
    %2081 = vmatpush1.msra.mxu0 %v1975
    %2082 = vmatprep.subr.mxu0 0.0
    %2083 = vmatpush1.msra.mxu0 %v1978
    %2084 = vmatprep.subr.mxu0 0.0
    %2085 = vmatpush1.msra.mxu0 %v1981
    %2086 = vmatprep.subr.mxu0 0.0
    %2087 = vmatpush1.msra.mxu0 %v1984
    %2088 = vmatprep.subr.mxu0 0.0
    %2089 = vmatpush1.msra.mxu0 0.0
    %2090 = vmatprep.subr.mxu0 0.0
    %2091 = vmatpush1.msra.mxu0 0.0
    %2092 = vmatprep.subr.mxu0 0.0
    %2093 = vmatpush1.msra.mxu0 0.0
    %2094 = vmatprep.subr.mxu0 0.0
    %2095 = vmatpush1.msra.mxu0 0.0
    %2096 = vmatprep.subr.mxu0 0.0
    %2097 = vmatpush1.msra.mxu0 0.0
    %2098 = vmatprep.subr.mxu0 0.0
    %2099 = vmatpush1.msra.mxu0 0.0
    %2100 = vmatprep.subr.mxu0 0.0
    %2101 = vmatpush1.msra.mxu0 0.0
    %2102 = vmatprep.subr.mxu0 0.0
    %2103 = vmatpush1.msra.mxu0 0.0
    %2104 = vmatprep.subr.mxu0 0.0
    %2105 = vmatpush1.msra.mxu0 0.0
    %2106 = vmatprep.subr.mxu0 0.0
    %2107 = vmatpush1.msra.mxu0 0.0
    %2108 = vmatprep.subr.mxu0 0.0
    %2109 = vmatpush1.msra.mxu0 0.0
    %2110 = vmatprep.subr.mxu0 0.0
    %2111 = vmatpush1.msra.mxu0 0.0
    %2112 = vmatprep.subr.mxu0 0.0
    %2113 = vmatpush1.msra.mxu0 0.0
    %2114 = vmatprep.subr.mxu0 0.0
    %2115 = vmatpush1.msra.mxu0 0.0
    %2116 = vmatprep.subr.mxu0 0.0
    %2117 = vmatpush1.msra.mxu0 0.0
    %2118 = vmatprep.subr.mxu0 0.0
    %2119 = vmatpush1.msra.mxu0 0.0
    %2120 = vmatprep.mubr.f32.mxu0 0.0
    %2121 = vmatmul.mubr.f32.gmra.mrb[0].mxu0 %v1616
    %v2122 = vpop.f32.mrb[0].mxu0
    %v2123 = vadd.f32 %v106, %v2122
    %v2124 = vpop.f32.mrb[0].mxu0
    %2125 = vdwg.mxu0
    %v2126 = vadd.f32 %v1934, %v2052
    %v2127 = vxor.u32 %v2126, 2147483648
    %v2128 = vmul.f32 %v2127, 1.442695
    %v2129 = vpow.pop %v2128
    %v2130 = vadd.f32 %v2129, 1.0
    %v2131 = vrcp.pop %v2130
    %v2132 = vmul.f32 1.0, %v2131
    %v2133 = vadd.f32 %v1935, %v2054
    %v2134 = vxor.u32 %v2133, 2147483648
    %v2135 = vmul.f32 %v2134, 1.442695
    %v2136 = vpow.pop %v2135
    %v2137 = vadd.f32 %v2136, 1.0
    %v2138 = vrcp.pop %v2137
    %v2139 = vmul.f32 1.0, %v2138
    %v2140 = vmul.f32 %v2132, %v2123
    %v2141 = vadd.f32 %v1936, %v2140
    %v2142 = vtanh.pop %v2141
    %v2143 = vsub.f32 1.0, %v2139
    %v2144 = vmul.f32 %v2143, %v2142
    %v2145 = vmul.f32 %v2139, %v1616
    %v2146 = vadd.f32 %v2144, %v2145
    %v2147 = vld [vmem:[#allocation11] sm:$0xff]
    %v2148 = vld [vmem:[#allocation11 + $0x8] sm:$0xff]
    %v2149 = vld [vmem:[#allocation11 + $0x10] sm:$0xff]
    %v2150 = vld [vmem:[#allocation11 + $0x18] sm:$0xff]
    %v2151 = vld [vmem:[#allocation11 + $0x20] sm:$0xff]
    %v2152 = vld [vmem:[#allocation11 + $0x28] sm:$0xff]
    %v2153 = vld [vmem:[#allocation11 + $0x30] sm:$0xff]
    %v2154 = vld [vmem:[#allocation11 + $0x38] sm:$0xff]
    %v2155 = vld [vmem:[#allocation11 + $0x40] sm:$0xff]
    %v2156 = vld [vmem:[#allocation11 + $0x48] sm:$0xff]
    %v2157 = vld [vmem:[#allocation11 + $0x50] sm:$0xff]
    %v2158 = vld [vmem:[#allocation11 + $0x58] sm:$0xff]
    %v2159 = vld [vmem:[#allocation11 + $0x60] sm:$0xff]
    %v2160 = vld [vmem:[#allocation11 + $0x68] sm:$0xff]
    %v2161 = vld [vmem:[#allocation11 + $0x70] sm:$0xff]
    %v2162 = vld [vmem:[#allocation11 + $0x78] sm:$0xff]
    %2163 = vmatprep.subr.mxu0 0.0
    %2164 = vmatpush1.msra.mxu0 %v2147
    %2165 = vmatprep.subr.mxu0 0.0
    %2166 = vmatpush1.msra.mxu0 %v2148
    %2167 = vmatprep.subr.mxu0 0.0
    %2168 = vmatpush1.msra.mxu0 %v2149
    %2169 = vmatprep.subr.mxu0 0.0
    %2170 = vmatpush1.msra.mxu0 %v2150
    %2171 = vmatprep.subr.mxu0 0.0
    %2172 = vmatpush1.msra.mxu0 %v2151
    %2173 = vmatprep.subr.mxu0 0.0
    %2174 = vmatpush1.msra.mxu0 %v2152
    %2175 = vmatprep.subr.mxu0 0.0
    %2176 = vmatpush1.msra.mxu0 %v2153
    %2177 = vmatprep.subr.mxu0 0.0
    %2178 = vmatpush1.msra.mxu0 %v2154
    %2179 = vmatprep.subr.mxu0 0.0
    %2180 = vmatpush1.msra.mxu0 %v2155
    %2181 = vmatprep.subr.mxu0 0.0
    %2182 = vmatpush1.msra.mxu0 %v2156
    %2183 = vmatprep.subr.mxu0 0.0
    %2184 = vmatpush1.msra.mxu0 %v2157
    %2185 = vmatprep.subr.mxu0 0.0
    %2186 = vmatpush1.msra.mxu0 %v2158
    %2187 = vmatprep.subr.mxu0 0.0
    %2188 = vmatpush1.msra.mxu0 %v2159
    %2189 = vmatprep.subr.mxu0 0.0
    %2190 = vmatpush1.msra.mxu0 %v2160
    %2191 = vmatprep.subr.mxu0 0.0
    %2192 = vmatpush1.msra.mxu0 %v2161
    %2193 = vmatprep.subr.mxu0 0.0
    %2194 = vmatpush1.msra.mxu0 %v2162
    %2195 = vmatprep.subr.mxu0 0.0
    %2196 = vmatpush1.msra.mxu0 0.0
    %2197 = vmatprep.subr.mxu0 0.0
    %2198 = vmatpush1.msra.mxu0 0.0
    %2199 = vmatprep.subr.mxu0 0.0
    %2200 = vmatpush1.msra.mxu0 0.0
    %2201 = vmatprep.subr.mxu0 0.0
    %2202 = vmatpush1.msra.mxu0 0.0
    %2203 = vmatprep.subr.mxu0 0.0
    %2204 = vmatpush1.msra.mxu0 0.0
    %2205 = vmatprep.subr.mxu0 0.0
    %2206 = vmatpush1.msra.mxu0 0.0
    %2207 = vmatprep.subr.mxu0 0.0
    %2208 = vmatpush1.msra.mxu0 0.0
    %2209 = vmatprep.subr.mxu0 0.0
    %2210 = vmatpush1.msra.mxu0 0.0
    %2211 = vmatprep.subr.mxu0 0.0
    %2212 = vmatpush1.msra.mxu0 0.0
    %2213 = vmatprep.subr.mxu0 0.0
    %2214 = vmatpush1.msra.mxu0 0.0
    %2215 = vmatprep.subr.mxu0 0.0
    %2216 = vmatpush1.msra.mxu0 0.0
    %2217 = vmatprep.subr.mxu0 0.0
    %2218 = vmatpush1.msra.mxu0 0.0
    %2219 = vmatprep.subr.mxu0 0.0
    %2220 = vmatpush1.msra.mxu0 0.0
    %2221 = vmatprep.subr.mxu0 0.0
    %2222 = vmatpush1.msra.mxu0 0.0
    %2223 = vmatprep.subr.mxu0 0.0
    %2224 = vmatpush1.msra.mxu0 0.0
    %2225 = vmatprep.subr.mxu0 0.0
    %2226 = vmatpush1.msra.mxu0 0.0
    %2227 = vmatprep.mubr.f32.mxu0 0.0
    %2228 = vmatmul.mubr.f32.gmra.mrb[0].mxu0 %v2146
    %v2229 = vpop.f32.mrb[0].mxu0
    %v2230 = vadd.f32 %v115, %v2229
    %v2231 = vpop.f32.mrb[0].mxu0
    %2232 = vdwg.mxu0
    %s2233 = scalar_lea.vmem [#allocation13], 24
    %2234 = vst [vmem:[%s2233] sm:$0xff] %v2230
    %s2235 = sld [smem:[#allocation3 + $0x4]]
    %p2236 = scmp.eq.s32.totalorder %s2235, 1
    // Predicated region
    $region82: #{tpu_custom_call.1} parent=1 // pred_check
      %p2237 = pneg %p2236
    $region83: #{tpu_custom_call.1} parent=1 // pred_check_branch
      %2239 = sbr.rel (%p2237) target = $region85
    $region84: #{tpu_custom_call.1} parent=1 // pred_region
      %2240 = vmax.xlane.f32.xlu0 %v2230
      %v2241 = vpop.xlane.xlu0 %2240
      %vm2242 = vcmp.eq.f32.partialorder %v2230, %v2241
      %v2243 = vsel %vm2242, %v118, 128
      %v2244 = vand.u32 %v2243, 65535
      %v2245 = vshra.s32 %v2243, 16
      %v2246 = vcvt.s32.f32 %v2244
      %v2247 = vcvt.s32.f32 %v2245
      %2248 = vmin.xlane.f32.xlu0 %v2247
      %v2249 = vpop.xlane.xlu0 %2248
      %vm2250 = vcmp.eq.f32.partialorder %v2247, %v2249
      %v2251 = vsel %vm2250, %v2246, inf
      %2252 = vmin.xlane.f32.xlu0 %v2251
      %v2253 = vpop.xlane.xlu0 %2252
      %v2254 = vcvt.f32.s32 %v2253
      %v2255 = vcvt.f32.s32 %v2249
      %v2256 = vshll.u32 %v2255, 16
      %v2257 = vadd.s32 %v2256, %v2254
      %vm2258 = vcmp.eq.s32.totalorder %v118, %v2257
      %v2259 = vsel %vm2258, 1, 0
      %v2260 = vcvt.s32.f32 %v2259
      %v2261 = vld [vmem:[#allocation8] sm:$0xff]
      %v2262 = vld [vmem:[#allocation8 + $0x8] sm:$0xff]
      %v2263 = vld [vmem:[#allocation8 + $0x10] sm:$0xff]
      %v2264 = vld [vmem:[#allocation8 + $0x18] sm:$0xff]
      %v2265 = vld [vmem:[#allocation8 + $0x20] sm:$0xff]
      %v2266 = vld [vmem:[#allocation8 + $0x28] sm:$0xff]
      %v2267 = vld [vmem:[#allocation8 + $0x30] sm:$0xff]
      %v2268 = vld [vmem:[#allocation8 + $0x38] sm:$0xff]
      %v2269 = vld [vmem:[#allocation8 + $0x40] sm:$0xff]
      %v2270 = vld [vmem:[#allocation8 + $0x48] sm:$0xff]
      %v2271 = vld [vmem:[#allocation8 + $0x50] sm:$0xff]
      %v2272 = vld [vmem:[#allocation8 + $0x58] sm:$0xff]
      %v2273 = vld [vmem:[#allocation8 + $0x60] sm:$0xff]
      %v2274 = vld [vmem:[#allocation8 + $0x68] sm:$0xff]
      %v2275 = vld [vmem:[#allocation8 + $0x70] sm:$0xff]
      %v2276 = vld [vmem:[#allocation8 + $0x78] sm:$0xff]
      %v2277 = vld [vmem:[#allocation8 + $0x80] sm:$0xff]
      %v2278 = vld [vmem:[#allocation8 + $0x88] sm:$0xff]
      %v2279 = vld [vmem:[#allocation8 + $0x90] sm:$0xff]
      %v2280 = vld [vmem:[#allocation8 + $0x98] sm:$0xff]
      %v2281 = vld [vmem:[#allocation8 + $0xa0] sm:$0xff]
      %v2282 = vld [vmem:[#allocation8 + $0xa8] sm:$0xff]
      %v2283 = vld [vmem:[#allocation8 + $0xb0] sm:$0xff]
      %v2284 = vld [vmem:[#allocation8 + $0xb8] sm:$0xff]
      %v2285 = vld [vmem:[#allocation8 + $0xc0] sm:$0xff]
      %v2286 = vld [vmem:[#allocation8 + $0xc8] sm:$0xff]
      %v2287 = vld [vmem:[#allocation8 + $0xd0] sm:$0xff]
      %v2288 = vld [vmem:[#allocation8 + $0xd8] sm:$0xff]
      %v2289 = vld [vmem:[#allocation8 + $0xe0] sm:$0xff]
      %v2290 = vld [vmem:[#allocation8 + $0xe8] sm:$0xff]
      %v2291 = vld [vmem:[#allocation8 + $0xf0] sm:$0xff]
      %v2292 = vld [vmem:[#allocation8 + $0xf8] sm:$0xff]
      %v2293 = vld [vmem:[#allocation8 + $0x100] sm:$0xff]
      %v2294 = vld [vmem:[#allocation8 + $0x108] sm:$0xff]
      %v2295 = vld [vmem:[#allocation8 + $0x110] sm:$0xff]
      %v2296 = vld [vmem:[#allocation8 + $0x118] sm:$0xff]
      %v2297 = vld [vmem:[#allocation8 + $0x120] sm:$0xff]
      %v2298 = vld [vmem:[#allocation8 + $0x128] sm:$0xff]
      %v2299 = vld [vmem:[#allocation8 + $0x130] sm:$0xff]
      %v2300 = vld [vmem:[#allocation8 + $0x138] sm:$0xff]
      %v2301 = vld [vmem:[#allocation8 + $0x140] sm:$0xff]
      %v2302 = vld [vmem:[#allocation8 + $0x148] sm:$0xff]
      %v2303 = vld [vmem:[#allocation8 + $0x150] sm:$0xff]
      %v2304 = vld [vmem:[#allocation8 + $0x158] sm:$0xff]
      %v2305 = vld [vmem:[#allocation8 + $0x160] sm:$0xff]
      %v2306 = vld [vmem:[#allocation8 + $0x168] sm:$0xff]
      %v2307 = vld [vmem:[#allocation8 + $0x170] sm:$0xff]
      %v2308 = vld [vmem:[#allocation8 + $0x178] sm:$0xff]
      %2309 = vmatprep.subr.mxu0 %v2262
      %2310 = vmatpush1.msra.mxu0 %v2261
      %2311 = vmatprep.subr.mxu0 %v2265
      %2312 = vmatpush1.msra.mxu0 %v2264
      %2313 = vmatprep.subr.mxu0 %v2268
      %2314 = vmatpush1.msra.mxu0 %v2267
      %2315 = vmatprep.subr.mxu0 %v2271
      %2316 = vmatpush1.msra.mxu0 %v2270
      %2317 = vmatprep.subr.mxu0 %v2274
      %2318 = vmatpush1.msra.mxu0 %v2273
      %2319 = vmatprep.subr.mxu0 %v2277
      %2320 = vmatpush1.msra.mxu0 %v2276
      %2321 = vmatprep.subr.mxu0 %v2280
      %2322 = vmatpush1.msra.mxu0 %v2279
      %2323 = vmatprep.subr.mxu0 %v2283
      %2324 = vmatpush1.msra.mxu0 %v2282
      %2325 = vmatprep.subr.mxu0 %v2286
      %2326 = vmatpush1.msra.mxu0 %v2285
      %2327 = vmatprep.subr.mxu0 %v2289
      %2328 = vmatpush1.msra.mxu0 %v2288
      %2329 = vmatprep.subr.mxu0 %v2292
      %2330 = vmatpush1.msra.mxu0 %v2291
      %2331 = vmatprep.subr.mxu0 %v2295
      %2332 = vmatpush1.msra.mxu0 %v2294
      %2333 = vmatprep.subr.mxu0 %v2298
      %2334 = vmatpush1.msra.mxu0 %v2297
      %2335 = vmatprep.subr.mxu0 %v2301
      %2336 = vmatpush1.msra.mxu0 %v2300
      %2337 = vmatprep.subr.mxu0 %v2304
      %2338 = vmatpush1.msra.mxu0 %v2303
      %2339 = vmatprep.subr.mxu0 %v2307
      %2340 = vmatpush1.msra.mxu0 %v2306
      %2341 = vmatprep.subr.mxu0 0.0
      %2342 = vmatpush1.msra.mxu0 0.0
      %2343 = vmatprep.subr.mxu0 0.0
      %2344 = vmatpush1.msra.mxu0 0.0
      %2345 = vmatprep.subr.mxu0 0.0
      %2346 = vmatpush1.msra.mxu0 0.0
      %2347 = vmatprep.subr.mxu0 0.0
      %2348 = vmatpush1.msra.mxu0 0.0
      %2349 = vmatprep.subr.mxu0 0.0
      %2350 = vmatpush1.msra.mxu0 0.0
      %2351 = vmatprep.subr.mxu0 0.0
      %2352 = vmatpush1.msra.mxu0 0.0
      %2353 = vmatprep.subr.mxu0 0.0
      %2354 = vmatpush1.msra.mxu0 0.0
      %2355 = vmatprep.subr.mxu0 0.0
      %2356 = vmatpush1.msra.mxu0 0.0
      %2357 = vmatprep.subr.mxu0 0.0
      %2358 = vmatpush1.msra.mxu0 0.0
      %2359 = vmatprep.subr.mxu0 0.0
      %2360 = vmatpush1.msra.mxu0 0.0
      %2361 = vmatprep.subr.mxu0 0.0
      %2362 = vmatpush1.msra.mxu0 0.0
      %2363 = vmatprep.subr.mxu0 0.0
      %2364 = vmatpush1.msra.mxu0 0.0
      %2365 = vmatprep.subr.mxu0 0.0
      %2366 = vmatpush1.msra.mxu0 0.0
      %2367 = vmatprep.subr.mxu0 0.0
      %2368 = vmatpush1.msra.mxu0 0.0
      %2369 = vmatprep.subr.mxu0 0.0
      %2370 = vmatpush1.msra.mxu0 0.0
      %2371 = vmatprep.subr.mxu0 0.0
      %2372 = vmatpush1.msra.mxu0 0.0
      %2373 = vmatprep.mubr.f32.mxu0 0.0
      %2374 = vmatmul.mubr.f32.gmra.mrb[0].mxu0 %v2260
      %v2375 = vpop.f32.mrb[0].mxu0
      %v2376 = vadd.f32 0.0, %v2375
      %v2377 = vpop.f32.mrb[0].mxu0
      %v2378 = vadd.f32 0.0, %v2377
      %2379 = vdwg.mxu0
      %2380 = vmatprep.subr.mxu0 0.0
      %2381 = vmatpush1.msra.mxu0 %v2263
      %2382 = vmatprep.subr.mxu0 0.0
      %2383 = vmatpush1.msra.mxu0 %v2266
      %2384 = vmatprep.subr.mxu0 0.0
      %2385 = vmatpush1.msra.mxu0 %v2269
      %2386 = vmatprep.subr.mxu0 0.0
      %2387 = vmatpush1.msra.mxu0 %v2272
      %2388 = vmatprep.subr.mxu0 0.0
      %2389 = vmatpush1.msra.mxu0 %v2275
      %2390 = vmatprep.subr.mxu0 0.0
      %2391 = vmatpush1.msra.mxu0 %v2278
      %2392 = vmatprep.subr.mxu0 0.0
      %2393 = vmatpush1.msra.mxu0 %v2281
      %2394 = vmatprep.subr.mxu0 0.0
      %2395 = vmatpush1.msra.mxu0 %v2284
      %2396 = vmatprep.subr.mxu0 0.0
      %2397 = vmatpush1.msra.mxu0 %v2287
      %2398 = vmatprep.subr.mxu0 0.0
      %2399 = vmatpush1.msra.mxu0 %v2290
      %2400 = vmatprep.subr.mxu0 0.0
      %2401 = vmatpush1.msra.mxu0 %v2293
      %2402 = vmatprep.subr.mxu0 0.0
      %2403 = vmatpush1.msra.mxu0 %v2296
      %2404 = vmatprep.subr.mxu0 0.0
      %2405 = vmatpush1.msra.mxu0 %v2299
      %2406 = vmatprep.subr.mxu0 0.0
      %2407 = vmatpush1.msra.mxu0 %v2302
      %2408 = vmatprep.subr.mxu0 0.0
      %2409 = vmatpush1.msra.mxu0 %v2305
      %2410 = vmatprep.subr.mxu0 0.0
      %2411 = vmatpush1.msra.mxu0 %v2308
      %2412 = vmatprep.subr.mxu0 0.0
      %2413 = vmatpush1.msra.mxu0 0.0
      %2414 = vmatprep.subr.mxu0 0.0
      %2415 = vmatpush1.msra.mxu0 0.0
      %2416 = vmatprep.subr.mxu0 0.0
      %2417 = vmatpush1.msra.mxu0 0.0
      %2418 = vmatprep.subr.mxu0 0.0
      %2419 = vmatpush1.msra.mxu0 0.0
      %2420 = vmatprep.subr.mxu0 0.0
      %2421 = vmatpush1.msra.mxu0 0.0
      %2422 = vmatprep.subr.mxu0 0.0
      %2423 = vmatpush1.msra.mxu0 0.0
      %2424 = vmatprep.subr.mxu0 0.0
      %2425 = vmatpush1.msra.mxu0 0.0
      %2426 = vmatprep.subr.mxu0 0.0
      %2427 = vmatpush1.msra.mxu0 0.0
      %2428 = vmatprep.subr.mxu0 0.0
      %2429 = vmatpush1.msra.mxu0 0.0
      %2430 = vmatprep.subr.mxu0 0.0
      %2431 = vmatpush1.msra.mxu0 0.0
      %2432 = vmatprep.subr.mxu0 0.0
      %2433 = vmatpush1.msra.mxu0 0.0
      %2434 = vmatprep.subr.mxu0 0.0
      %2435 = vmatpush1.msra.mxu0 0.0
      %2436 = vmatprep.subr.mxu0 0.0
      %2437 = vmatpush1.msra.mxu0 0.0
      %2438 = vmatprep.subr.mxu0 0.0
      %2439 = vmatpush1.msra.mxu0 0.0
      %2440 = vmatprep.subr.mxu0 0.0
      %2441 = vmatpush1.msra.mxu0 0.0
      %2442 = vmatprep.subr.mxu0 0.0
      %2443 = vmatpush1.msra.mxu0 0.0
      %2444 = vmatprep.mubr.f32.mxu0 0.0
      %2445 = vmatmul.mubr.f32.gmra.mrb[0].mxu0 %v2260
      %v2446 = vpop.f32.mrb[0].mxu0
      %v2447 = vadd.f32 0.0, %v2446
      %v2448 = vpop.f32.mrb[0].mxu0
      %2449 = vdwg.mxu0
      %2450 = vst [vmem:[#allocation2] sm:$0xff] %v2376
      %2451 = vst [vmem:[#allocation2 + $0x8] sm:$0xff] %v2378
      %2452 = vst [vmem:[#allocation2 + $0x10] sm:$0xff] %v2447
    $region85: #{tpu_custom_call.1} parent=1 // pred_fallthru
      _
    %p2453 = scmp.eq.s32.totalorder %s2235, 0
    // Predicated region
    $region86: #{tpu_custom_call.1} parent=1 // pred_check
      %p2454 = pneg %p2453
    $region87: #{tpu_custom_call.1} parent=1 // pred_check_branch
      %2456 = sbr.rel (%p2454) target = $region89
    $region88: #{tpu_custom_call.1} parent=1 // pred_region
      %s2457 = scalar_lea.vmem [#allocation7], 96
      %v2458 = vld [vmem:[%s2457] sm:$0xff]
      %v2459 = vld [vmem:[%s2457 + $0x8] sm:$0xff]
      %v2460 = vld [vmem:[%s2457 + $0x10] sm:$0xff]
      %2461 = vst [vmem:[#allocation2] sm:$0xff] %v2458
      %2462 = vst [vmem:[#allocation2 + $0x8] sm:$0xff] %v2459
      %2463 = vst [vmem:[#allocation2 + $0x10] sm:$0xff] %v2460
    $region89: #{tpu_custom_call.1} parent=1 // pred_fallthru
      _
    %v2464 = vld [vmem:[#allocation2] sm:$0xff]
    %v2465 = vld [vmem:[#allocation2 + $0x8] sm:$0xff]
    %v2466 = vld [vmem:[#allocation2 + $0x10] sm:$0xff]
    %v2467 = vld [vmem:[#allocation10] sm:$0xff]
    %v2468 = vld [vmem:[#allocation10 + $0x8] sm:$0xff]
    %v2469 = vld [vmem:[#allocation10 + $0x10] sm:$0xff]
    %v2470 = vld [vmem:[#allocation10 + $0x18] sm:$0xff]
    %v2471 = vld [vmem:[#allocation10 + $0x20] sm:$0xff]
    %v2472 = vld [vmem:[#allocation10 + $0x28] sm:$0xff]
    %v2473 = vld [vmem:[#allocation10 + $0x30] sm:$0xff]
    %v2474 = vld [vmem:[#allocation10 + $0x38] sm:$0xff]
    %v2475 = vld [vmem:[#allocation10 + $0x40] sm:$0xff]
    %v2476 = vld [vmem:[#allocation10 + $0x48] sm:$0xff]
    %v2477 = vld [vmem:[#allocation10 + $0x50] sm:$0xff]
    %v2478 = vld [vmem:[#allocation10 + $0x58] sm:$0xff]
    %v2479 = vld [vmem:[#allocation10 + $0x60] sm:$0xff]
    %v2480 = vld [vmem:[#allocation10 + $0x68] sm:$0xff]
    %v2481 = vld [vmem:[#allocation10 + $0x70] sm:$0xff]
    %v2482 = vld [vmem:[#allocation10 + $0x78] sm:$0xff]
    %v2483 = vld [vmem:[#allocation10 + $0x80] sm:$0xff]
    %v2484 = vld [vmem:[#allocation10 + $0x88] sm:$0xff]
    %v2485 = vld [vmem:[#allocation10 + $0x90] sm:$0xff]
    %v2486 = vld [vmem:[#allocation10 + $0x98] sm:$0xff]
    %v2487 = vld [vmem:[#allocation10 + $0xa0] sm:$0xff]
    %v2488 = vld [vmem:[#allocation10 + $0xa8] sm:$0xff]
    %v2489 = vld [vmem:[#allocation10 + $0xb0] sm:$0xff]
    %v2490 = vld [vmem:[#allocation10 + $0xb8] sm:$0xff]
    %v2491 = vld [vmem:[#allocation10 + $0xc0] sm:$0xff]
    %v2492 = vld [vmem:[#allocation10 + $0xc8] sm:$0xff]
    %v2493 = vld [vmem:[#allocation10 + $0xd0] sm:$0xff]
    %v2494 = vld [vmem:[#allocation10 + $0xd8] sm:$0xff]
    %v2495 = vld [vmem:[#allocation10 + $0xe0] sm:$0xff]
    %v2496 = vld [vmem:[#allocation10 + $0xe8] sm:$0xff]
    %v2497 = vld [vmem:[#allocation10 + $0xf0] sm:$0xff]
    %v2498 = vld [vmem:[#allocation10 + $0xf8] sm:$0xff]
    %v2499 = vld [vmem:[#allocation10 + $0x100] sm:$0xff]
    %v2500 = vld [vmem:[#allocation10 + $0x108] sm:$0xff]
    %v2501 = vld [vmem:[#allocation10 + $0x110] sm:$0xff]
    %v2502 = vld [vmem:[#allocation10 + $0x118] sm:$0xff]
    %v2503 = vld [vmem:[#allocation10 + $0x120] sm:$0xff]
    %v2504 = vld [vmem:[#allocation10 + $0x128] sm:$0xff]
    %v2505 = vld [vmem:[#allocation10 + $0x130] sm:$0xff]
    %v2506 = vld [vmem:[#allocation10 + $0x138] sm:$0xff]
    %v2507 = vld [vmem:[#allocation10 + $0x140] sm:$0xff]
    %v2508 = vld [vmem:[#allocation10 + $0x148] sm:$0xff]
    %v2509 = vld [vmem:[#allocation10 + $0x150] sm:$0xff]
    %v2510 = vld [vmem:[#allocation10 + $0x158] sm:$0xff]
    %v2511 = vld [vmem:[#allocation10 + $0x160] sm:$0xff]
    %v2512 = vld [vmem:[#allocation10 + $0x168] sm:$0xff]
    %v2513 = vld [vmem:[#allocation10 + $0x170] sm:$0xff]
    %v2514 = vld [vmem:[#allocation10 + $0x178] sm:$0xff]
    %2515 = vmatprep.subr.mxu0 %v2468
    %2516 = vmatpush1.msra.mxu0 %v2467
    %2517 = vmatprep.subr.mxu0 %v2471
    %2518 = vmatpush1.msra.mxu0 %v2470
    %2519 = vmatprep.subr.mxu0 %v2474
    %2520 = vmatpush1.msra.mxu0 %v2473
    %2521 = vmatprep.subr.mxu0 %v2477
    %2522 = vmatpush1.msra.mxu0 %v2476
    %2523 = vmatprep.subr.mxu0 %v2480
    %2524 = vmatpush1.msra.mxu0 %v2479
    %2525 = vmatprep.subr.mxu0 %v2483
    %2526 = vmatpush1.msra.mxu0 %v2482
    %2527 = vmatprep.subr.mxu0 %v2486
    %2528 = vmatpush1.msra.mxu0 %v2485
    %2529 = vmatprep.subr.mxu0 %v2489
    %2530 = vmatpush1.msra.mxu0 %v2488
    %2531 = vmatprep.subr.mxu0 %v2492
    %2532 = vmatpush1.msra.mxu0 %v2491
    %2533 = vmatprep.subr.mxu0 %v2495
    %2534 = vmatpush1.msra.mxu0 %v2494
    %2535 = vmatprep.subr.mxu0 %v2498
    %2536 = vmatpush1.msra.mxu0 %v2497
    %2537 = vmatprep.subr.mxu0 %v2501
    %2538 = vmatpush1.msra.mxu0 %v2500
    %2539 = vmatprep.subr.mxu0 %v2504
    %2540 = vmatpush1.msra.mxu0 %v2503
    %2541 = vmatprep.subr.mxu0 %v2507
    %2542 = vmatpush1.msra.mxu0 %v2506
    %2543 = vmatprep.subr.mxu0 %v2510
    %2544 = vmatpush1.msra.mxu0 %v2509
    %2545 = vmatprep.subr.mxu0 %v2513
    %2546 = vmatpush1.msra.mxu0 %v2512
    %2547 = vmatprep.subr.mxu0 0.0
    %2548 = vmatpush1.msra.mxu0 0.0
    %2549 = vmatprep.subr.mxu0 0.0
    %2550 = vmatpush1.msra.mxu0 0.0
    %2551 = vmatprep.subr.mxu0 0.0
    %2552 = vmatpush1.msra.mxu0 0.0
    %2553 = vmatprep.subr.mxu0 0.0
    %2554 = vmatpush1.msra.mxu0 0.0
    %2555 = vmatprep.subr.mxu0 0.0
    %2556 = vmatpush1.msra.mxu0 0.0
    %2557 = vmatprep.subr.mxu0 0.0
    %2558 = vmatpush1.msra.mxu0 0.0
    %2559 = vmatprep.subr.mxu0 0.0
    %2560 = vmatpush1.msra.mxu0 0.0
    %2561 = vmatprep.subr.mxu0 0.0
    %2562 = vmatpush1.msra.mxu0 0.0
    %2563 = vmatprep.subr.mxu0 0.0
    %2564 = vmatpush1.msra.mxu0 0.0
    %2565 = vmatprep.subr.mxu0 0.0
    %2566 = vmatpush1.msra.mxu0 0.0
    %2567 = vmatprep.subr.mxu0 0.0
    %2568 = vmatpush1.msra.mxu0 0.0
    %2569 = vmatprep.subr.mxu0 0.0
    %2570 = vmatpush1.msra.mxu0 0.0
    %2571 = vmatprep.subr.mxu0 0.0
    %2572 = vmatpush1.msra.mxu0 0.0
    %2573 = vmatprep.subr.mxu0 0.0
    %2574 = vmatpush1.msra.mxu0 0.0
    %2575 = vmatprep.subr.mxu0 0.0
    %2576 = vmatpush1.msra.mxu0 0.0
    %2577 = vmatprep.subr.mxu0 0.0
    %2578 = vmatpush1.msra.mxu0 0.0
    %2579 = vmatprep.mubr.f32.mxu0 0.0
    %2580 = vmatmul.mubr.f32.gmra.mrb[0].mxu0 %v2146
    %v2581 = vpop.f32.mrb[0].mxu0
    %v2582 = vadd.f32 %v98, %v2581
    %v2583 = vpop.f32.mrb[0].mxu0
    %v2584 = vadd.f32 %v102, %v2583
    %2585 = vdwg.mxu0
    %2586 = vmatprep.subr.mxu0 0.0
    %2587 = vmatpush1.msra.mxu0 %v2469
    %2588 = vmatprep.subr.mxu0 0.0
    %2589 = vmatpush1.msra.mxu0 %v2472
    %2590 = vmatprep.subr.mxu0 0.0
    %2591 = vmatpush1.msra.mxu0 %v2475
    %2592 = vmatprep.subr.mxu0 0.0
    %2593 = vmatpush1.msra.mxu0 %v2478
    %2594 = vmatprep.subr.mxu0 0.0
    %2595 = vmatpush1.msra.mxu0 %v2481
    %2596 = vmatprep.subr.mxu0 0.0
    %2597 = vmatpush1.msra.mxu0 %v2484
    %2598 = vmatprep.subr.mxu0 0.0
    %2599 = vmatpush1.msra.mxu0 %v2487
    %2600 = vmatprep.subr.mxu0 0.0
    %2601 = vmatpush1.msra.mxu0 %v2490
    %2602 = vmatprep.subr.mxu0 0.0
    %2603 = vmatpush1.msra.mxu0 %v2493
    %2604 = vmatprep.subr.mxu0 0.0
    %2605 = vmatpush1.msra.mxu0 %v2496
    %2606 = vmatprep.subr.mxu0 0.0
    %2607 = vmatpush1.msra.mxu0 %v2499
    %2608 = vmatprep.subr.mxu0 0.0
    %2609 = vmatpush1.msra.mxu0 %v2502
    %2610 = vmatprep.subr.mxu0 0.0
    %2611 = vmatpush1.msra.mxu0 %v2505
    %2612 = vmatprep.subr.mxu0 0.0
    %2613 = vmatpush1.msra.mxu0 %v2508
    %2614 = vmatprep.subr.mxu0 0.0
    %2615 = vmatpush1.msra.mxu0 %v2511
    %2616 = vmatprep.subr.mxu0 0.0
    %2617 = vmatpush1.msra.mxu0 %v2514
    %2618 = vmatprep.subr.mxu0 0.0
    %2619 = vmatpush1.msra.mxu0 0.0
    %2620 = vmatprep.subr.mxu0 0.0
    %2621 = vmatpush1.msra.mxu0 0.0
    %2622 = vmatprep.subr.mxu0 0.0
    %2623 = vmatpush1.msra.mxu0 0.0
    %2624 = vmatprep.subr.mxu0 0.0
    %2625 = vmatpush1.msra.mxu0 0.0
    %2626 = vmatprep.subr.mxu0 0.0
    %2627 = vmatpush1.msra.mxu0 0.0
    %2628 = vmatprep.subr.mxu0 0.0
    %2629 = vmatpush1.msra.mxu0 0.0
    %2630 = vmatprep.subr.mxu0 0.0
    %2631 = vmatpush1.msra.mxu0 0.0
    %2632 = vmatprep.subr.mxu0 0.0
    %2633 = vmatpush1.msra.mxu0 0.0
    %2634 = vmatprep.subr.mxu0 0.0
    %2635 = vmatpush1.msra.mxu0 0.0
    %2636 = vmatprep.subr.mxu0 0.0
    %2637 = vmatpush1.msra.mxu0 0.0
    %2638 = vmatprep.subr.mxu0 0.0
    %2639 = vmatpush1.msra.mxu0 0.0
    %2640 = vmatprep.subr.mxu0 0.0
    %2641 = vmatpush1.msra.mxu0 0.0
    %2642 = vmatprep.subr.mxu0 0.0
    %2643 = vmatpush1.msra.mxu0 0.0
    %2644 = vmatprep.subr.mxu0 0.0
    %2645 = vmatpush1.msra.mxu0 0.0
    %2646 = vmatprep.subr.mxu0 0.0
    %2647 = vmatpush1.msra.mxu0 0.0
    %2648 = vmatprep.subr.mxu0 0.0
    %2649 = vmatpush1.msra.mxu0 0.0
    %2650 = vmatprep.mubr.f32.mxu0 0.0
    %2651 = vmatmul.mubr.f32.gmra.mrb[0].mxu0 %v2146
    %v2652 = vpop.f32.mrb[0].mxu0
    %v2653 = vadd.f32 %v106, %v2652
    %v2654 = vpop.f32.mrb[0].mxu0
    %2655 = vdwg.mxu0
    %v2656 = vadd.f32 %v2464, %v2582
    %v2657 = vxor.u32 %v2656, 2147483648
    %v2658 = vmul.f32 %v2657, 1.442695
    %v2659 = vpow.pop %v2658
    %v2660 = vadd.f32 %v2659, 1.0
    %v2661 = vrcp.pop %v2660
    %v2662 = vmul.f32 1.0, %v2661
    %v2663 = vadd.f32 %v2465, %v2584
    %v2664 = vxor.u32 %v2663, 2147483648
    %v2665 = vmul.f32 %v2664, 1.442695
    %v2666 = vpow.pop %v2665
    %v2667 = vadd.f32 %v2666, 1.0
    %v2668 = vrcp.pop %v2667
    %v2669 = vmul.f32 1.0, %v2668
    %v2670 = vmul.f32 %v2662, %v2653
    %v2671 = vadd.f32 %v2466, %v2670
    %v2672 = vtanh.pop %v2671
    %v2673 = vsub.f32 1.0, %v2669
    %v2674 = vmul.f32 %v2673, %v2672
    %v2675 = vmul.f32 %v2669, %v2146
    %v2676 = vadd.f32 %v2674, %v2675
    %v2677 = vld [vmem:[#allocation11] sm:$0xff]
    %v2678 = vld [vmem:[#allocation11 + $0x8] sm:$0xff]
    %v2679 = vld [vmem:[#allocation11 + $0x10] sm:$0xff]
    %v2680 = vld [vmem:[#allocation11 + $0x18] sm:$0xff]
    %v2681 = vld [vmem:[#allocation11 + $0x20] sm:$0xff]
    %v2682 = vld [vmem:[#allocation11 + $0x28] sm:$0xff]
    %v2683 = vld [vmem:[#allocation11 + $0x30] sm:$0xff]
    %v2684 = vld [vmem:[#allocation11 + $0x38] sm:$0xff]
    %v2685 = vld [vmem:[#allocation11 + $0x40] sm:$0xff]
    %v2686 = vld [vmem:[#allocation11 + $0x48] sm:$0xff]
    %v2687 = vld [vmem:[#allocation11 + $0x50] sm:$0xff]
    %v2688 = vld [vmem:[#allocation11 + $0x58] sm:$0xff]
    %v2689 = vld [vmem:[#allocation11 + $0x60] sm:$0xff]
    %v2690 = vld [vmem:[#allocation11 + $0x68] sm:$0xff]
    %v2691 = vld [vmem:[#allocation11 + $0x70] sm:$0xff]
    %v2692 = vld [vmem:[#allocation11 + $0x78] sm:$0xff]
    %2693 = vmatprep.subr.mxu0 0.0
    %2694 = vmatpush1.msra.mxu0 %v2677
    %2695 = vmatprep.subr.mxu0 0.0
    %2696 = vmatpush1.msra.mxu0 %v2678
    %2697 = vmatprep.subr.mxu0 0.0
    %2698 = vmatpush1.msra.mxu0 %v2679
    %2699 = vmatprep.subr.mxu0 0.0
    %2700 = vmatpush1.msra.mxu0 %v2680
    %2701 = vmatprep.subr.mxu0 0.0
    %2702 = vmatpush1.msra.mxu0 %v2681
    %2703 = vmatprep.subr.mxu0 0.0
    %2704 = vmatpush1.msra.mxu0 %v2682
    %2705 = vmatprep.subr.mxu0 0.0
    %2706 = vmatpush1.msra.mxu0 %v2683
    %2707 = vmatprep.subr.mxu0 0.0
    %2708 = vmatpush1.msra.mxu0 %v2684
    %2709 = vmatprep.subr.mxu0 0.0
    %2710 = vmatpush1.msra.mxu0 %v2685
    %2711 = vmatprep.subr.mxu0 0.0
    %2712 = vmatpush1.msra.mxu0 %v2686
    %2713 = vmatprep.subr.mxu0 0.0
    %2714 = vmatpush1.msra.mxu0 %v2687
    %2715 = vmatprep.subr.mxu0 0.0
    %2716 = vmatpush1.msra.mxu0 %v2688
    %2717 = vmatprep.subr.mxu0 0.0
    %2718 = vmatpush1.msra.mxu0 %v2689
    %2719 = vmatprep.subr.mxu0 0.0
    %2720 = vmatpush1.msra.mxu0 %v2690
    %2721 = vmatprep.subr.mxu0 0.0
    %2722 = vmatpush1.msra.mxu0 %v2691
    %2723 = vmatprep.subr.mxu0 0.0
    %2724 = vmatpush1.msra.mxu0 %v2692
    %2725 = vmatprep.subr.mxu0 0.0
    %2726 = vmatpush1.msra.mxu0 0.0
    %2727 = vmatprep.subr.mxu0 0.0
    %2728 = vmatpush1.msra.mxu0 0.0
    %2729 = vmatprep.subr.mxu0 0.0
    %2730 = vmatpush1.msra.mxu0 0.0
    %2731 = vmatprep.subr.mxu0 0.0
    %2732 = vmatpush1.msra.mxu0 0.0
    %2733 = vmatprep.subr.mxu0 0.0
    %2734 = vmatpush1.msra.mxu0 0.0
    %2735 = vmatprep.subr.mxu0 0.0
    %2736 = vmatpush1.msra.mxu0 0.0
    %2737 = vmatprep.subr.mxu0 0.0
    %2738 = vmatpush1.msra.mxu0 0.0
    %2739 = vmatprep.subr.mxu0 0.0
    %2740 = vmatpush1.msra.mxu0 0.0
    %2741 = vmatprep.subr.mxu0 0.0
    %2742 = vmatpush1.msra.mxu0 0.0
    %2743 = vmatprep.subr.mxu0 0.0
    %2744 = vmatpush1.msra.mxu0 0.0
    %2745 = vmatprep.subr.mxu0 0.0
    %2746 = vmatpush1.msra.mxu0 0.0
    %2747 = vmatprep.subr.mxu0 0.0
    %2748 = vmatpush1.msra.mxu0 0.0
    %2749 = vmatprep.subr.mxu0 0.0
    %2750 = vmatpush1.msra.mxu0 0.0
    %2751 = vmatprep.subr.mxu0 0.0
    %2752 = vmatpush1.msra.mxu0 0.0
    %2753 = vmatprep.subr.mxu0 0.0
    %2754 = vmatpush1.msra.mxu0 0.0
    %2755 = vmatprep.subr.mxu0 0.0
    %2756 = vmatpush1.msra.mxu0 0.0
    %2757 = vmatprep.mubr.f32.mxu0 0.0
    %2758 = vmatmul.mubr.f32.gmra.mrb[0].mxu0 %v2676
    %v2759 = vpop.f32.mrb[0].mxu0
    %v2760 = vadd.f32 %v115, %v2759
    %v2761 = vpop.f32.mrb[0].mxu0
    %2762 = vdwg.mxu0
    %s2763 = scalar_lea.vmem [#allocation13], 32
    %2764 = vst [vmem:[%s2763] sm:$0xff] %v2760
    %s2765 = sld [smem:[#allocation3 + $0x5]]
    %p2766 = scmp.eq.s32.totalorder %s2765, 1
    // Predicated region
    $region90: #{tpu_custom_call.1} parent=1 // pred_check
      %p2767 = pneg %p2766
    $region91: #{tpu_custom_call.1} parent=1 // pred_check_branch
      %2769 = sbr.rel (%p2767) target = $region93
    $region92: #{tpu_custom_call.1} parent=1 // pred_region
      %2770 = vmax.xlane.f32.xlu0 %v2760
      %v2771 = vpop.xlane.xlu0 %2770
      %vm2772 = vcmp.eq.f32.partialorder %v2760, %v2771
      %v2773 = vsel %vm2772, %v118, 128
      %v2774 = vand.u32 %v2773, 65535
      %v2775 = vshra.s32 %v2773, 16
      %v2776 = vcvt.s32.f32 %v2774
      %v2777 = vcvt.s32.f32 %v2775
      %2778 = vmin.xlane.f32.xlu0 %v2777
      %v2779 = vpop.xlane.xlu0 %2778
      %vm2780 = vcmp.eq.f32.partialorder %v2777, %v2779
      %v2781 = vsel %vm2780, %v2776, inf
      %2782 = vmin.xlane.f32.xlu0 %v2781
      %v2783 = vpop.xlane.xlu0 %2782
      %v2784 = vcvt.f32.s32 %v2783
      %v2785 = vcvt.f32.s32 %v2779
      %v2786 = vshll.u32 %v2785, 16
      %v2787 = vadd.s32 %v2786, %v2784
      %vm2788 = vcmp.eq.s32.totalorder %v118, %v2787
      %v2789 = vsel %vm2788, 1, 0
      %v2790 = vcvt.s32.f32 %v2789
      %v2791 = vld [vmem:[#allocation8] sm:$0xff]
      %v2792 = vld [vmem:[#allocation8 + $0x8] sm:$0xff]
      %v2793 = vld [vmem:[#allocation8 + $0x10] sm:$0xff]
      %v2794 = vld [vmem:[#allocation8 + $0x18] sm:$0xff]
      %v2795 = vld [vmem:[#allocation8 + $0x20] sm:$0xff]
      %v2796 = vld [vmem:[#allocation8 + $0x28] sm:$0xff]
      %v2797 = vld [vmem:[#allocation8 + $0x30] sm:$0xff]
      %v2798 = vld [vmem:[#allocation8 + $0x38] sm:$0xff]
      %v2799 = vld [vmem:[#allocation8 + $0x40] sm:$0xff]
      %v2800 = vld [vmem:[#allocation8 + $0x48] sm:$0xff]
      %v2801 = vld [vmem:[#allocation8 + $0x50] sm:$0xff]
      %v2802 = vld [vmem:[#allocation8 + $0x58] sm:$0xff]
      %v2803 = vld [vmem:[#allocation8 + $0x60] sm:$0xff]
      %v2804 = vld [vmem:[#allocation8 + $0x68] sm:$0xff]
      %v2805 = vld [vmem:[#allocation8 + $0x70] sm:$0xff]
      %v2806 = vld [vmem:[#allocation8 + $0x78] sm:$0xff]
      %v2807 = vld [vmem:[#allocation8 + $0x80] sm:$0xff]
      %v2808 = vld [vmem:[#allocation8 + $0x88] sm:$0xff]
      %v2809 = vld [vmem:[#allocation8 + $0x90] sm:$0xff]
      %v2810 = vld [vmem:[#allocation8 + $0x98] sm:$0xff]
      %v2811 = vld [vmem:[#allocation8 + $0xa0] sm:$0xff]
      %v2812 = vld [vmem:[#allocation8 + $0xa8] sm:$0xff]
      %v2813 = vld [vmem:[#allocation8 + $0xb0] sm:$0xff]
      %v2814 = vld [vmem:[#allocation8 + $0xb8] sm:$0xff]
      %v2815 = vld [vmem:[#allocation8 + $0xc0] sm:$0xff]
      %v2816 = vld [vmem:[#allocation8 + $0xc8] sm:$0xff]
      %v2817 = vld [vmem:[#allocation8 + $0xd0] sm:$0xff]
      %v2818 = vld [vmem:[#allocation8 + $0xd8] sm:$0xff]
      %v2819 = vld [vmem:[#allocation8 + $0xe0] sm:$0xff]
      %v2820 = vld [vmem:[#allocation8 + $0xe8] sm:$0xff]
      %v2821 = vld [vmem:[#allocation8 + $0xf0] sm:$0xff]
      %v2822 = vld [vmem:[#allocation8 + $0xf8] sm:$0xff]
      %v2823 = vld [vmem:[#allocation8 + $0x100] sm:$0xff]
      %v2824 = vld [vmem:[#allocation8 + $0x108] sm:$0xff]
      %v2825 = vld [vmem:[#allocation8 + $0x110] sm:$0xff]
      %v2826 = vld [vmem:[#allocation8 + $0x118] sm:$0xff]
      %v2827 = vld [vmem:[#allocation8 + $0x120] sm:$0xff]
      %v2828 = vld [vmem:[#allocation8 + $0x128] sm:$0xff]
      %v2829 = vld [vmem:[#allocation8 + $0x130] sm:$0xff]
      %v2830 = vld [vmem:[#allocation8 + $0x138] sm:$0xff]
      %v2831 = vld [vmem:[#allocation8 + $0x140] sm:$0xff]
      %v2832 = vld [vmem:[#allocation8 + $0x148] sm:$0xff]
      %v2833 = vld [vmem:[#allocation8 + $0x150] sm:$0xff]
      %v2834 = vld [vmem:[#allocation8 + $0x158] sm:$0xff]
      %v2835 = vld [vmem:[#allocation8 + $0x160] sm:$0xff]
      %v2836 = vld [vmem:[#allocation8 + $0x168] sm:$0xff]
      %v2837 = vld [vmem:[#allocation8 + $0x170] sm:$0xff]
      %v2838 = vld [vmem:[#allocation8 + $0x178] sm:$0xff]
      %2839 = vmatprep.subr.mxu0 %v2792
      %2840 = vmatpush1.msra.mxu0 %v2791
      %2841 = vmatprep.subr.mxu0 %v2795
      %2842 = vmatpush1.msra.mxu0 %v2794
      %2843 = vmatprep.subr.mxu0 %v2798
      %2844 = vmatpush1.msra.mxu0 %v2797
      %2845 = vmatprep.subr.mxu0 %v2801
      %2846 = vmatpush1.msra.mxu0 %v2800
      %2847 = vmatprep.subr.mxu0 %v2804
      %2848 = vmatpush1.msra.mxu0 %v2803
      %2849 = vmatprep.subr.mxu0 %v2807
      %2850 = vmatpush1.msra.mxu0 %v2806
      %2851 = vmatprep.subr.mxu0 %v2810
      %2852 = vmatpush1.msra.mxu0 %v2809
      %2853 = vmatprep.subr.mxu0 %v2813
      %2854 = vmatpush1.msra.mxu0 %v2812
      %2855 = vmatprep.subr.mxu0 %v2816
      %2856 = vmatpush1.msra.mxu0 %v2815
      %2857 = vmatprep.subr.mxu0 %v2819
      %2858 = vmatpush1.msra.mxu0 %v2818
      %2859 = vmatprep.subr.mxu0 %v2822
      %2860 = vmatpush1.msra.mxu0 %v2821
      %2861 = vmatprep.subr.mxu0 %v2825
      %2862 = vmatpush1.msra.mxu0 %v2824
      %2863 = vmatprep.subr.mxu0 %v2828
      %2864 = vmatpush1.msra.mxu0 %v2827
      %2865 = vmatprep.subr.mxu0 %v2831
      %2866 = vmatpush1.msra.mxu0 %v2830
      %2867 = vmatprep.subr.mxu0 %v2834
      %2868 = vmatpush1.msra.mxu0 %v2833
      %2869 = vmatprep.subr.mxu0 %v2837
      %2870 = vmatpush1.msra.mxu0 %v2836
      %2871 = vmatprep.subr.mxu0 0.0
      %2872 = vmatpush1.msra.mxu0 0.0
      %2873 = vmatprep.subr.mxu0 0.0
      %2874 = vmatpush1.msra.mxu0 0.0
      %2875 = vmatprep.subr.mxu0 0.0
      %2876 = vmatpush1.msra.mxu0 0.0
      %2877 = vmatprep.subr.mxu0 0.0
      %2878 = vmatpush1.msra.mxu0 0.0
      %2879 = vmatprep.subr.mxu0 0.0
      %2880 = vmatpush1.msra.mxu0 0.0
      %2881 = vmatprep.subr.mxu0 0.0
      %2882 = vmatpush1.msra.mxu0 0.0
      %2883 = vmatprep.subr.mxu0 0.0
      %2884 = vmatpush1.msra.mxu0 0.0
      %2885 = vmatprep.subr.mxu0 0.0
      %2886 = vmatpush1.msra.mxu0 0.0
      %2887 = vmatprep.subr.mxu0 0.0
      %2888 = vmatpush1.msra.mxu0 0.0
      %2889 = vmatprep.subr.mxu0 0.0
      %2890 = vmatpush1.msra.mxu0 0.0
      %2891 = vmatprep.subr.mxu0 0.0
      %2892 = vmatpush1.msra.mxu0 0.0
      %2893 = vmatprep.subr.mxu0 0.0
      %2894 = vmatpush1.msra.mxu0 0.0
      %2895 = vmatprep.subr.mxu0 0.0
      %2896 = vmatpush1.msra.mxu0 0.0
      %2897 = vmatprep.subr.mxu0 0.0
      %2898 = vmatpush1.msra.mxu0 0.0
      %2899 = vmatprep.subr.mxu0 0.0
      %2900 = vmatpush1.msra.mxu0 0.0
      %2901 = vmatprep.subr.mxu0 0.0
      %2902 = vmatpush1.msra.mxu0 0.0
      %2903 = vmatprep.mubr.f32.mxu0 0.0
      %2904 = vmatmul.mubr.f32.gmra.mrb[0].mxu0 %v2790
      %v2905 = vpop.f32.mrb[0].mxu0
      %v2906 = vadd.f32 0.0, %v2905
      %v2907 = vpop.f32.mrb[0].mxu0
      %v2908 = vadd.f32 0.0, %v2907
      %2909 = vdwg.mxu0
      %2910 = vmatprep.subr.mxu0 0.0
      %2911 = vmatpush1.msra.mxu0 %v2793
      %2912 = vmatprep.subr.mxu0 0.0
      %2913 = vmatpush1.msra.mxu0 %v2796
      %2914 = vmatprep.subr.mxu0 0.0
      %2915 = vmatpush1.msra.mxu0 %v2799
      %2916 = vmatprep.subr.mxu0 0.0
      %2917 = vmatpush1.msra.mxu0 %v2802
      %2918 = vmatprep.subr.mxu0 0.0
      %2919 = vmatpush1.msra.mxu0 %v2805
      %2920 = vmatprep.subr.mxu0 0.0
      %2921 = vmatpush1.msra.mxu0 %v2808
      %2922 = vmatprep.subr.mxu0 0.0
      %2923 = vmatpush1.msra.mxu0 %v2811
      %2924 = vmatprep.subr.mxu0 0.0
      %2925 = vmatpush1.msra.mxu0 %v2814
      %2926 = vmatprep.subr.mxu0 0.0
      %2927 = vmatpush1.msra.mxu0 %v2817
      %2928 = vmatprep.subr.mxu0 0.0
      %2929 = vmatpush1.msra.mxu0 %v2820
      %2930 = vmatprep.subr.mxu0 0.0
      %2931 = vmatpush1.msra.mxu0 %v2823
      %2932 = vmatprep.subr.mxu0 0.0
      %2933 = vmatpush1.msra.mxu0 %v2826
      %2934 = vmatprep.subr.mxu0 0.0
      %2935 = vmatpush1.msra.mxu0 %v2829
      %2936 = vmatprep.subr.mxu0 0.0
      %2937 = vmatpush1.msra.mxu0 %v2832
      %2938 = vmatprep.subr.mxu0 0.0
      %2939 = vmatpush1.msra.mxu0 %v2835
      %2940 = vmatprep.subr.mxu0 0.0
      %2941 = vmatpush1.msra.mxu0 %v2838
      %2942 = vmatprep.subr.mxu0 0.0
      %2943 = vmatpush1.msra.mxu0 0.0
      %2944 = vmatprep.subr.mxu0 0.0
      %2945 = vmatpush1.msra.mxu0 0.0
      %2946 = vmatprep.subr.mxu0 0.0
      %2947 = vmatpush1.msra.mxu0 0.0
      %2948 = vmatprep.subr.mxu0 0.0
      %2949 = vmatpush1.msra.mxu0 0.0
      %2950 = vmatprep.subr.mxu0 0.0
      %2951 = vmatpush1.msra.mxu0 0.0
      %2952 = vmatprep.subr.mxu0 0.0
      %2953 = vmatpush1.msra.mxu0 0.0
      %2954 = vmatprep.subr.mxu0 0.0
      %2955 = vmatpush1.msra.mxu0 0.0
      %2956 = vmatprep.subr.mxu0 0.0
      %2957 = vmatpush1.msra.mxu0 0.0
      %2958 = vmatprep.subr.mxu0 0.0
      %2959 = vmatpush1.msra.mxu0 0.0
      %2960 = vmatprep.subr.mxu0 0.0
      %2961 = vmatpush1.msra.mxu0 0.0
      %2962 = vmatprep.subr.mxu0 0.0
      %2963 = vmatpush1.msra.mxu0 0.0
      %2964 = vmatprep.subr.mxu0 0.0
      %2965 = vmatpush1.msra.mxu0 0.0
      %2966 = vmatprep.subr.mxu0 0.0
      %2967 = vmatpush1.msra.mxu0 0.0
      %2968 = vmatprep.subr.mxu0 0.0
      %2969 = vmatpush1.msra.mxu0 0.0
      %2970 = vmatprep.subr.mxu0 0.0
      %2971 = vmatpush1.msra.mxu0 0.0
      %2972 = vmatprep.subr.mxu0 0.0
      %2973 = vmatpush1.msra.mxu0 0.0
      %2974 = vmatprep.mubr.f32.mxu0 0.0
      %2975 = vmatmul.mubr.f32.gmra.mrb[0].mxu0 %v2790
      %v2976 = vpop.f32.mrb[0].mxu0
      %v2977 = vadd.f32 0.0, %v2976
      %v2978 = vpop.f32.mrb[0].mxu0
      %2979 = vdwg.mxu0
      %2980 = vst [vmem:[#allocation2] sm:$0xff] %v2906
      %2981 = vst [vmem:[#allocation2 + $0x8] sm:$0xff] %v2908
      %2982 = vst [vmem:[#allocation2 + $0x10] sm:$0xff] %v2977
    $region93: #{tpu_custom_call.1} parent=1 // pred_fallthru
      _
    %p2983 = scmp.eq.s32.totalorder %s2765, 0
    // Predicated region
    $region94: #{tpu_custom_call.1} parent=1 // pred_check
      %p2984 = pneg %p2983
    $region95: #{tpu_custom_call.1} parent=1 // pred_check_branch
      %2986 = sbr.rel (%p2984) target = $region97
    $region96: #{tpu_custom_call.1} parent=1 // pred_region
      %s2987 = scalar_lea.vmem [#allocation7], 120
      %v2988 = vld [vmem:[%s2987] sm:$0xff]
      %v2989 = vld [vmem:[%s2987 + $0x8] sm:$0xff]
      %v2990 = vld [vmem:[%s2987 + $0x10] sm:$0xff]
      %2991 = vst [vmem:[#allocation2] sm:$0xff] %v2988
      %2992 = vst [vmem:[#allocation2 + $0x8] sm:$0xff] %v2989
      %2993 = vst [vmem:[#allocation2 + $0x10] sm:$0xff] %v2990
    $region97: #{tpu_custom_call.1} parent=1 // pred_fallthru
      _
    %v2994 = vld [vmem:[#allocation2] sm:$0xff]
    %v2995 = vld [vmem:[#allocation2 + $0x8] sm:$0xff]
    %v2996 = vld [vmem:[#allocation2 + $0x10] sm:$0xff]
    %v2997 = vld [vmem:[#allocation10] sm:$0xff]
    %v2998 = vld [vmem:[#allocation10 + $0x8] sm:$0xff]
    %v2999 = vld [vmem:[#allocation10 + $0x10] sm:$0xff]
    %v3000 = vld [vmem:[#allocation10 + $0x18] sm:$0xff]
    %v3001 = vld [vmem:[#allocation10 + $0x20] sm:$0xff]
    %v3002 = vld [vmem:[#allocation10 + $0x28] sm:$0xff]
    %v3003 = vld [vmem:[#allocation10 + $0x30] sm:$0xff]
    %v3004 = vld [vmem:[#allocation10 + $0x38] sm:$0xff]
    %v3005 = vld [vmem:[#allocation10 + $0x40] sm:$0xff]
    %v3006 = vld [vmem:[#allocation10 + $0x48] sm:$0xff]
    %v3007 = vld [vmem:[#allocation10 + $0x50] sm:$0xff]
    %v3008 = vld [vmem:[#allocation10 + $0x58] sm:$0xff]
    %v3009 = vld [vmem:[#allocation10 + $0x60] sm:$0xff]
    %v3010 = vld [vmem:[#allocation10 + $0x68] sm:$0xff]
    %v3011 = vld [vmem:[#allocation10 + $0x70] sm:$0xff]
    %v3012 = vld [vmem:[#allocation10 + $0x78] sm:$0xff]
    %v3013 = vld [vmem:[#allocation10 + $0x80] sm:$0xff]
    %v3014 = vld [vmem:[#allocation10 + $0x88] sm:$0xff]
    %v3015 = vld [vmem:[#allocation10 + $0x90] sm:$0xff]
    %v3016 = vld [vmem:[#allocation10 + $0x98] sm:$0xff]
    %v3017 = vld [vmem:[#allocation10 + $0xa0] sm:$0xff]
    %v3018 = vld [vmem:[#allocation10 + $0xa8] sm:$0xff]
    %v3019 = vld [vmem:[#allocation10 + $0xb0] sm:$0xff]
    %v3020 = vld [vmem:[#allocation10 + $0xb8] sm:$0xff]
    %v3021 = vld [vmem:[#allocation10 + $0xc0] sm:$0xff]
    %v3022 = vld [vmem:[#allocation10 + $0xc8] sm:$0xff]
    %v3023 = vld [vmem:[#allocation10 + $0xd0] sm:$0xff]
    %v3024 = vld [vmem:[#allocation10 + $0xd8] sm:$0xff]
    %v3025 = vld [vmem:[#allocation10 + $0xe0] sm:$0xff]
    %v3026 = vld [vmem:[#allocation10 + $0xe8] sm:$0xff]
    %v3027 = vld [vmem:[#allocation10 + $0xf0] sm:$0xff]
    %v3028 = vld [vmem:[#allocation10 + $0xf8] sm:$0xff]
    %v3029 = vld [vmem:[#allocation10 + $0x100] sm:$0xff]
    %v3030 = vld [vmem:[#allocation10 + $0x108] sm:$0xff]
    %v3031 = vld [vmem:[#allocation10 + $0x110] sm:$0xff]
    %v3032 = vld [vmem:[#allocation10 + $0x118] sm:$0xff]
    %v3033 = vld [vmem:[#allocation10 + $0x120] sm:$0xff]
    %v3034 = vld [vmem:[#allocation10 + $0x128] sm:$0xff]
    %v3035 = vld [vmem:[#allocation10 + $0x130] sm:$0xff]
    %v3036 = vld [vmem:[#allocation10 + $0x138] sm:$0xff]
    %v3037 = vld [vmem:[#allocation10 + $0x140] sm:$0xff]
    %v3038 = vld [vmem:[#allocation10 + $0x148] sm:$0xff]
    %v3039 = vld [vmem:[#allocation10 + $0x150] sm:$0xff]
    %v3040 = vld [vmem:[#allocation10 + $0x158] sm:$0xff]
    %v3041 = vld [vmem:[#allocation10 + $0x160] sm:$0xff]
    %v3042 = vld [vmem:[#allocation10 + $0x168] sm:$0xff]
    %v3043 = vld [vmem:[#allocation10 + $0x170] sm:$0xff]
    %v3044 = vld [vmem:[#allocation10 + $0x178] sm:$0xff]
    %3045 = vmatprep.subr.mxu0 %v2998
    %3046 = vmatpush1.msra.mxu0 %v2997
    %3047 = vmatprep.subr.mxu0 %v3001
    %3048 = vmatpush1.msra.mxu0 %v3000
    %3049 = vmatprep.subr.mxu0 %v3004
    %3050 = vmatpush1.msra.mxu0 %v3003
    %3051 = vmatprep.subr.mxu0 %v3007
    %3052 = vmatpush1.msra.mxu0 %v3006
    %3053 = vmatprep.subr.mxu0 %v3010
    %3054 = vmatpush1.msra.mxu0 %v3009
    %3055 = vmatprep.subr.mxu0 %v3013
    %3056 = vmatpush1.msra.mxu0 %v3012
    %3057 = vmatprep.subr.mxu0 %v3016
    %3058 = vmatpush1.msra.mxu0 %v3015
    %3059 = vmatprep.subr.mxu0 %v3019
    %3060 = vmatpush1.msra.mxu0 %v3018
    %3061 = vmatprep.subr.mxu0 %v3022
    %3062 = vmatpush1.msra.mxu0 %v3021
    %3063 = vmatprep.subr.mxu0 %v3025
    %3064 = vmatpush1.msra.mxu0 %v3024
    %3065 = vmatprep.subr.mxu0 %v3028
    %3066 = vmatpush1.msra.mxu0 %v3027
    %3067 = vmatprep.subr.mxu0 %v3031
    %3068 = vmatpush1.msra.mxu0 %v3030
    %3069 = vmatprep.subr.mxu0 %v3034
    %3070 = vmatpush1.msra.mxu0 %v3033
    %3071 = vmatprep.subr.mxu0 %v3037
    %3072 = vmatpush1.msra.mxu0 %v3036
    %3073 = vmatprep.subr.mxu0 %v3040
    %3074 = vmatpush1.msra.mxu0 %v3039
    %3075 = vmatprep.subr.mxu0 %v3043
    %3076 = vmatpush1.msra.mxu0 %v3042
    %3077 = vmatprep.subr.mxu0 0.0
    %3078 = vmatpush1.msra.mxu0 0.0
    %3079 = vmatprep.subr.mxu0 0.0
    %3080 = vmatpush1.msra.mxu0 0.0
    %3081 = vmatprep.subr.mxu0 0.0
    %3082 = vmatpush1.msra.mxu0 0.0
    %3083 = vmatprep.subr.mxu0 0.0
    %3084 = vmatpush1.msra.mxu0 0.0
    %3085 = vmatprep.subr.mxu0 0.0
    %3086 = vmatpush1.msra.mxu0 0.0
    %3087 = vmatprep.subr.mxu0 0.0
    %3088 = vmatpush1.msra.mxu0 0.0
    %3089 = vmatprep.subr.mxu0 0.0
    %3090 = vmatpush1.msra.mxu0 0.0
    %3091 = vmatprep.subr.mxu0 0.0
    %3092 = vmatpush1.msra.mxu0 0.0
    %3093 = vmatprep.subr.mxu0 0.0
    %3094 = vmatpush1.msra.mxu0 0.0
    %3095 = vmatprep.subr.mxu0 0.0
    %3096 = vmatpush1.msra.mxu0 0.0
    %3097 = vmatprep.subr.mxu0 0.0
    %3098 = vmatpush1.msra.mxu0 0.0
    %3099 = vmatprep.subr.mxu0 0.0
    %3100 = vmatpush1.msra.mxu0 0.0
    %3101 = vmatprep.subr.mxu0 0.0
    %3102 = vmatpush1.msra.mxu0 0.0
    %3103 = vmatprep.subr.mxu0 0.0
    %3104 = vmatpush1.msra.mxu0 0.0
    %3105 = vmatprep.subr.mxu0 0.0
    %3106 = vmatpush1.msra.mxu0 0.0
    %3107 = vmatprep.subr.mxu0 0.0
    %3108 = vmatpush1.msra.mxu0 0.0
    %3109 = vmatprep.mubr.f32.mxu0 0.0
    %3110 = vmatmul.mubr.f32.gmra.mrb[0].mxu0 %v2676
    %v3111 = vpop.f32.mrb[0].mxu0
    %v3112 = vadd.f32 %v98, %v3111
    %v3113 = vpop.f32.mrb[0].mxu0
    %v3114 = vadd.f32 %v102, %v3113
    %3115 = vdwg.mxu0
    %3116 = vmatprep.subr.mxu0 0.0
    %3117 = vmatpush1.msra.mxu0 %v2999
    %3118 = vmatprep.subr.mxu0 0.0
    %3119 = vmatpush1.msra.mxu0 %v3002
    %3120 = vmatprep.subr.mxu0 0.0
    %3121 = vmatpush1.msra.mxu0 %v3005
    %3122 = vmatprep.subr.mxu0 0.0
    %3123 = vmatpush1.msra.mxu0 %v3008
    %3124 = vmatprep.subr.mxu0 0.0
    %3125 = vmatpush1.msra.mxu0 %v3011
    %3126 = vmatprep.subr.mxu0 0.0
    %3127 = vmatpush1.msra.mxu0 %v3014
    %3128 = vmatprep.subr.mxu0 0.0
    %3129 = vmatpush1.msra.mxu0 %v3017
    %3130 = vmatprep.subr.mxu0 0.0
    %3131 = vmatpush1.msra.mxu0 %v3020
    %3132 = vmatprep.subr.mxu0 0.0
    %3133 = vmatpush1.msra.mxu0 %v3023
    %3134 = vmatprep.subr.mxu0 0.0
    %3135 = vmatpush1.msra.mxu0 %v3026
    %3136 = vmatprep.subr.mxu0 0.0
    %3137 = vmatpush1.msra.mxu0 %v3029
    %3138 = vmatprep.subr.mxu0 0.0
    %3139 = vmatpush1.msra.mxu0 %v3032
    %3140 = vmatprep.subr.mxu0 0.0
    %3141 = vmatpush1.msra.mxu0 %v3035
    %3142 = vmatprep.subr.mxu0 0.0
    %3143 = vmatpush1.msra.mxu0 %v3038
    %3144 = vmatprep.subr.mxu0 0.0
    %3145 = vmatpush1.msra.mxu0 %v3041
    %3146 = vmatprep.subr.mxu0 0.0
    %3147 = vmatpush1.msra.mxu0 %v3044
    %3148 = vmatprep.subr.mxu0 0.0
    %3149 = vmatpush1.msra.mxu0 0.0
    %3150 = vmatprep.subr.mxu0 0.0
    %3151 = vmatpush1.msra.mxu0 0.0
    %3152 = vmatprep.subr.mxu0 0.0
    %3153 = vmatpush1.msra.mxu0 0.0
    %3154 = vmatprep.subr.mxu0 0.0
    %3155 = vmatpush1.msra.mxu0 0.0
    %3156 = vmatprep.subr.mxu0 0.0
    %3157 = vmatpush1.msra.mxu0 0.0
    %3158 = vmatprep.subr.mxu0 0.0
    %3159 = vmatpush1.msra.mxu0 0.0
    %3160 = vmatprep.subr.mxu0 0.0
    %3161 = vmatpush1.msra.mxu0 0.0
    %3162 = vmatprep.subr.mxu0 0.0
    %3163 = vmatpush1.msra.mxu0 0.0
    %3164 = vmatprep.subr.mxu0 0.0
    %3165 = vmatpush1.msra.mxu0 0.0
    %3166 = vmatprep.subr.mxu0 0.0
    %3167 = vmatpush1.msra.mxu0 0.0
    %3168 = vmatprep.subr.mxu0 0.0
    %3169 = vmatpush1.msra.mxu0 0.0
    %3170 = vmatprep.subr.mxu0 0.0
    %3171 = vmatpush1.msra.mxu0 0.0
    %3172 = vmatprep.subr.mxu0 0.0
    %3173 = vmatpush1.msra.mxu0 0.0
    %3174 = vmatprep.subr.mxu0 0.0
    %3175 = vmatpush1.msra.mxu0 0.0
    %3176 = vmatprep.subr.mxu0 0.0
    %3177 = vmatpush1.msra.mxu0 0.0
    %3178 = vmatprep.subr.mxu0 0.0
    %3179 = vmatpush1.msra.mxu0 0.0
    %3180 = vmatprep.mubr.f32.mxu0 0.0
    %3181 = vmatmul.mubr.f32.gmra.mrb[0].mxu0 %v2676
    %v3182 = vpop.f32.mrb[0].mxu0
    %v3183 = vadd.f32 %v106, %v3182
    %v3184 = vpop.f32.mrb[0].mxu0
    %3185 = vdwg.mxu0
    %v3186 = vadd.f32 %v2994, %v3112
    %v3187 = vxor.u32 %v3186, 2147483648
    %v3188 = vmul.f32 %v3187, 1.442695
    %v3189 = vpow.pop %v3188
    %v3190 = vadd.f32 %v3189, 1.0
    %v3191 = vrcp.pop %v3190
    %v3192 = vmul.f32 1.0, %v3191
    %v3193 = vadd.f32 %v2995, %v3114
    %v3194 = vxor.u32 %v3193, 2147483648
    %v3195 = vmul.f32 %v3194, 1.442695
    %v3196 = vpow.pop %v3195
    %v3197 = vadd.f32 %v3196, 1.0
    %v3198 = vrcp.pop %v3197
    %v3199 = vmul.f32 1.0, %v3198
    %v3200 = vmul.f32 %v3192, %v3183
    %v3201 = vadd.f32 %v2996, %v3200
    %v3202 = vtanh.pop %v3201
    %v3203 = vsub.f32 1.0, %v3199
    %v3204 = vmul.f32 %v3203, %v3202
    %v3205 = vmul.f32 %v3199, %v2676
    %v3206 = vadd.f32 %v3204, %v3205
    %v3207 = vld [vmem:[#allocation11] sm:$0xff]
    %v3208 = vld [vmem:[#allocation11 + $0x8] sm:$0xff]
    %v3209 = vld [vmem:[#allocation11 + $0x10] sm:$0xff]
    %v3210 = vld [vmem:[#allocation11 + $0x18] sm:$0xff]
    %v3211 = vld [vmem:[#allocation11 + $0x20] sm:$0xff]
    %v3212 = vld [vmem:[#allocation11 + $0x28] sm:$0xff]
    %v3213 = vld [vmem:[#allocation11 + $0x30] sm:$0xff]
    %v3214 = vld [vmem:[#allocation11 + $0x38] sm:$0xff]
    %v3215 = vld [vmem:[#allocation11 + $0x40] sm:$0xff]
    %v3216 = vld [vmem:[#allocation11 + $0x48] sm:$0xff]
    %v3217 = vld [vmem:[#allocation11 + $0x50] sm:$0xff]
    %v3218 = vld [vmem:[#allocation11 + $0x58] sm:$0xff]
    %v3219 = vld [vmem:[#allocation11 + $0x60] sm:$0xff]
    %v3220 = vld [vmem:[#allocation11 + $0x68] sm:$0xff]
    %v3221 = vld [vmem:[#allocation11 + $0x70] sm:$0xff]
    %v3222 = vld [vmem:[#allocation11 + $0x78] sm:$0xff]
    %3223 = vmatprep.subr.mxu0 0.0
    %3224 = vmatpush1.msra.mxu0 %v3207
    %3225 = vmatprep.subr.mxu0 0.0
    %3226 = vmatpush1.msra.mxu0 %v3208
    %3227 = vmatprep.subr.mxu0 0.0
    %3228 = vmatpush1.msra.mxu0 %v3209
    %3229 = vmatprep.subr.mxu0 0.0
    %3230 = vmatpush1.msra.mxu0 %v3210
    %3231 = vmatprep.subr.mxu0 0.0
    %3232 = vmatpush1.msra.mxu0 %v3211
    %3233 = vmatprep.subr.mxu0 0.0
    %3234 = vmatpush1.msra.mxu0 %v3212
    %3235 = vmatprep.subr.mxu0 0.0
    %3236 = vmatpush1.msra.mxu0 %v3213
    %3237 = vmatprep.subr.mxu0 0.0
    %3238 = vmatpush1.msra.mxu0 %v3214
    %3239 = vmatprep.subr.mxu0 0.0
    %3240 = vmatpush1.msra.mxu0 %v3215
    %3241 = vmatprep.subr.mxu0 0.0
    %3242 = vmatpush1.msra.mxu0 %v3216
    %3243 = vmatprep.subr.mxu0 0.0
    %3244 = vmatpush1.msra.mxu0 %v3217
    %3245 = vmatprep.subr.mxu0 0.0
    %3246 = vmatpush1.msra.mxu0 %v3218
    %3247 = vmatprep.subr.mxu0 0.0
    %3248 = vmatpush1.msra.mxu0 %v3219
    %3249 = vmatprep.subr.mxu0 0.0
    %3250 = vmatpush1.msra.mxu0 %v3220
    %3251 = vmatprep.subr.mxu0 0.0
    %3252 = vmatpush1.msra.mxu0 %v3221
    %3253 = vmatprep.subr.mxu0 0.0
    %3254 = vmatpush1.msra.mxu0 %v3222
    %3255 = vmatprep.subr.mxu0 0.0
    %3256 = vmatpush1.msra.mxu0 0.0
    %3257 = vmatprep.subr.mxu0 0.0
    %3258 = vmatpush1.msra.mxu0 0.0
    %3259 = vmatprep.subr.mxu0 0.0
    %3260 = vmatpush1.msra.mxu0 0.0
    %3261 = vmatprep.subr.mxu0 0.0
    %3262 = vmatpush1.msra.mxu0 0.0
    %3263 = vmatprep.subr.mxu0 0.0
    %3264 = vmatpush1.msra.mxu0 0.0
    %3265 = vmatprep.subr.mxu0 0.0
    %3266 = vmatpush1.msra.mxu0 0.0
    %3267 = vmatprep.subr.mxu0 0.0
    %3268 = vmatpush1.msra.mxu0 0.0
    %3269 = vmatprep.subr.mxu0 0.0
    %3270 = vmatpush1.msra.mxu0 0.0
    %3271 = vmatprep.subr.mxu0 0.0
    %3272 = vmatpush1.msra.mxu0 0.0
    %3273 = vmatprep.subr.mxu0 0.0
    %3274 = vmatpush1.msra.mxu0 0.0
    %3275 = vmatprep.subr.mxu0 0.0
    %3276 = vmatpush1.msra.mxu0 0.0
    %3277 = vmatprep.subr.mxu0 0.0
    %3278 = vmatpush1.msra.mxu0 0.0
    %3279 = vmatprep.subr.mxu0 0.0
    %3280 = vmatpush1.msra.mxu0 0.0
    %3281 = vmatprep.subr.mxu0 0.0
    %3282 = vmatpush1.msra.mxu0 0.0
    %3283 = vmatprep.subr.mxu0 0.0
    %3284 = vmatpush1.msra.mxu0 0.0
    %3285 = vmatprep.subr.mxu0 0.0
    %3286 = vmatpush1.msra.mxu0 0.0
    %3287 = vmatprep.mubr.f32.mxu0 0.0
    %3288 = vmatmul.mubr.f32.gmra.mrb[0].mxu0 %v3206
    %v3289 = vpop.f32.mrb[0].mxu0
    %v3290 = vadd.f32 %v115, %v3289
    %v3291 = vpop.f32.mrb[0].mxu0
    %3292 = vdwg.mxu0
    %s3293 = scalar_lea.vmem [#allocation13], 40
    %3294 = vst [vmem:[%s3293] sm:$0xff] %v3290
    %s3295 = sld [smem:[#allocation3 + $0x6]]
    %p3296 = scmp.eq.s32.totalorder %s3295, 1
    // Predicated region
    $region98: #{tpu_custom_call.1} parent=1 // pred_check
      %p3297 = pneg %p3296
    $region99: #{tpu_custom_call.1} parent=1 // pred_check_branch
      %3299 = sbr.rel (%p3297) target = $region101
    $region100: #{tpu_custom_call.1} parent=1 // pred_region
      %3300 = vmax.xlane.f32.xlu0 %v3290
      %v3301 = vpop.xlane.xlu0 %3300
      %vm3302 = vcmp.eq.f32.partialorder %v3290, %v3301
      %v3303 = vsel %vm3302, %v118, 128
      %v3304 = vand.u32 %v3303, 65535
      %v3305 = vshra.s32 %v3303, 16
      %v3306 = vcvt.s32.f32 %v3304
      %v3307 = vcvt.s32.f32 %v3305
      %3308 = vmin.xlane.f32.xlu0 %v3307
      %v3309 = vpop.xlane.xlu0 %3308
      %vm3310 = vcmp.eq.f32.partialorder %v3307, %v3309
      %v3311 = vsel %vm3310, %v3306, inf
      %3312 = vmin.xlane.f32.xlu0 %v3311
      %v3313 = vpop.xlane.xlu0 %3312
      %v3314 = vcvt.f32.s32 %v3313
      %v3315 = vcvt.f32.s32 %v3309
      %v3316 = vshll.u32 %v3315, 16
      %v3317 = vadd.s32 %v3316, %v3314
      %vm3318 = vcmp.eq.s32.totalorder %v118, %v3317
      %v3319 = vsel %vm3318, 1, 0
      %v3320 = vcvt.s32.f32 %v3319
      %v3321 = vld [vmem:[#allocation8] sm:$0xff]
      %v3322 = vld [vmem:[#allocation8 + $0x8] sm:$0xff]
      %v3323 = vld [vmem:[#allocation8 + $0x10] sm:$0xff]
      %v3324 = vld [vmem:[#allocation8 + $0x18] sm:$0xff]
      %v3325 = vld [vmem:[#allocation8 + $0x20] sm:$0xff]
      %v3326 = vld [vmem:[#allocation8 + $0x28] sm:$0xff]
      %v3327 = vld [vmem:[#allocation8 + $0x30] sm:$0xff]
      %v3328 = vld [vmem:[#allocation8 + $0x38] sm:$0xff]
      %v3329 = vld [vmem:[#allocation8 + $0x40] sm:$0xff]
      %v3330 = vld [vmem:[#allocation8 + $0x48] sm:$0xff]
      %v3331 = vld [vmem:[#allocation8 + $0x50] sm:$0xff]
      %v3332 = vld [vmem:[#allocation8 + $0x58] sm:$0xff]
      %v3333 = vld [vmem:[#allocation8 + $0x60] sm:$0xff]
      %v3334 = vld [vmem:[#allocation8 + $0x68] sm:$0xff]
      %v3335 = vld [vmem:[#allocation8 + $0x70] sm:$0xff]
      %v3336 = vld [vmem:[#allocation8 + $0x78] sm:$0xff]
      %v3337 = vld [vmem:[#allocation8 + $0x80] sm:$0xff]
      %v3338 = vld [vmem:[#allocation8 + $0x88] sm:$0xff]
      %v3339 = vld [vmem:[#allocation8 + $0x90] sm:$0xff]
      %v3340 = vld [vmem:[#allocation8 + $0x98] sm:$0xff]
      %v3341 = vld [vmem:[#allocation8 + $0xa0] sm:$0xff]
      %v3342 = vld [vmem:[#allocation8 + $0xa8] sm:$0xff]
      %v3343 = vld [vmem:[#allocation8 + $0xb0] sm:$0xff]
      %v3344 = vld [vmem:[#allocation8 + $0xb8] sm:$0xff]
      %v3345 = vld [vmem:[#allocation8 + $0xc0] sm:$0xff]
      %v3346 = vld [vmem:[#allocation8 + $0xc8] sm:$0xff]
      %v3347 = vld [vmem:[#allocation8 + $0xd0] sm:$0xff]
      %v3348 = vld [vmem:[#allocation8 + $0xd8] sm:$0xff]
      %v3349 = vld [vmem:[#allocation8 + $0xe0] sm:$0xff]
      %v3350 = vld [vmem:[#allocation8 + $0xe8] sm:$0xff]
      %v3351 = vld [vmem:[#allocation8 + $0xf0] sm:$0xff]
      %v3352 = vld [vmem:[#allocation8 + $0xf8] sm:$0xff]
      %v3353 = vld [vmem:[#allocation8 + $0x100] sm:$0xff]
      %v3354 = vld [vmem:[#allocation8 + $0x108] sm:$0xff]
      %v3355 = vld [vmem:[#allocation8 + $0x110] sm:$0xff]
      %v3356 = vld [vmem:[#allocation8 + $0x118] sm:$0xff]
      %v3357 = vld [vmem:[#allocation8 + $0x120] sm:$0xff]
      %v3358 = vld [vmem:[#allocation8 + $0x128] sm:$0xff]
      %v3359 = vld [vmem:[#allocation8 + $0x130] sm:$0xff]
      %v3360 = vld [vmem:[#allocation8 + $0x138] sm:$0xff]
      %v3361 = vld [vmem:[#allocation8 + $0x140] sm:$0xff]
      %v3362 = vld [vmem:[#allocation8 + $0x148] sm:$0xff]
      %v3363 = vld [vmem:[#allocation8 + $0x150] sm:$0xff]
      %v3364 = vld [vmem:[#allocation8 + $0x158] sm:$0xff]
      %v3365 = vld [vmem:[#allocation8 + $0x160] sm:$0xff]
      %v3366 = vld [vmem:[#allocation8 + $0x168] sm:$0xff]
      %v3367 = vld [vmem:[#allocation8 + $0x170] sm:$0xff]
      %v3368 = vld [vmem:[#allocation8 + $0x178] sm:$0xff]
      %3369 = vmatprep.subr.mxu0 %v3322
      %3370 = vmatpush1.msra.mxu0 %v3321
      %3371 = vmatprep.subr.mxu0 %v3325
      %3372 = vmatpush1.msra.mxu0 %v3324
      %3373 = vmatprep.subr.mxu0 %v3328
      %3374 = vmatpush1.msra.mxu0 %v3327
      %3375 = vmatprep.subr.mxu0 %v3331
      %3376 = vmatpush1.msra.mxu0 %v3330
      %3377 = vmatprep.subr.mxu0 %v3334
      %3378 = vmatpush1.msra.mxu0 %v3333
      %3379 = vmatprep.subr.mxu0 %v3337
      %3380 = vmatpush1.msra.mxu0 %v3336
      %3381 = vmatprep.subr.mxu0 %v3340
      %3382 = vmatpush1.msra.mxu0 %v3339
      %3383 = vmatprep.subr.mxu0 %v3343
      %3384 = vmatpush1.msra.mxu0 %v3342
      %3385 = vmatprep.subr.mxu0 %v3346
      %3386 = vmatpush1.msra.mxu0 %v3345
      %3387 = vmatprep.subr.mxu0 %v3349
      %3388 = vmatpush1.msra.mxu0 %v3348
      %3389 = vmatprep.subr.mxu0 %v3352
      %3390 = vmatpush1.msra.mxu0 %v3351
      %3391 = vmatprep.subr.mxu0 %v3355
      %3392 = vmatpush1.msra.mxu0 %v3354
      %3393 = vmatprep.subr.mxu0 %v3358
      %3394 = vmatpush1.msra.mxu0 %v3357
      %3395 = vmatprep.subr.mxu0 %v3361
      %3396 = vmatpush1.msra.mxu0 %v3360
      %3397 = vmatprep.subr.mxu0 %v3364
      %3398 = vmatpush1.msra.mxu0 %v3363
      %3399 = vmatprep.subr.mxu0 %v3367
      %3400 = vmatpush1.msra.mxu0 %v3366
      %3401 = vmatprep.subr.mxu0 0.0
      %3402 = vmatpush1.msra.mxu0 0.0
      %3403 = vmatprep.subr.mxu0 0.0
      %3404 = vmatpush1.msra.mxu0 0.0
      %3405 = vmatprep.subr.mxu0 0.0
      %3406 = vmatpush1.msra.mxu0 0.0
      %3407 = vmatprep.subr.mxu0 0.0
      %3408 = vmatpush1.msra.mxu0 0.0
      %3409 = vmatprep.subr.mxu0 0.0
      %3410 = vmatpush1.msra.mxu0 0.0
      %3411 = vmatprep.subr.mxu0 0.0
      %3412 = vmatpush1.msra.mxu0 0.0
      %3413 = vmatprep.subr.mxu0 0.0
      %3414 = vmatpush1.msra.mxu0 0.0
      %3415 = vmatprep.subr.mxu0 0.0
      %3416 = vmatpush1.msra.mxu0 0.0
      %3417 = vmatprep.subr.mxu0 0.0
      %3418 = vmatpush1.msra.mxu0 0.0
      %3419 = vmatprep.subr.mxu0 0.0
      %3420 = vmatpush1.msra.mxu0 0.0
      %3421 = vmatprep.subr.mxu0 0.0
      %3422 = vmatpush1.msra.mxu0 0.0
      %3423 = vmatprep.subr.mxu0 0.0
      %3424 = vmatpush1.msra.mxu0 0.0
      %3425 = vmatprep.subr.mxu0 0.0
      %3426 = vmatpush1.msra.mxu0 0.0
      %3427 = vmatprep.subr.mxu0 0.0
      %3428 = vmatpush1.msra.mxu0 0.0
      %3429 = vmatprep.subr.mxu0 0.0
      %3430 = vmatpush1.msra.mxu0 0.0
      %3431 = vmatprep.subr.mxu0 0.0
      %3432 = vmatpush1.msra.mxu0 0.0
      %3433 = vmatprep.mubr.f32.mxu0 0.0
      %3434 = vmatmul.mubr.f32.gmra.mrb[0].mxu0 %v3320
      %v3435 = vpop.f32.mrb[0].mxu0
      %v3436 = vadd.f32 0.0, %v3435
      %v3437 = vpop.f32.mrb[0].mxu0
      %v3438 = vadd.f32 0.0, %v3437
      %3439 = vdwg.mxu0
      %3440 = vmatprep.subr.mxu0 0.0
      %3441 = vmatpush1.msra.mxu0 %v3323
      %3442 = vmatprep.subr.mxu0 0.0
      %3443 = vmatpush1.msra.mxu0 %v3326
      %3444 = vmatprep.subr.mxu0 0.0
      %3445 = vmatpush1.msra.mxu0 %v3329
      %3446 = vmatprep.subr.mxu0 0.0
      %3447 = vmatpush1.msra.mxu0 %v3332
      %3448 = vmatprep.subr.mxu0 0.0
      %3449 = vmatpush1.msra.mxu0 %v3335
      %3450 = vmatprep.subr.mxu0 0.0
      %3451 = vmatpush1.msra.mxu0 %v3338
      %3452 = vmatprep.subr.mxu0 0.0
      %3453 = vmatpush1.msra.mxu0 %v3341
      %3454 = vmatprep.subr.mxu0 0.0
      %3455 = vmatpush1.msra.mxu0 %v3344
      %3456 = vmatprep.subr.mxu0 0.0
      %3457 = vmatpush1.msra.mxu0 %v3347
      %3458 = vmatprep.subr.mxu0 0.0
      %3459 = vmatpush1.msra.mxu0 %v3350
      %3460 = vmatprep.subr.mxu0 0.0
      %3461 = vmatpush1.msra.mxu0 %v3353
      %3462 = vmatprep.subr.mxu0 0.0
      %3463 = vmatpush1.msra.mxu0 %v3356
      %3464 = vmatprep.subr.mxu0 0.0
      %3465 = vmatpush1.msra.mxu0 %v3359
      %3466 = vmatprep.subr.mxu0 0.0
      %3467 = vmatpush1.msra.mxu0 %v3362
      %3468 = vmatprep.subr.mxu0 0.0
      %3469 = vmatpush1.msra.mxu0 %v3365
      %3470 = vmatprep.subr.mxu0 0.0
      %3471 = vmatpush1.msra.mxu0 %v3368
      %3472 = vmatprep.subr.mxu0 0.0
      %3473 = vmatpush1.msra.mxu0 0.0
      %3474 = vmatprep.subr.mxu0 0.0
      %3475 = vmatpush1.msra.mxu0 0.0
      %3476 = vmatprep.subr.mxu0 0.0
      %3477 = vmatpush1.msra.mxu0 0.0
      %3478 = vmatprep.subr.mxu0 0.0
      %3479 = vmatpush1.msra.mxu0 0.0
      %3480 = vmatprep.subr.mxu0 0.0
      %3481 = vmatpush1.msra.mxu0 0.0
      %3482 = vmatprep.subr.mxu0 0.0
      %3483 = vmatpush1.msra.mxu0 0.0
      %3484 = vmatprep.subr.mxu0 0.0
      %3485 = vmatpush1.msra.mxu0 0.0
      %3486 = vmatprep.subr.mxu0 0.0
      %3487 = vmatpush1.msra.mxu0 0.0
      %3488 = vmatprep.subr.mxu0 0.0
      %3489 = vmatpush1.msra.mxu0 0.0
      %3490 = vmatprep.subr.mxu0 0.0
      %3491 = vmatpush1.msra.mxu0 0.0
      %3492 = vmatprep.subr.mxu0 0.0
      %3493 = vmatpush1.msra.mxu0 0.0
      %3494 = vmatprep.subr.mxu0 0.0
      %3495 = vmatpush1.msra.mxu0 0.0
      %3496 = vmatprep.subr.mxu0 0.0
      %3497 = vmatpush1.msra.mxu0 0.0
      %3498 = vmatprep.subr.mxu0 0.0
      %3499 = vmatpush1.msra.mxu0 0.0
      %3500 = vmatprep.subr.mxu0 0.0
      %3501 = vmatpush1.msra.mxu0 0.0
      %3502 = vmatprep.subr.mxu0 0.0
      %3503 = vmatpush1.msra.mxu0 0.0
      %3504 = vmatprep.mubr.f32.mxu0 0.0
      %3505 = vmatmul.mubr.f32.gmra.mrb[0].mxu0 %v3320
      %v3506 = vpop.f32.mrb[0].mxu0
      %v3507 = vadd.f32 0.0, %v3506
      %v3508 = vpop.f32.mrb[0].mxu0
      %3509 = vdwg.mxu0
      %3510 = vst [vmem:[#allocation2] sm:$0xff] %v3436
      %3511 = vst [vmem:[#allocation2 + $0x8] sm:$0xff] %v3438
      %3512 = vst [vmem:[#allocation2 + $0x10] sm:$0xff] %v3507
    $region101: #{tpu_custom_call.1} parent=1 // pred_fallthru
      _
    %p3513 = scmp.eq.s32.totalorder %s3295, 0
    // Predicated region
    $region102: #{tpu_custom_call.1} parent=1 // pred_check
      %p3514 = pneg %p3513
    $region103: #{tpu_custom_call.1} parent=1 // pred_check_branch
      %3516 = sbr.rel (%p3514) target = $region105
    $region104: #{tpu_custom_call.1} parent=1 // pred_region
      %s3517 = scalar_lea.vmem [#allocation7], 144
      %v3518 = vld [vmem:[%s3517] sm:$0xff]
      %v3519 = vld [vmem:[%s3517 + $0x8] sm:$0xff]
      %v3520 = vld [vmem:[%s3517 + $0x10] sm:$0xff]
      %3521 = vst [vmem:[#allocation2] sm:$0xff] %v3518
      %3522 = vst [vmem:[#allocation2 + $0x8] sm:$0xff] %v3519
      %3523 = vst [vmem:[#allocation2 + $0x10] sm:$0xff] %v3520
    $region105: #{tpu_custom_call.1} parent=1 // pred_fallthru
      _
    %v3524 = vld [vmem:[#allocation2] sm:$0xff]
    %v3525 = vld [vmem:[#allocation2 + $0x8] sm:$0xff]
    %v3526 = vld [vmem:[#allocation2 + $0x10] sm:$0xff]
    %v3527 = vld [vmem:[#allocation10] sm:$0xff]
    %v3528 = vld [vmem:[#allocation10 + $0x8] sm:$0xff]
    %v3529 = vld [vmem:[#allocation10 + $0x10] sm:$0xff]
    %v3530 = vld [vmem:[#allocation10 + $0x18] sm:$0xff]
    %v3531 = vld [vmem:[#allocation10 + $0x20] sm:$0xff]
    %v3532 = vld [vmem:[#allocation10 + $0x28] sm:$0xff]
    %v3533 = vld [vmem:[#allocation10 + $0x30] sm:$0xff]
    %v3534 = vld [vmem:[#allocation10 + $0x38] sm:$0xff]
    %v3535 = vld [vmem:[#allocation10 + $0x40] sm:$0xff]
    %v3536 = vld [vmem:[#allocation10 + $0x48] sm:$0xff]
    %v3537 = vld [vmem:[#allocation10 + $0x50] sm:$0xff]
    %v3538 = vld [vmem:[#allocation10 + $0x58] sm:$0xff]
    %v3539 = vld [vmem:[#allocation10 + $0x60] sm:$0xff]
    %v3540 = vld [vmem:[#allocation10 + $0x68] sm:$0xff]
    %v3541 = vld [vmem:[#allocation10 + $0x70] sm:$0xff]
    %v3542 = vld [vmem:[#allocation10 + $0x78] sm:$0xff]
    %v3543 = vld [vmem:[#allocation10 + $0x80] sm:$0xff]
    %v3544 = vld [vmem:[#allocation10 + $0x88] sm:$0xff]
    %v3545 = vld [vmem:[#allocation10 + $0x90] sm:$0xff]
    %v3546 = vld [vmem:[#allocation10 + $0x98] sm:$0xff]
    %v3547 = vld [vmem:[#allocation10 + $0xa0] sm:$0xff]
    %v3548 = vld [vmem:[#allocation10 + $0xa8] sm:$0xff]
    %v3549 = vld [vmem:[#allocation10 + $0xb0] sm:$0xff]
    %v3550 = vld [vmem:[#allocation10 + $0xb8] sm:$0xff]
    %v3551 = vld [vmem:[#allocation10 + $0xc0] sm:$0xff]
    %v3552 = vld [vmem:[#allocation10 + $0xc8] sm:$0xff]
    %v3553 = vld [vmem:[#allocation10 + $0xd0] sm:$0xff]
    %v3554 = vld [vmem:[#allocation10 + $0xd8] sm:$0xff]
    %v3555 = vld [vmem:[#allocation10 + $0xe0] sm:$0xff]
    %v3556 = vld [vmem:[#allocation10 + $0xe8] sm:$0xff]
    %v3557 = vld [vmem:[#allocation10 + $0xf0] sm:$0xff]
    %v3558 = vld [vmem:[#allocation10 + $0xf8] sm:$0xff]
    %v3559 = vld [vmem:[#allocation10 + $0x100] sm:$0xff]
    %v3560 = vld [vmem:[#allocation10 + $0x108] sm:$0xff]
    %v3561 = vld [vmem:[#allocation10 + $0x110] sm:$0xff]
    %v3562 = vld [vmem:[#allocation10 + $0x118] sm:$0xff]
    %v3563 = vld [vmem:[#allocation10 + $0x120] sm:$0xff]
    %v3564 = vld [vmem:[#allocation10 + $0x128] sm:$0xff]
    %v3565 = vld [vmem:[#allocation10 + $0x130] sm:$0xff]
    %v3566 = vld [vmem:[#allocation10 + $0x138] sm:$0xff]
    %v3567 = vld [vmem:[#allocation10 + $0x140] sm:$0xff]
    %v3568 = vld [vmem:[#allocation10 + $0x148] sm:$0xff]
    %v3569 = vld [vmem:[#allocation10 + $0x150] sm:$0xff]
    %v3570 = vld [vmem:[#allocation10 + $0x158] sm:$0xff]
    %v3571 = vld [vmem:[#allocation10 + $0x160] sm:$0xff]
    %v3572 = vld [vmem:[#allocation10 + $0x168] sm:$0xff]
    %v3573 = vld [vmem:[#allocation10 + $0x170] sm:$0xff]
    %v3574 = vld [vmem:[#allocation10 + $0x178] sm:$0xff]
    %3575 = vmatprep.subr.mxu0 %v3528
    %3576 = vmatpush1.msra.mxu0 %v3527
    %3577 = vmatprep.subr.mxu0 %v3531
    %3578 = vmatpush1.msra.mxu0 %v3530
    %3579 = vmatprep.subr.mxu0 %v3534
    %3580 = vmatpush1.msra.mxu0 %v3533
    %3581 = vmatprep.subr.mxu0 %v3537
    %3582 = vmatpush1.msra.mxu0 %v3536
    %3583 = vmatprep.subr.mxu0 %v3540
    %3584 = vmatpush1.msra.mxu0 %v3539
    %3585 = vmatprep.subr.mxu0 %v3543
    %3586 = vmatpush1.msra.mxu0 %v3542
    %3587 = vmatprep.subr.mxu0 %v3546
    %3588 = vmatpush1.msra.mxu0 %v3545
    %3589 = vmatprep.subr.mxu0 %v3549
    %3590 = vmatpush1.msra.mxu0 %v3548
    %3591 = vmatprep.subr.mxu0 %v3552
    %3592 = vmatpush1.msra.mxu0 %v3551
    %3593 = vmatprep.subr.mxu0 %v3555
    %3594 = vmatpush1.msra.mxu0 %v3554
    %3595 = vmatprep.subr.mxu0 %v3558
    %3596 = vmatpush1.msra.mxu0 %v3557
    %3597 = vmatprep.subr.mxu0 %v3561
    %3598 = vmatpush1.msra.mxu0 %v3560
    %3599 = vmatprep.subr.mxu0 %v3564
    %3600 = vmatpush1.msra.mxu0 %v3563
    %3601 = vmatprep.subr.mxu0 %v3567
    %3602 = vmatpush1.msra.mxu0 %v3566
    %3603 = vmatprep.subr.mxu0 %v3570
    %3604 = vmatpush1.msra.mxu0 %v3569
    %3605 = vmatprep.subr.mxu0 %v3573
    %3606 = vmatpush1.msra.mxu0 %v3572
    %3607 = vmatprep.subr.mxu0 0.0
    %3608 = vmatpush1.msra.mxu0 0.0
    %3609 = vmatprep.subr.mxu0 0.0
    %3610 = vmatpush1.msra.mxu0 0.0
    %3611 = vmatprep.subr.mxu0 0.0
    %3612 = vmatpush1.msra.mxu0 0.0
    %3613 = vmatprep.subr.mxu0 0.0
    %3614 = vmatpush1.msra.mxu0 0.0
    %3615 = vmatprep.subr.mxu0 0.0
    %3616 = vmatpush1.msra.mxu0 0.0
    %3617 = vmatprep.subr.mxu0 0.0
    %3618 = vmatpush1.msra.mxu0 0.0
    %3619 = vmatprep.subr.mxu0 0.0
    %3620 = vmatpush1.msra.mxu0 0.0
    %3621 = vmatprep.subr.mxu0 0.0
    %3622 = vmatpush1.msra.mxu0 0.0
    %3623 = vmatprep.subr.mxu0 0.0
    %3624 = vmatpush1.msra.mxu0 0.0
    %3625 = vmatprep.subr.mxu0 0.0
    %3626 = vmatpush1.msra.mxu0 0.0
    %3627 = vmatprep.subr.mxu0 0.0
    %3628 = vmatpush1.msra.mxu0 0.0
    %3629 = vmatprep.subr.mxu0 0.0
    %3630 = vmatpush1.msra.mxu0 0.0
    %3631 = vmatprep.subr.mxu0 0.0
    %3632 = vmatpush1.msra.mxu0 0.0
    %3633 = vmatprep.subr.mxu0 0.0
    %3634 = vmatpush1.msra.mxu0 0.0
    %3635 = vmatprep.subr.mxu0 0.0
    %3636 = vmatpush1.msra.mxu0 0.0
    %3637 = vmatprep.subr.mxu0 0.0
    %3638 = vmatpush1.msra.mxu0 0.0
    %3639 = vmatprep.mubr.f32.mxu0 0.0
    %3640 = vmatmul.mubr.f32.gmra.mrb[0].mxu0 %v3206
    %v3641 = vpop.f32.mrb[0].mxu0
    %v3642 = vadd.f32 %v98, %v3641
    %v3643 = vpop.f32.mrb[0].mxu0
    %v3644 = vadd.f32 %v102, %v3643
    %3645 = vdwg.mxu0
    %3646 = vmatprep.subr.mxu0 0.0
    %3647 = vmatpush1.msra.mxu0 %v3529
    %3648 = vmatprep.subr.mxu0 0.0
    %3649 = vmatpush1.msra.mxu0 %v3532
    %3650 = vmatprep.subr.mxu0 0.0
    %3651 = vmatpush1.msra.mxu0 %v3535
    %3652 = vmatprep.subr.mxu0 0.0
    %3653 = vmatpush1.msra.mxu0 %v3538
    %3654 = vmatprep.subr.mxu0 0.0
    %3655 = vmatpush1.msra.mxu0 %v3541
    %3656 = vmatprep.subr.mxu0 0.0
    %3657 = vmatpush1.msra.mxu0 %v3544
    %3658 = vmatprep.subr.mxu0 0.0
    %3659 = vmatpush1.msra.mxu0 %v3547
    %3660 = vmatprep.subr.mxu0 0.0
    %3661 = vmatpush1.msra.mxu0 %v3550
    %3662 = vmatprep.subr.mxu0 0.0
    %3663 = vmatpush1.msra.mxu0 %v3553
    %3664 = vmatprep.subr.mxu0 0.0
    %3665 = vmatpush1.msra.mxu0 %v3556
    %3666 = vmatprep.subr.mxu0 0.0
    %3667 = vmatpush1.msra.mxu0 %v3559
    %3668 = vmatprep.subr.mxu0 0.0
    %3669 = vmatpush1.msra.mxu0 %v3562
    %3670 = vmatprep.subr.mxu0 0.0
    %3671 = vmatpush1.msra.mxu0 %v3565
    %3672 = vmatprep.subr.mxu0 0.0
    %3673 = vmatpush1.msra.mxu0 %v3568
    %3674 = vmatprep.subr.mxu0 0.0
    %3675 = vmatpush1.msra.mxu0 %v3571
    %3676 = vmatprep.subr.mxu0 0.0
    %3677 = vmatpush1.msra.mxu0 %v3574
    %3678 = vmatprep.subr.mxu0 0.0
    %3679 = vmatpush1.msra.mxu0 0.0
    %3680 = vmatprep.subr.mxu0 0.0
    %3681 = vmatpush1.msra.mxu0 0.0
    %3682 = vmatprep.subr.mxu0 0.0
    %3683 = vmatpush1.msra.mxu0 0.0
    %3684 = vmatprep.subr.mxu0 0.0
    %3685 = vmatpush1.msra.mxu0 0.0
    %3686 = vmatprep.subr.mxu0 0.0
    %3687 = vmatpush1.msra.mxu0 0.0
    %3688 = vmatprep.subr.mxu0 0.0
    %3689 = vmatpush1.msra.mxu0 0.0
    %3690 = vmatprep.subr.mxu0 0.0
    %3691 = vmatpush1.msra.mxu0 0.0
    %3692 = vmatprep.subr.mxu0 0.0
    %3693 = vmatpush1.msra.mxu0 0.0
    %3694 = vmatprep.subr.mxu0 0.0
    %3695 = vmatpush1.msra.mxu0 0.0
    %3696 = vmatprep.subr.mxu0 0.0
    %3697 = vmatpush1.msra.mxu0 0.0
    %3698 = vmatprep.subr.mxu0 0.0
    %3699 = vmatpush1.msra.mxu0 0.0
    %3700 = vmatprep.subr.mxu0 0.0
    %3701 = vmatpush1.msra.mxu0 0.0
    %3702 = vmatprep.subr.mxu0 0.0
    %3703 = vmatpush1.msra.mxu0 0.0
    %3704 = vmatprep.subr.mxu0 0.0
    %3705 = vmatpush1.msra.mxu0 0.0
    %3706 = vmatprep.subr.mxu0 0.0
    %3707 = vmatpush1.msra.mxu0 0.0
    %3708 = vmatprep.subr.mxu0 0.0
    %3709 = vmatpush1.msra.mxu0 0.0
    %3710 = vmatprep.mubr.f32.mxu0 0.0
    %3711 = vmatmul.mubr.f32.gmra.mrb[0].mxu0 %v3206
    %v3712 = vpop.f32.mrb[0].mxu0
    %v3713 = vadd.f32 %v106, %v3712
    %v3714 = vpop.f32.mrb[0].mxu0
    %3715 = vdwg.mxu0
    %v3716 = vadd.f32 %v3524, %v3642
    %v3717 = vxor.u32 %v3716, 2147483648
    %v3718 = vmul.f32 %v3717, 1.442695
    %v3719 = vpow.pop %v3718
    %v3720 = vadd.f32 %v3719, 1.0
    %v3721 = vrcp.pop %v3720
    %v3722 = vmul.f32 1.0, %v3721
    %v3723 = vadd.f32 %v3525, %v3644
    %v3724 = vxor.u32 %v3723, 2147483648
    %v3725 = vmul.f32 %v3724, 1.442695
    %v3726 = vpow.pop %v3725
    %v3727 = vadd.f32 %v3726, 1.0
    %v3728 = vrcp.pop %v3727
    %v3729 = vmul.f32 1.0, %v3728
    %v3730 = vmul.f32 %v3722, %v3713
    %v3731 = vadd.f32 %v3526, %v3730
    %v3732 = vtanh.pop %v3731
    %v3733 = vsub.f32 1.0, %v3729
    %v3734 = vmul.f32 %v3733, %v3732
    %v3735 = vmul.f32 %v3729, %v3206
    %v3736 = vadd.f32 %v3734, %v3735
    %v3737 = vld [vmem:[#allocation11] sm:$0xff]
    %v3738 = vld [vmem:[#allocation11 + $0x8] sm:$0xff]
    %v3739 = vld [vmem:[#allocation11 + $0x10] sm:$0xff]
    %v3740 = vld [vmem:[#allocation11 + $0x18] sm:$0xff]
    %v3741 = vld [vmem:[#allocation11 + $0x20] sm:$0xff]
    %v3742 = vld [vmem:[#allocation11 + $0x28] sm:$0xff]
    %v3743 = vld [vmem:[#allocation11 + $0x30] sm:$0xff]
    %v3744 = vld [vmem:[#allocation11 + $0x38] sm:$0xff]
    %v3745 = vld [vmem:[#allocation11 + $0x40] sm:$0xff]
    %v3746 = vld [vmem:[#allocation11 + $0x48] sm:$0xff]
    %v3747 = vld [vmem:[#allocation11 + $0x50] sm:$0xff]
    %v3748 = vld [vmem:[#allocation11 + $0x58] sm:$0xff]
    %v3749 = vld [vmem:[#allocation11 + $0x60] sm:$0xff]
    %v3750 = vld [vmem:[#allocation11 + $0x68] sm:$0xff]
    %v3751 = vld [vmem:[#allocation11 + $0x70] sm:$0xff]
    %v3752 = vld [vmem:[#allocation11 + $0x78] sm:$0xff]
    %3753 = vmatprep.subr.mxu0 0.0
    %3754 = vmatpush1.msra.mxu0 %v3737
    %3755 = vmatprep.subr.mxu0 0.0
    %3756 = vmatpush1.msra.mxu0 %v3738
    %3757 = vmatprep.subr.mxu0 0.0
    %3758 = vmatpush1.msra.mxu0 %v3739
    %3759 = vmatprep.subr.mxu0 0.0
    %3760 = vmatpush1.msra.mxu0 %v3740
    %3761 = vmatprep.subr.mxu0 0.0
    %3762 = vmatpush1.msra.mxu0 %v3741
    %3763 = vmatprep.subr.mxu0 0.0
    %3764 = vmatpush1.msra.mxu0 %v3742
    %3765 = vmatprep.subr.mxu0 0.0
    %3766 = vmatpush1.msra.mxu0 %v3743
    %3767 = vmatprep.subr.mxu0 0.0
    %3768 = vmatpush1.msra.mxu0 %v3744
    %3769 = vmatprep.subr.mxu0 0.0
    %3770 = vmatpush1.msra.mxu0 %v3745
    %3771 = vmatprep.subr.mxu0 0.0
    %3772 = vmatpush1.msra.mxu0 %v3746
    %3773 = vmatprep.subr.mxu0 0.0
    %3774 = vmatpush1.msra.mxu0 %v3747
    %3775 = vmatprep.subr.mxu0 0.0
    %3776 = vmatpush1.msra.mxu0 %v3748
    %3777 = vmatprep.subr.mxu0 0.0
    %3778 = vmatpush1.msra.mxu0 %v3749
    %3779 = vmatprep.subr.mxu0 0.0
    %3780 = vmatpush1.msra.mxu0 %v3750
    %3781 = vmatprep.subr.mxu0 0.0
    %3782 = vmatpush1.msra.mxu0 %v3751
    %3783 = vmatprep.subr.mxu0 0.0
    %3784 = vmatpush1.msra.mxu0 %v3752
    %3785 = vmatprep.subr.mxu0 0.0
    %3786 = vmatpush1.msra.mxu0 0.0
    %3787 = vmatprep.subr.mxu0 0.0
    %3788 = vmatpush1.msra.mxu0 0.0
    %3789 = vmatprep.subr.mxu0 0.0
    %3790 = vmatpush1.msra.mxu0 0.0
    %3791 = vmatprep.subr.mxu0 0.0
    %3792 = vmatpush1.msra.mxu0 0.0
    %3793 = vmatprep.subr.mxu0 0.0
    %3794 = vmatpush1.msra.mxu0 0.0
    %3795 = vmatprep.subr.mxu0 0.0
    %3796 = vmatpush1.msra.mxu0 0.0
    %3797 = vmatprep.subr.mxu0 0.0
    %3798 = vmatpush1.msra.mxu0 0.0
    %3799 = vmatprep.subr.mxu0 0.0
    %3800 = vmatpush1.msra.mxu0 0.0
    %3801 = vmatprep.subr.mxu0 0.0
    %3802 = vmatpush1.msra.mxu0 0.0
    %3803 = vmatprep.subr.mxu0 0.0
    %3804 = vmatpush1.msra.mxu0 0.0
    %3805 = vmatprep.subr.mxu0 0.0
    %3806 = vmatpush1.msra.mxu0 0.0
    %3807 = vmatprep.subr.mxu0 0.0
    %3808 = vmatpush1.msra.mxu0 0.0
    %3809 = vmatprep.subr.mxu0 0.0
    %3810 = vmatpush1.msra.mxu0 0.0
    %3811 = vmatprep.subr.mxu0 0.0
    %3812 = vmatpush1.msra.mxu0 0.0
    %3813 = vmatprep.subr.mxu0 0.0
    %3814 = vmatpush1.msra.mxu0 0.0
    %3815 = vmatprep.subr.mxu0 0.0
    %3816 = vmatpush1.msra.mxu0 0.0
    %3817 = vmatprep.mubr.f32.mxu0 0.0
    %3818 = vmatmul.mubr.f32.gmra.mrb[0].mxu0 %v3736
    %v3819 = vpop.f32.mrb[0].mxu0
    %v3820 = vadd.f32 %v115, %v3819
    %v3821 = vpop.f32.mrb[0].mxu0
    %3822 = vdwg.mxu0
    %s3823 = scalar_lea.vmem [#allocation13], 48
    %3824 = vst [vmem:[%s3823] sm:$0xff] %v3820
    %s3825 = sld [smem:[#allocation3 + $0x7]]
    %p3826 = scmp.eq.s32.totalorder %s3825, 1
    // Predicated region
    $region106: #{tpu_custom_call.1} parent=1 // pred_check
      %p3827 = pneg %p3826
    $region107: #{tpu_custom_call.1} parent=1 // pred_check_branch
      %3829 = sbr.rel (%p3827) target = $region109
    $region108: #{tpu_custom_call.1} parent=1 // pred_region
      %3830 = vmax.xlane.f32.xlu0 %v3820
      %v3831 = vpop.xlane.xlu0 %3830
      %vm3832 = vcmp.eq.f32.partialorder %v3820, %v3831
      %v3833 = vsel %vm3832, %v118, 128
      %v3834 = vand.u32 %v3833, 65535
      %v3835 = vshra.s32 %v3833, 16
      %v3836 = vcvt.s32.f32 %v3834
      %v3837 = vcvt.s32.f32 %v3835
      %3838 = vmin.xlane.f32.xlu0 %v3837
      %v3839 = vpop.xlane.xlu0 %3838
      %vm3840 = vcmp.eq.f32.partialorder %v3837, %v3839
      %v3841 = vsel %vm3840, %v3836, inf
      %3842 = vmin.xlane.f32.xlu0 %v3841
      %v3843 = vpop.xlane.xlu0 %3842
      %v3844 = vcvt.f32.s32 %v3843
      %v3845 = vcvt.f32.s32 %v3839
      %v3846 = vshll.u32 %v3845, 16
      %v3847 = vadd.s32 %v3846, %v3844
      %vm3848 = vcmp.eq.s32.totalorder %v118, %v3847
      %v3849 = vsel %vm3848, 1, 0
      %v3850 = vcvt.s32.f32 %v3849
      %v3851 = vld [vmem:[#allocation8] sm:$0xff]
      %v3852 = vld [vmem:[#allocation8 + $0x8] sm:$0xff]
      %v3853 = vld [vmem:[#allocation8 + $0x10] sm:$0xff]
      %v3854 = vld [vmem:[#allocation8 + $0x18] sm:$0xff]
      %v3855 = vld [vmem:[#allocation8 + $0x20] sm:$0xff]
      %v3856 = vld [vmem:[#allocation8 + $0x28] sm:$0xff]
      %v3857 = vld [vmem:[#allocation8 + $0x30] sm:$0xff]
      %v3858 = vld [vmem:[#allocation8 + $0x38] sm:$0xff]
      %v3859 = vld [vmem:[#allocation8 + $0x40] sm:$0xff]
      %v3860 = vld [vmem:[#allocation8 + $0x48] sm:$0xff]
      %v3861 = vld [vmem:[#allocation8 + $0x50] sm:$0xff]
      %v3862 = vld [vmem:[#allocation8 + $0x58] sm:$0xff]
      %v3863 = vld [vmem:[#allocation8 + $0x60] sm:$0xff]
      %v3864 = vld [vmem:[#allocation8 + $0x68] sm:$0xff]
      %v3865 = vld [vmem:[#allocation8 + $0x70] sm:$0xff]
      %v3866 = vld [vmem:[#allocation8 + $0x78] sm:$0xff]
      %v3867 = vld [vmem:[#allocation8 + $0x80] sm:$0xff]
      %v3868 = vld [vmem:[#allocation8 + $0x88] sm:$0xff]
      %v3869 = vld [vmem:[#allocation8 + $0x90] sm:$0xff]
      %v3870 = vld [vmem:[#allocation8 + $0x98] sm:$0xff]
      %v3871 = vld [vmem:[#allocation8 + $0xa0] sm:$0xff]
      %v3872 = vld [vmem:[#allocation8 + $0xa8] sm:$0xff]
      %v3873 = vld [vmem:[#allocation8 + $0xb0] sm:$0xff]
      %v3874 = vld [vmem:[#allocation8 + $0xb8] sm:$0xff]
      %v3875 = vld [vmem:[#allocation8 + $0xc0] sm:$0xff]
      %v3876 = vld [vmem:[#allocation8 + $0xc8] sm:$0xff]
      %v3877 = vld [vmem:[#allocation8 + $0xd0] sm:$0xff]
      %v3878 = vld [vmem:[#allocation8 + $0xd8] sm:$0xff]
      %v3879 = vld [vmem:[#allocation8 + $0xe0] sm:$0xff]
      %v3880 = vld [vmem:[#allocation8 + $0xe8] sm:$0xff]
      %v3881 = vld [vmem:[#allocation8 + $0xf0] sm:$0xff]
      %v3882 = vld [vmem:[#allocation8 + $0xf8] sm:$0xff]
      %v3883 = vld [vmem:[#allocation8 + $0x100] sm:$0xff]
      %v3884 = vld [vmem:[#allocation8 + $0x108] sm:$0xff]
      %v3885 = vld [vmem:[#allocation8 + $0x110] sm:$0xff]
      %v3886 = vld [vmem:[#allocation8 + $0x118] sm:$0xff]
      %v3887 = vld [vmem:[#allocation8 + $0x120] sm:$0xff]
      %v3888 = vld [vmem:[#allocation8 + $0x128] sm:$0xff]
      %v3889 = vld [vmem:[#allocation8 + $0x130] sm:$0xff]
      %v3890 = vld [vmem:[#allocation8 + $0x138] sm:$0xff]
      %v3891 = vld [vmem:[#allocation8 + $0x140] sm:$0xff]
      %v3892 = vld [vmem:[#allocation8 + $0x148] sm:$0xff]
      %v3893 = vld [vmem:[#allocation8 + $0x150] sm:$0xff]
      %v3894 = vld [vmem:[#allocation8 + $0x158] sm:$0xff]
      %v3895 = vld [vmem:[#allocation8 + $0x160] sm:$0xff]
      %v3896 = vld [vmem:[#allocation8 + $0x168] sm:$0xff]
      %v3897 = vld [vmem:[#allocation8 + $0x170] sm:$0xff]
      %v3898 = vld [vmem:[#allocation8 + $0x178] sm:$0xff]
      %3899 = vmatprep.subr.mxu0 %v3852
      %3900 = vmatpush1.msra.mxu0 %v3851
      %3901 = vmatprep.subr.mxu0 %v3855
      %3902 = vmatpush1.msra.mxu0 %v3854
      %3903 = vmatprep.subr.mxu0 %v3858
      %3904 = vmatpush1.msra.mxu0 %v3857
      %3905 = vmatprep.subr.mxu0 %v3861
      %3906 = vmatpush1.msra.mxu0 %v3860
      %3907 = vmatprep.subr.mxu0 %v3864
      %3908 = vmatpush1.msra.mxu0 %v3863
      %3909 = vmatprep.subr.mxu0 %v3867
      %3910 = vmatpush1.msra.mxu0 %v3866
      %3911 = vmatprep.subr.mxu0 %v3870
      %3912 = vmatpush1.msra.mxu0 %v3869
      %3913 = vmatprep.subr.mxu0 %v3873
      %3914 = vmatpush1.msra.mxu0 %v3872
      %3915 = vmatprep.subr.mxu0 %v3876
      %3916 = vmatpush1.msra.mxu0 %v3875
      %3917 = vmatprep.subr.mxu0 %v3879
      %3918 = vmatpush1.msra.mxu0 %v3878
      %3919 = vmatprep.subr.mxu0 %v3882
      %3920 = vmatpush1.msra.mxu0 %v3881
      %3921 = vmatprep.subr.mxu0 %v3885
      %3922 = vmatpush1.msra.mxu0 %v3884
      %3923 = vmatprep.subr.mxu0 %v3888
      %3924 = vmatpush1.msra.mxu0 %v3887
      %3925 = vmatprep.subr.mxu0 %v3891
      %3926 = vmatpush1.msra.mxu0 %v3890
      %3927 = vmatprep.subr.mxu0 %v3894
      %3928 = vmatpush1.msra.mxu0 %v3893
      %3929 = vmatprep.subr.mxu0 %v3897
      %3930 = vmatpush1.msra.mxu0 %v3896
      %3931 = vmatprep.subr.mxu0 0.0
      %3932 = vmatpush1.msra.mxu0 0.0
      %3933 = vmatprep.subr.mxu0 0.0
      %3934 = vmatpush1.msra.mxu0 0.0
      %3935 = vmatprep.subr.mxu0 0.0
      %3936 = vmatpush1.msra.mxu0 0.0
      %3937 = vmatprep.subr.mxu0 0.0
      %3938 = vmatpush1.msra.mxu0 0.0
      %3939 = vmatprep.subr.mxu0 0.0
      %3940 = vmatpush1.msra.mxu0 0.0
      %3941 = vmatprep.subr.mxu0 0.0
      %3942 = vmatpush1.msra.mxu0 0.0
      %3943 = vmatprep.subr.mxu0 0.0
      %3944 = vmatpush1.msra.mxu0 0.0
      %3945 = vmatprep.subr.mxu0 0.0
      %3946 = vmatpush1.msra.mxu0 0.0
      %3947 = vmatprep.subr.mxu0 0.0
      %3948 = vmatpush1.msra.mxu0 0.0
      %3949 = vmatprep.subr.mxu0 0.0
      %3950 = vmatpush1.msra.mxu0 0.0
      %3951 = vmatprep.subr.mxu0 0.0
      %3952 = vmatpush1.msra.mxu0 0.0
      %3953 = vmatprep.subr.mxu0 0.0
      %3954 = vmatpush1.msra.mxu0 0.0
      %3955 = vmatprep.subr.mxu0 0.0
      %3956 = vmatpush1.msra.mxu0 0.0
      %3957 = vmatprep.subr.mxu0 0.0
      %3958 = vmatpush1.msra.mxu0 0.0
      %3959 = vmatprep.subr.mxu0 0.0
      %3960 = vmatpush1.msra.mxu0 0.0
      %3961 = vmatprep.subr.mxu0 0.0
      %3962 = vmatpush1.msra.mxu0 0.0
      %3963 = vmatprep.mubr.f32.mxu0 0.0
      %3964 = vmatmul.mubr.f32.gmra.mrb[0].mxu0 %v3850
      %v3965 = vpop.f32.mrb[0].mxu0
      %v3966 = vadd.f32 0.0, %v3965
      %v3967 = vpop.f32.mrb[0].mxu0
      %v3968 = vadd.f32 0.0, %v3967
      %3969 = vdwg.mxu0
      %3970 = vmatprep.subr.mxu0 0.0
      %3971 = vmatpush1.msra.mxu0 %v3853
      %3972 = vmatprep.subr.mxu0 0.0
      %3973 = vmatpush1.msra.mxu0 %v3856
      %3974 = vmatprep.subr.mxu0 0.0
      %3975 = vmatpush1.msra.mxu0 %v3859
      %3976 = vmatprep.subr.mxu0 0.0
      %3977 = vmatpush1.msra.mxu0 %v3862
      %3978 = vmatprep.subr.mxu0 0.0
      %3979 = vmatpush1.msra.mxu0 %v3865
      %3980 = vmatprep.subr.mxu0 0.0
      %3981 = vmatpush1.msra.mxu0 %v3868
      %3982 = vmatprep.subr.mxu0 0.0
      %3983 = vmatpush1.msra.mxu0 %v3871
      %3984 = vmatprep.subr.mxu0 0.0
      %3985 = vmatpush1.msra.mxu0 %v3874
      %3986 = vmatprep.subr.mxu0 0.0
      %3987 = vmatpush1.msra.mxu0 %v3877
      %3988 = vmatprep.subr.mxu0 0.0
      %3989 = vmatpush1.msra.mxu0 %v3880
      %3990 = vmatprep.subr.mxu0 0.0
      %3991 = vmatpush1.msra.mxu0 %v3883
      %3992 = vmatprep.subr.mxu0 0.0
      %3993 = vmatpush1.msra.mxu0 %v3886
      %3994 = vmatprep.subr.mxu0 0.0
      %3995 = vmatpush1.msra.mxu0 %v3889
      %3996 = vmatprep.subr.mxu0 0.0
      %3997 = vmatpush1.msra.mxu0 %v3892
      %3998 = vmatprep.subr.mxu0 0.0
      %3999 = vmatpush1.msra.mxu0 %v3895
      %4000 = vmatprep.subr.mxu0 0.0
      %4001 = vmatpush1.msra.mxu0 %v3898
      %4002 = vmatprep.subr.mxu0 0.0
      %4003 = vmatpush1.msra.mxu0 0.0
      %4004 = vmatprep.subr.mxu0 0.0
      %4005 = vmatpush1.msra.mxu0 0.0
      %4006 = vmatprep.subr.mxu0 0.0
      %4007 = vmatpush1.msra.mxu0 0.0
      %4008 = vmatprep.subr.mxu0 0.0
      %4009 = vmatpush1.msra.mxu0 0.0
      %4010 = vmatprep.subr.mxu0 0.0
      %4011 = vmatpush1.msra.mxu0 0.0
      %4012 = vmatprep.subr.mxu0 0.0
      %4013 = vmatpush1.msra.mxu0 0.0
      %4014 = vmatprep.subr.mxu0 0.0
      %4015 = vmatpush1.msra.mxu0 0.0
      %4016 = vmatprep.subr.mxu0 0.0
      %4017 = vmatpush1.msra.mxu0 0.0
      %4018 = vmatprep.subr.mxu0 0.0
      %4019 = vmatpush1.msra.mxu0 0.0
      %4020 = vmatprep.subr.mxu0 0.0
      %4021 = vmatpush1.msra.mxu0 0.0
      %4022 = vmatprep.subr.mxu0 0.0
      %4023 = vmatpush1.msra.mxu0 0.0
      %4024 = vmatprep.subr.mxu0 0.0
      %4025 = vmatpush1.msra.mxu0 0.0
      %4026 = vmatprep.subr.mxu0 0.0
      %4027 = vmatpush1.msra.mxu0 0.0
      %4028 = vmatprep.subr.mxu0 0.0
      %4029 = vmatpush1.msra.mxu0 0.0
      %4030 = vmatprep.subr.mxu0 0.0
      %4031 = vmatpush1.msra.mxu0 0.0
      %4032 = vmatprep.subr.mxu0 0.0
      %4033 = vmatpush1.msra.mxu0 0.0
      %4034 = vmatprep.mubr.f32.mxu0 0.0
      %4035 = vmatmul.mubr.f32.gmra.mrb[0].mxu0 %v3850
      %v4036 = vpop.f32.mrb[0].mxu0
      %v4037 = vadd.f32 0.0, %v4036
      %v4038 = vpop.f32.mrb[0].mxu0
      %4039 = vdwg.mxu0
      %4040 = vst [vmem:[#allocation2] sm:$0xff] %v3966
      %4041 = vst [vmem:[#allocation2 + $0x8] sm:$0xff] %v3968
      %4042 = vst [vmem:[#allocation2 + $0x10] sm:$0xff] %v4037
    $region109: #{tpu_custom_call.1} parent=1 // pred_fallthru
      _
    %p4043 = scmp.eq.s32.totalorder %s3825, 0
    // Predicated region
    $region110: #{tpu_custom_call.1} parent=1 // pred_check
      %p4044 = pneg %p4043
    $region111: #{tpu_custom_call.1} parent=1 // pred_check_branch
      %4046 = sbr.rel (%p4044) target = $region113
    $region112: #{tpu_custom_call.1} parent=1 // pred_region
      %s4047 = scalar_lea.vmem [#allocation7], 168
      %v4048 = vld [vmem:[%s4047] sm:$0xff]
      %v4049 = vld [vmem:[%s4047 + $0x8] sm:$0xff]
      %v4050 = vld [vmem:[%s4047 + $0x10] sm:$0xff]
      %4051 = vst [vmem:[#allocation2] sm:$0xff] %v4048
      %4052 = vst [vmem:[#allocation2 + $0x8] sm:$0xff] %v4049
      %4053 = vst [vmem:[#allocation2 + $0x10] sm:$0xff] %v4050
    $region113: #{tpu_custom_call.1} parent=1 // pred_fallthru
      _
    %v4054 = vld [vmem:[#allocation2] sm:$0xff]
    %v4055 = vld [vmem:[#allocation2 + $0x8] sm:$0xff]
    %v4056 = vld [vmem:[#allocation2 + $0x10] sm:$0xff]
    %v4057 = vld [vmem:[#allocation10] sm:$0xff]
    %v4058 = vld [vmem:[#allocation10 + $0x8] sm:$0xff]
    %v4059 = vld [vmem:[#allocation10 + $0x10] sm:$0xff]
    %v4060 = vld [vmem:[#allocation10 + $0x18] sm:$0xff]
    %v4061 = vld [vmem:[#allocation10 + $0x20] sm:$0xff]
    %v4062 = vld [vmem:[#allocation10 + $0x28] sm:$0xff]
    %v4063 = vld [vmem:[#allocation10 + $0x30] sm:$0xff]
    %v4064 = vld [vmem:[#allocation10 + $0x38] sm:$0xff]
    %v4065 = vld [vmem:[#allocation10 + $0x40] sm:$0xff]
    %v4066 = vld [vmem:[#allocation10 + $0x48] sm:$0xff]
    %v4067 = vld [vmem:[#allocation10 + $0x50] sm:$0xff]
    %v4068 = vld [vmem:[#allocation10 + $0x58] sm:$0xff]
    %v4069 = vld [vmem:[#allocation10 + $0x60] sm:$0xff]
    %v4070 = vld [vmem:[#allocation10 + $0x68] sm:$0xff]
    %v4071 = vld [vmem:[#allocation10 + $0x70] sm:$0xff]
    %v4072 = vld [vmem:[#allocation10 + $0x78] sm:$0xff]
    %v4073 = vld [vmem:[#allocation10 + $0x80] sm:$0xff]
    %v4074 = vld [vmem:[#allocation10 + $0x88] sm:$0xff]
    %v4075 = vld [vmem:[#allocation10 + $0x90] sm:$0xff]
    %v4076 = vld [vmem:[#allocation10 + $0x98] sm:$0xff]
    %v4077 = vld [vmem:[#allocation10 + $0xa0] sm:$0xff]
    %v4078 = vld [vmem:[#allocation10 + $0xa8] sm:$0xff]
    %v4079 = vld [vmem:[#allocation10 + $0xb0] sm:$0xff]
    %v4080 = vld [vmem:[#allocation10 + $0xb8] sm:$0xff]
    %v4081 = vld [vmem:[#allocation10 + $0xc0] sm:$0xff]
    %v4082 = vld [vmem:[#allocation10 + $0xc8] sm:$0xff]
    %v4083 = vld [vmem:[#allocation10 + $0xd0] sm:$0xff]
    %v4084 = vld [vmem:[#allocation10 + $0xd8] sm:$0xff]
    %v4085 = vld [vmem:[#allocation10 + $0xe0] sm:$0xff]
    %v4086 = vld [vmem:[#allocation10 + $0xe8] sm:$0xff]
    %v4087 = vld [vmem:[#allocation10 + $0xf0] sm:$0xff]
    %v4088 = vld [vmem:[#allocation10 + $0xf8] sm:$0xff]
    %v4089 = vld [vmem:[#allocation10 + $0x100] sm:$0xff]
    %v4090 = vld [vmem:[#allocation10 + $0x108] sm:$0xff]
    %v4091 = vld [vmem:[#allocation10 + $0x110] sm:$0xff]
    %v4092 = vld [vmem:[#allocation10 + $0x118] sm:$0xff]
    %v4093 = vld [vmem:[#allocation10 + $0x120] sm:$0xff]
    %v4094 = vld [vmem:[#allocation10 + $0x128] sm:$0xff]
    %v4095 = vld [vmem:[#allocation10 + $0x130] sm:$0xff]
    %v4096 = vld [vmem:[#allocation10 + $0x138] sm:$0xff]
    %v4097 = vld [vmem:[#allocation10 + $0x140] sm:$0xff]
    %v4098 = vld [vmem:[#allocation10 + $0x148] sm:$0xff]
    %v4099 = vld [vmem:[#allocation10 + $0x150] sm:$0xff]
    %v4100 = vld [vmem:[#allocation10 + $0x158] sm:$0xff]
    %v4101 = vld [vmem:[#allocation10 + $0x160] sm:$0xff]
    %v4102 = vld [vmem:[#allocation10 + $0x168] sm:$0xff]
    %v4103 = vld [vmem:[#allocation10 + $0x170] sm:$0xff]
    %v4104 = vld [vmem:[#allocation10 + $0x178] sm:$0xff]
    %4105 = vmatprep.subr.mxu0 %v4058
    %4106 = vmatpush1.msra.mxu0 %v4057
    %4107 = vmatprep.subr.mxu0 %v4061
    %4108 = vmatpush1.msra.mxu0 %v4060
    %4109 = vmatprep.subr.mxu0 %v4064
    %4110 = vmatpush1.msra.mxu0 %v4063
    %4111 = vmatprep.subr.mxu0 %v4067
    %4112 = vmatpush1.msra.mxu0 %v4066
    %4113 = vmatprep.subr.mxu0 %v4070
    %4114 = vmatpush1.msra.mxu0 %v4069
    %4115 = vmatprep.subr.mxu0 %v4073
    %4116 = vmatpush1.msra.mxu0 %v4072
    %4117 = vmatprep.subr.mxu0 %v4076
    %4118 = vmatpush1.msra.mxu0 %v4075
    %4119 = vmatprep.subr.mxu0 %v4079
    %4120 = vmatpush1.msra.mxu0 %v4078
    %4121 = vmatprep.subr.mxu0 %v4082
    %4122 = vmatpush1.msra.mxu0 %v4081
    %4123 = vmatprep.subr.mxu0 %v4085
    %4124 = vmatpush1.msra.mxu0 %v4084
    %4125 = vmatprep.subr.mxu0 %v4088
    %4126 = vmatpush1.msra.mxu0 %v4087
    %4127 = vmatprep.subr.mxu0 %v4091
    %4128 = vmatpush1.msra.mxu0 %v4090
    %4129 = vmatprep.subr.mxu0 %v4094
    %4130 = vmatpush1.msra.mxu0 %v4093
    %4131 = vmatprep.subr.mxu0 %v4097
    %4132 = vmatpush1.msra.mxu0 %v4096
    %4133 = vmatprep.subr.mxu0 %v4100
    %4134 = vmatpush1.msra.mxu0 %v4099
    %4135 = vmatprep.subr.mxu0 %v4103
    %4136 = vmatpush1.msra.mxu0 %v4102
    %4137 = vmatprep.subr.mxu0 0.0
    %4138 = vmatpush1.msra.mxu0 0.0
    %4139 = vmatprep.subr.mxu0 0.0
    %4140 = vmatpush1.msra.mxu0 0.0
    %4141 = vmatprep.subr.mxu0 0.0
    %4142 = vmatpush1.msra.mxu0 0.0
    %4143 = vmatprep.subr.mxu0 0.0
    %4144 = vmatpush1.msra.mxu0 0.0
    %4145 = vmatprep.subr.mxu0 0.0
    %4146 = vmatpush1.msra.mxu0 0.0
    %4147 = vmatprep.subr.mxu0 0.0
    %4148 = vmatpush1.msra.mxu0 0.0
    %4149 = vmatprep.subr.mxu0 0.0
    %4150 = vmatpush1.msra.mxu0 0.0
    %4151 = vmatprep.subr.mxu0 0.0
    %4152 = vmatpush1.msra.mxu0 0.0
    %4153 = vmatprep.subr.mxu0 0.0
    %4154 = vmatpush1.msra.mxu0 0.0
    %4155 = vmatprep.subr.mxu0 0.0
    %4156 = vmatpush1.msra.mxu0 0.0
    %4157 = vmatprep.subr.mxu0 0.0
    %4158 = vmatpush1.msra.mxu0 0.0
    %4159 = vmatprep.subr.mxu0 0.0
    %4160 = vmatpush1.msra.mxu0 0.0
    %4161 = vmatprep.subr.mxu0 0.0
    %4162 = vmatpush1.msra.mxu0 0.0
    %4163 = vmatprep.subr.mxu0 0.0
    %4164 = vmatpush1.msra.mxu0 0.0
    %4165 = vmatprep.subr.mxu0 0.0
    %4166 = vmatpush1.msra.mxu0 0.0
    %4167 = vmatprep.subr.mxu0 0.0
    %4168 = vmatpush1.msra.mxu0 0.0
    %4169 = vmatprep.mubr.f32.mxu0 0.0
    %4170 = vmatmul.mubr.f32.gmra.mrb[0].mxu0 %v3736
    %v4171 = vpop.f32.mrb[0].mxu0
    %v4172 = vadd.f32 %v98, %v4171
    %v4173 = vpop.f32.mrb[0].mxu0
    %v4174 = vadd.f32 %v102, %v4173
    %4175 = vdwg.mxu0
    %4176 = vmatprep.subr.mxu0 0.0
    %4177 = vmatpush1.msra.mxu0 %v4059
    %4178 = vmatprep.subr.mxu0 0.0
    %4179 = vmatpush1.msra.mxu0 %v4062
    %4180 = vmatprep.subr.mxu0 0.0
    %4181 = vmatpush1.msra.mxu0 %v4065
    %4182 = vmatprep.subr.mxu0 0.0
    %4183 = vmatpush1.msra.mxu0 %v4068
    %4184 = vmatprep.subr.mxu0 0.0
    %4185 = vmatpush1.msra.mxu0 %v4071
    %4186 = vmatprep.subr.mxu0 0.0
    %4187 = vmatpush1.msra.mxu0 %v4074
    %4188 = vmatprep.subr.mxu0 0.0
    %4189 = vmatpush1.msra.mxu0 %v4077
    %4190 = vmatprep.subr.mxu0 0.0
    %4191 = vmatpush1.msra.mxu0 %v4080
    %4192 = vmatprep.subr.mxu0 0.0
    %4193 = vmatpush1.msra.mxu0 %v4083
    %4194 = vmatprep.subr.mxu0 0.0
    %4195 = vmatpush1.msra.mxu0 %v4086
    %4196 = vmatprep.subr.mxu0 0.0
    %4197 = vmatpush1.msra.mxu0 %v4089
    %4198 = vmatprep.subr.mxu0 0.0
    %4199 = vmatpush1.msra.mxu0 %v4092
    %4200 = vmatprep.subr.mxu0 0.0
    %4201 = vmatpush1.msra.mxu0 %v4095
    %4202 = vmatprep.subr.mxu0 0.0
    %4203 = vmatpush1.msra.mxu0 %v4098
    %4204 = vmatprep.subr.mxu0 0.0
    %4205 = vmatpush1.msra.mxu0 %v4101
    %4206 = vmatprep.subr.mxu0 0.0
    %4207 = vmatpush1.msra.mxu0 %v4104
    %4208 = vmatprep.subr.mxu0 0.0
    %4209 = vmatpush1.msra.mxu0 0.0
    %4210 = vmatprep.subr.mxu0 0.0
    %4211 = vmatpush1.msra.mxu0 0.0
    %4212 = vmatprep.subr.mxu0 0.0
    %4213 = vmatpush1.msra.mxu0 0.0
    %4214 = vmatprep.subr.mxu0 0.0
    %4215 = vmatpush1.msra.mxu0 0.0
    %4216 = vmatprep.subr.mxu0 0.0
    %4217 = vmatpush1.msra.mxu0 0.0
    %4218 = vmatprep.subr.mxu0 0.0
    %4219 = vmatpush1.msra.mxu0 0.0
    %4220 = vmatprep.subr.mxu0 0.0
    %4221 = vmatpush1.msra.mxu0 0.0
    %4222 = vmatprep.subr.mxu0 0.0
    %4223 = vmatpush1.msra.mxu0 0.0
    %4224 = vmatprep.subr.mxu0 0.0
    %4225 = vmatpush1.msra.mxu0 0.0
    %4226 = vmatprep.subr.mxu0 0.0
    %4227 = vmatpush1.msra.mxu0 0.0
    %4228 = vmatprep.subr.mxu0 0.0
    %4229 = vmatpush1.msra.mxu0 0.0
    %4230 = vmatprep.subr.mxu0 0.0
    %4231 = vmatpush1.msra.mxu0 0.0
    %4232 = vmatprep.subr.mxu0 0.0
    %4233 = vmatpush1.msra.mxu0 0.0
    %4234 = vmatprep.subr.mxu0 0.0
    %4235 = vmatpush1.msra.mxu0 0.0
    %4236 = vmatprep.subr.mxu0 0.0
    %4237 = vmatpush1.msra.mxu0 0.0
    %4238 = vmatprep.subr.mxu0 0.0
    %4239 = vmatpush1.msra.mxu0 0.0
    %4240 = vmatprep.mubr.f32.mxu0 0.0
    %4241 = vmatmul.mubr.f32.gmra.mrb[0].mxu0 %v3736
    %v4242 = vpop.f32.mrb[0].mxu0
    %v4243 = vadd.f32 %v106, %v4242
    %v4244 = vpop.f32.mrb[0].mxu0
    %4245 = vdwg.mxu0
    %v4246 = vadd.f32 %v4054, %v4172
    %v4247 = vxor.u32 %v4246, 2147483648
    %v4248 = vmul.f32 %v4247, 1.442695
    %v4249 = vpow.pop %v4248
    %v4250 = vadd.f32 %v4249, 1.0
    %v4251 = vrcp.pop %v4250
    %v4252 = vmul.f32 1.0, %v4251
    %v4253 = vadd.f32 %v4055, %v4174
    %v4254 = vxor.u32 %v4253, 2147483648
    %v4255 = vmul.f32 %v4254, 1.442695
    %v4256 = vpow.pop %v4255
    %v4257 = vadd.f32 %v4256, 1.0
    %v4258 = vrcp.pop %v4257
    %v4259 = vmul.f32 1.0, %v4258
    %v4260 = vmul.f32 %v4252, %v4243
    %v4261 = vadd.f32 %v4056, %v4260
    %v4262 = vtanh.pop %v4261
    %v4263 = vsub.f32 1.0, %v4259
    %v4264 = vmul.f32 %v4263, %v4262
    %v4265 = vmul.f32 %v4259, %v3736
    %v4266 = vadd.f32 %v4264, %v4265
    %v4267 = vld [vmem:[#allocation11] sm:$0xff]
    %v4268 = vld [vmem:[#allocation11 + $0x8] sm:$0xff]
    %v4269 = vld [vmem:[#allocation11 + $0x10] sm:$0xff]
    %v4270 = vld [vmem:[#allocation11 + $0x18] sm:$0xff]
    %v4271 = vld [vmem:[#allocation11 + $0x20] sm:$0xff]
    %v4272 = vld [vmem:[#allocation11 + $0x28] sm:$0xff]
    %v4273 = vld [vmem:[#allocation11 + $0x30] sm:$0xff]
    %v4274 = vld [vmem:[#allocation11 + $0x38] sm:$0xff]
    %v4275 = vld [vmem:[#allocation11 + $0x40] sm:$0xff]
    %v4276 = vld [vmem:[#allocation11 + $0x48] sm:$0xff]
    %v4277 = vld [vmem:[#allocation11 + $0x50] sm:$0xff]
    %v4278 = vld [vmem:[#allocation11 + $0x58] sm:$0xff]
    %v4279 = vld [vmem:[#allocation11 + $0x60] sm:$0xff]
    %v4280 = vld [vmem:[#allocation11 + $0x68] sm:$0xff]
    %v4281 = vld [vmem:[#allocation11 + $0x70] sm:$0xff]
    %v4282 = vld [vmem:[#allocation11 + $0x78] sm:$0xff]
    %4283 = vmatprep.subr.mxu0 0.0
    %4284 = vmatpush1.msra.mxu0 %v4267
    %4285 = vmatprep.subr.mxu0 0.0
    %4286 = vmatpush1.msra.mxu0 %v4268
    %4287 = vmatprep.subr.mxu0 0.0
    %4288 = vmatpush1.msra.mxu0 %v4269
    %4289 = vmatprep.subr.mxu0 0.0
    %4290 = vmatpush1.msra.mxu0 %v4270
    %4291 = vmatprep.subr.mxu0 0.0
    %4292 = vmatpush1.msra.mxu0 %v4271
    %4293 = vmatprep.subr.mxu0 0.0
    %4294 = vmatpush1.msra.mxu0 %v4272
    %4295 = vmatprep.subr.mxu0 0.0
    %4296 = vmatpush1.msra.mxu0 %v4273
    %4297 = vmatprep.subr.mxu0 0.0
    %4298 = vmatpush1.msra.mxu0 %v4274
    %4299 = vmatprep.subr.mxu0 0.0
    %4300 = vmatpush1.msra.mxu0 %v4275
    %4301 = vmatprep.subr.mxu0 0.0
    %4302 = vmatpush1.msra.mxu0 %v4276
    %4303 = vmatprep.subr.mxu0 0.0
    %4304 = vmatpush1.msra.mxu0 %v4277
    %4305 = vmatprep.subr.mxu0 0.0
    %4306 = vmatpush1.msra.mxu0 %v4278
    %4307 = vmatprep.subr.mxu0 0.0
    %4308 = vmatpush1.msra.mxu0 %v4279
    %4309 = vmatprep.subr.mxu0 0.0
    %4310 = vmatpush1.msra.mxu0 %v4280
    %4311 = vmatprep.subr.mxu0 0.0
    %4312 = vmatpush1.msra.mxu0 %v4281
    %4313 = vmatprep.subr.mxu0 0.0
    %4314 = vmatpush1.msra.mxu0 %v4282
    %4315 = vmatprep.subr.mxu0 0.0
    %4316 = vmatpush1.msra.mxu0 0.0
    %4317 = vmatprep.subr.mxu0 0.0
    %4318 = vmatpush1.msra.mxu0 0.0
    %4319 = vmatprep.subr.mxu0 0.0
    %4320 = vmatpush1.msra.mxu0 0.0
    %4321 = vmatprep.subr.mxu0 0.0
    %4322 = vmatpush1.msra.mxu0 0.0
    %4323 = vmatprep.subr.mxu0 0.0
    %4324 = vmatpush1.msra.mxu0 0.0
    %4325 = vmatprep.subr.mxu0 0.0
    %4326 = vmatpush1.msra.mxu0 0.0
    %4327 = vmatprep.subr.mxu0 0.0
    %4328 = vmatpush1.msra.mxu0 0.0
    %4329 = vmatprep.subr.mxu0 0.0
    %4330 = vmatpush1.msra.mxu0 0.0
    %4331 = vmatprep.subr.mxu0 0.0
    %4332 = vmatpush1.msra.mxu0 0.0
    %4333 = vmatprep.subr.mxu0 0.0
    %4334 = vmatpush1.msra.mxu0 0.0
    %4335 = vmatprep.subr.mxu0 0.0
    %4336 = vmatpush1.msra.mxu0 0.0
    %4337 = vmatprep.subr.mxu0 0.0
    %4338 = vmatpush1.msra.mxu0 0.0
    %4339 = vmatprep.subr.mxu0 0.0
    %4340 = vmatpush1.msra.mxu0 0.0
    %4341 = vmatprep.subr.mxu0 0.0
    %4342 = vmatpush1.msra.mxu0 0.0
    %4343 = vmatprep.subr.mxu0 0.0
    %4344 = vmatpush1.msra.mxu0 0.0
    %4345 = vmatprep.subr.mxu0 0.0
    %4346 = vmatpush1.msra.mxu0 0.0
    %4347 = vmatprep.mubr.f32.mxu0 0.0
    %4348 = vmatmul.mubr.f32.gmra.mrb[0].mxu0 %v4266
    %v4349 = vpop.f32.mrb[0].mxu0
    %v4350 = vadd.f32 %v115, %v4349
    %v4351 = vpop.f32.mrb[0].mxu0
    %4352 = vdwg.mxu0
    %s4353 = scalar_lea.vmem [#allocation13], 56
    %4354 = vst [vmem:[%s4353] sm:$0xff] %v4350
    // Predicated region
    $region114: #{tpu_custom_call.1} parent=1 // pred_check
      _
    $region115: #{tpu_custom_call.1} parent=1 // pred_check_branch
      %4356 = sbr.rel (0) target = $region117
    $region116: #{tpu_custom_call.1} parent=1 // pred_region
      %s4358 = ssub.s32 1024, 1024
      %4359 = vsyncadd [#allocation5], %s4358
      %s4360 = sshll.u32 [#allocation13], 4
      %s4361 = int_to_ptr.vmem [resolvable:$true] %s4360
      %4366 = dma.vmem_to_hbm [thread:$0]  %s4361, 1024, %s7, [#allocation5], 128, 128, 8
    $region117: #{tpu_custom_call.1} parent=1 // pred_fallthru
      _
    // Predicated region
    $region118: #{tpu_custom_call.1} parent=1 // pred_check
      _
    $region119: #{tpu_custom_call.1} parent=1 // pred_check_branch
      %4368 = sbr.rel (0) target = $region121
    $region120: #{tpu_custom_call.1} parent=1 // pred_region
      %4369 = dma.done [#allocation5], 1024
    $region121: #{tpu_custom_call.1} parent=1 // pred_fallthru
      _
    %4370 = vsyncpa [#allocation4], 1
    %4371 = vsyncpa [#allocation9], 1
    %4372 = vsyncpa [#allocation12], 1
    %4373 = vsyncpa [#allocation5], 1
    %4374 = vsyncpa [#allocation6], 1

</llo_original>
